<compile_context>
chip_gen: v7x
topology: tpu7x:2x2x1
jax: 0.10.0
libtpu: 0.0.40
codegen_flags: <defaults>
</compile_context>

<pallas_src>
import functools

import jax
import jax.numpy as jnp
from jax.experimental import pallas as pl
from jax.experimental.pallas import tpu as pltpu


LANE = 128                       # TPU lane width; channel dims padded to this
_VMEM_LIMIT = 32 * 1024 * 1024   # explicit scoped-VMEM budget (safe on v5e/v6e/v7x)


def _round_up(x, m):
    return (x + m - 1) // m * m


def _pick_tile_h(h, w, target_rows=512):
    """Largest divisor of h such that tile_h * w <= target_rows (at least 1)."""
    best = 1
    for th in range(1, h + 1):
        if h % th == 0 and th * w <= target_rows:
            best = th
    return best


# ---------------------------------------------------------------------------
# Pass 1: 3x3 conv as 9 shifted MXU matmuls over a halo'd row tile, plus
#         per-tile per-channel sum / sum-of-squares for BatchNorm statistics.
# ---------------------------------------------------------------------------
def _conv_stats_kernel(xp_hbm, w_ref, y_ref, sum_ref, sq_ref,
                       x_vmem, acc_ref, sem, *, tile_h, out_w, use_bf16):
    n = pl.program_id(0)
    t = pl.program_id(1)

    # Manual DMA of padded-input rows [t*tile_h, t*tile_h + tile_h + 2).
    # Full width + channels are taken, so this is one contiguous HBM->VMEM copy.
    row0 = pl.multiple_of(t * tile_h, tile_h)
    cp = pltpu.make_async_copy(
        xp_hbm.at[n, pl.ds(row0, tile_h + 2)], x_vmem, sem)
    cp.start()
    cp.wait()
    # NOTE: the halo DMA could be double-buffered across grid steps (P4) to hide
    # its latency; output/weight blocks are already pipelined by BlockSpec.

    cin = x_vmem.shape[-1]
    cout = w_ref.shape[-1]
    mt = tile_h * out_w

    acc_ref[...] = jnp.zeros_like(acc_ref)
    tap = 0
    for dy in range(3):
        for dx in range(3):
            patch = x_vmem[dy:dy + tile_h, dx:dx + out_w, :]
            if use_bf16:
                patch = patch.astype(jnp.bfloat16)
            acc_ref[...] += jnp.dot(
                patch.reshape(mt, cin), w_ref[tap],
                preferred_element_type=jnp.float32)
            tap += 1

    # Conv2d bias intentionally NOT added: a per-channel constant cancels exactly
    # when training-mode BatchNorm subtracts the batch mean (output unchanged).
    acc = acc_ref[...]
    y_ref[...] = acc.reshape(1, tile_h, out_w, cout)
    sum_ref[0, 0] = jnp.sum(acc, axis=0, keepdims=True)
    sq_ref[0, 0] = jnp.sum(acc * acc, axis=0, keepdims=True)


# ---------------------------------------------------------------------------
# Pass 2: fused per-channel affine (folded BatchNorm) + ReLU, lane-dense tiles.
# ---------------------------------------------------------------------------
def _bn_relu_kernel(y_ref, scale_ref, shift_ref, o_ref):
    o_ref[...] = jnp.maximum(y_ref[...] * scale_ref[...] + shift_ref[...], 0.0)


# ---------------------------------------------------------------------------
# One Conv(3x3, pad=1) + BatchNorm(batch stats) + ReLU stage (channel-padded NHWC)
# ---------------------------------------------------------------------------
def _conv_bn_relu_stage(x_nhwc, w_taps, gamma_p, beta_p, eps, use_bf16):
    n, h, w, cp_in = x_nhwc.shape
    cp_out = w_taps.shape[-1]
    tile_h = _pick_tile_h(h, w)
    n_t = h // tile_h

    xp = jnp.pad(x_nhwc, ((0, 0), (1, 1), (1, 1), (0, 0)))   # spatial zero halo

    conv = pl.pallas_call(
        functools.partial(_conv_stats_kernel, tile_h=tile_h, out_w=w,
                          use_bf16=use_bf16),
        grid=(n, n_t),
        in_specs=[
            pl.BlockSpec(memory_space=pl.ANY),                        # halo DMA'd manually
            pl.BlockSpec((9, cp_in, cp_out), lambda i, j: (0, 0, 0)),  # resident weights
        ],
        out_specs=(
            pl.BlockSpec((1, tile_h, w, cp_out), lambda i, j: (i, j, 0, 0)),
            pl.BlockSpec((1, 1, 1, cp_out), lambda i, j: (i, j, 0, 0)),
            pl.BlockSpec((1, 1, 1, cp_out), lambda i, j: (i, j, 0, 0)),
        ),
        out_shape=(
            jax.ShapeDtypeStruct((n, h, w, cp_out), jnp.float32),     # conv output
            jax.ShapeDtypeStruct((n, n_t, 1, cp_out), jnp.float32),   # per-tile sum
            jax.ShapeDtypeStruct((n, n_t, 1, cp_out), jnp.float32),   # per-tile sum(x^2)
        ),
        scratch_shapes=[
            pltpu.VMEM((tile_h + 2, w + 2, cp_in), jnp.float32),      # halo input tile
            pltpu.VMEM((tile_h * w, cp_out), jnp.float32),            # f32 accumulator
            pltpu.SemaphoreType.DMA,
        ],
        compiler_params=pltpu.CompilerParams(
            dimension_semantics=("parallel", "parallel"),
            vmem_limit_bytes=_VMEM_LIMIT),
    )
    y, psum, psq = conv(xp, w_taps)

    # Finalize BatchNorm batch statistics (tiny per-channel math, plain JAX).
    m = n * h * w
    mean = jnp.sum(psum, axis=(0, 1, 2)) / m
    var = jnp.sum(psq, axis=(0, 1, 2)) / m - mean * mean
    inv_std = jax.lax.rsqrt(var + eps)
    scale = (gamma_p * inv_std).reshape(1, 1, 1, cp_out)
    shift = (beta_p - mean * gamma_p * inv_std).reshape(1, 1, 1, cp_out)

    bn_relu = pl.pallas_call(
        _bn_relu_kernel,
        grid=(n, n_t),
        in_specs=[
            pl.BlockSpec((1, tile_h, w, cp_out), lambda i, j: (i, j, 0, 0)),
            pl.BlockSpec((1, 1, 1, cp_out), lambda i, j: (0, 0, 0, 0)),
            pl.BlockSpec((1, 1, 1, cp_out), lambda i, j: (0, 0, 0, 0)),
        ],
        out_specs=pl.BlockSpec((1, tile_h, w, cp_out), lambda i, j: (i, j, 0, 0)),
        out_shape=jax.ShapeDtypeStruct((n, h, w, cp_out), jnp.float32),
        compiler_params=pltpu.CompilerParams(
            dimension_semantics=("parallel", "parallel"),
            vmem_limit_bytes=_VMEM_LIMIT),
    )
    return bn_relu(y, scale, shift)


# ---------------------------------------------------------------------------
# Parameter prep + full forward (NCHW in / NCHW out, PyTorch convention)
# ---------------------------------------------------------------------------
def _pad_channels(a, c_to):
    c = a.shape[-1]
    if c == c_to:
        return a
    pad = [(0, 0)] * (a.ndim - 1) + [(0, c_to - c)]
    return jnp.pad(a, pad)


def _prep_weight(w_hwio, cp_in, cp_out, use_bf16):
    kh, kw, cin, cout = w_hwio.shape
    w = jnp.pad(w_hwio, ((0, 0), (0, 0), (0, cp_in - cin), (0, cp_out - cout)))
    w = w.reshape(kh * kw, cp_in, cp_out)             # tap-major (dy, dx)
    return w.astype(jnp.bfloat16) if use_bf16 else w


def conv_block_forward(x_nchw, params, eps=1e-5, use_bf16=True):
    x = jnp.transpose(x_nchw, (0, 2, 3, 1))           # NCHW -> NHWC
    in_ch = x.shape[-1]
    out_ch = params["w1"].shape[-1]
    cp_in = _round_up(in_ch, LANE)
    cp_out = _round_up(out_ch, LANE)

    x = _pad_channels(x, cp_in)
    w1 = _prep_weight(params["w1"], cp_in, cp_out, use_bf16)
    w2 = _prep_weight(params["w2"], cp_out, cp_out, use_bf16)
    g1 = _pad_channels(params["g1"], cp_out)
    be1 = _pad_channels(params["beta1"], cp_out)
    g2 = _pad_channels(params["g2"], cp_out)
    be2 = _pad_channels(params["beta2"], cp_out)

    x = _conv_bn_relu_stage(x, w1, g1, be1, eps, use_bf16)
    x = _conv_bn_relu_stage(x, w2, g2, be2, eps, use_bf16)

    x = x[..., :out_ch]                                # drop padded channels
    return jnp.transpose(x, (0, 3, 1, 2))              # NHWC -> NCHW


# ---------------------------------------------------------------------------
# Deterministic parameter init (shapes from nn.Conv2d / nn.BatchNorm2d)
# ---------------------------------------------------------------------------
def init_params(key, in_ch, out_ch):
    k1, k2, k3, k4 = jax.random.split(key, 4)
    scale1 = 1.0 / jnp.sqrt(9.0 * in_ch)
    scale2 = 1.0 / jnp.sqrt(9.0 * out_ch)
    return {
        "w1": jax.random.normal(k1, (3, 3, in_ch, out_ch), jnp.float32) * scale1,
        "b1": jax.random.normal(k2, (out_ch,), jnp.float32) * scale1,
        "g1": jnp.ones((out_ch,), jnp.float32),
        "beta1": jnp.zeros((out_ch,), jnp.float32),
        "w2": jax.random.normal(k3, (3, 3, out_ch, out_ch), jnp.float32) * scale2,
        "b2": jax.random.normal(k4, (out_ch,), jnp.float32) * scale2,
        "g2": jnp.ones((out_ch,), jnp.float32),
        "beta2": jnp.zeros((out_ch,), jnp.float32),
    }


# ---------------------------------------------------------------------------
# Pure-JAX reference (with conv bias, to show the bias indeed cancels)
# ---------------------------------------------------------------------------
def _ref_stage(x_nhwc, w, b, g, beta, eps=1e-5):
    y = jax.lax.conv_general_dilated(
        x_nhwc, w, window_strides=(1, 1), padding=((1, 1), (1, 1)),
        dimension_numbers=("NHWC", "HWIO", "NHWC"))
    y = y + b[None, None, None, :]
    mean = jnp.mean(y, axis=(0, 1, 2), keepdims=True)
    var = jnp.mean((y - mean) ** 2, axis=(0, 1, 2), keepdims=True)
    y = (y - mean) * jax.lax.rsqrt(var + eps)
    y = y * g[None, None, None, :] + beta[None, None, None, :]
    return jnp.maximum(y, 0.0)


def conv_block_ref(x_nchw, p, eps=1e-5):
    x = jnp.transpose(x_nchw, (0, 2, 3, 1))
    x = _ref_stage(x, p["w1"], p["b1"], p["g1"], p["beta1"], eps)
    x = _ref_stage(x, p["w2"], p["b2"], p["g2"], p["beta2"], eps)
    return jnp.transpose(x, (0, 3, 1, 2))


if __name__ == "__main__":
    key = jax.random.PRNGKey(0)
    kx, kp = jax.random.split(key)

    batch, in_ch, out_ch, hw = 2, 4, 8, 16
    x = jax.random.normal(kx, (batch, in_ch, hw, hw), jnp.float32)   # NCHW
    params = init_params(kp, in_ch, out_ch)

    fwd = jax.jit(conv_block_forward, static_argnames=("use_bf16",))
    ref = jax.block_until_ready(conv_block_ref(x, params))

    # bf16 MXU operands (default fast path) — looser tolerance vs f32 reference.
    out = jax.block_until_ready(fwd(x, params, use_bf16=True))
    assert out.shape == (batch, out_ch, hw, hw)
    assert jnp.allclose(out, ref, atol=5e-2, rtol=5e-2), "bf16 path mismatch vs reference"

    # f32 MXU operands — tight numerical self-check.
    out_f32 = jax.block_until_ready(fwd(x, params, use_bf16=False))
    assert jnp.allclose(out_f32, ref, atol=2e-3, rtol=2e-3), "f32 path mismatch vs reference"

    print("KERNEL_OK")
</pallas_src>

<mosaic_0001>
module attributes {stable_mosaic.version = 11 : i64} {
  func.func @_bn_relu_kernel(%arg0: i32, %arg1: i32, %arg2: memref<1x16x16x128xf32, #tpu.memory_space<vmem>>, %arg3: memref<1x1x1x128xf32, #tpu.memory_space<vmem>>, %arg4: memref<1x1x1x128xf32, #tpu.memory_space<vmem>>, %arg5: memref<1x16x16x128xf32, #tpu.memory_space<vmem>>) attributes {dimension_semantics = [#tpu.dimension_semantics<parallel>, #tpu.dimension_semantics<parallel>], iteration_bounds = array<i64: 2, 1>, scalar_prefetch = 0 : i64, scratch_operands = 0 : i64, tpu.core_type = #tpu.core_type<tc>, window_params = [{transform_indices = @transform_0, window_bounds = array<i64: 1, 16, 16, 128>}, {pipeline_mode = #tpu.pipeline_mode<synchronous>, transform_indices = @transform_1, window_bounds = array<i64: 1, 1, 1, 128>}, {pipeline_mode = #tpu.pipeline_mode<synchronous>, transform_indices = @transform_2, window_bounds = array<i64: 1, 1, 1, 128>}, {transform_indices = @transform_3, window_bounds = array<i64: 1, 16, 16, 128>}]} {
    %c0 = arith.constant 0 : index
    %c0_0 = arith.constant 0 : index
    %c0_1 = arith.constant 0 : index
    %c0_2 = arith.constant 0 : index
    %0 = vector.load %arg2[%c0, %c0_0, %c0_1, %c0_2] : memref<1x16x16x128xf32, #tpu.memory_space<vmem>>, vector<1x16x16x128xf32>
    %c0_3 = arith.constant 0 : index
    %c0_4 = arith.constant 0 : index
    %c0_5 = arith.constant 0 : index
    %c0_6 = arith.constant 0 : index
    %1 = vector.load %arg3[%c0_3, %c0_4, %c0_5, %c0_6] : memref<1x1x1x128xf32, #tpu.memory_space<vmem>>, vector<1x1x1x128xf32>
    %2 = vector.broadcast %1 : vector<1x1x1x128xf32> to vector<1x16x16x128xf32>
    %3 = arith.mulf %0, %2 : vector<1x16x16x128xf32>
    %c0_7 = arith.constant 0 : index
    %c0_8 = arith.constant 0 : index
    %c0_9 = arith.constant 0 : index
    %c0_10 = arith.constant 0 : index
    %4 = vector.load %arg4[%c0_7, %c0_8, %c0_9, %c0_10] : memref<1x1x1x128xf32, #tpu.memory_space<vmem>>, vector<1x1x1x128xf32>
    %5 = vector.broadcast %4 : vector<1x1x1x128xf32> to vector<1x16x16x128xf32>
    %6 = arith.addf %3, %5 : vector<1x16x16x128xf32>
    %cst = arith.constant 0.000000e+00 : f32
    %7 = vector.broadcast %cst : f32 to vector<1x16x16x128xf32>
    %8 = arith.maximumf %6, %7 : vector<1x16x16x128xf32>
    %c0_11 = arith.constant 0 : index
    %c0_12 = arith.constant 0 : index
    %c0_13 = arith.constant 0 : index
    %c0_14 = arith.constant 0 : index
    %9 = vector.load %arg5[%c0_11, %c0_12, %c0_13, %c0_14] : memref<1x16x16x128xf32, #tpu.memory_space<vmem>>, vector<1x16x16x128xf32>
    tpu.vector_store %arg5[%c0_11, %c0_12, %c0_13, %c0_14], %8 {strides = array<i32>} : memref<1x16x16x128xf32, #tpu.memory_space<vmem>>, vector<1x16x16x128xf32>,
    return
  }
  func.func @transform_0(%arg0: i32, %arg1: i32) -> (i32, i32, i32, i32) {
    %c0_i32 = arith.constant 0 : i32
    %c0_i32_0 = arith.constant 0 : i32
    %c0_i32_1 = arith.constant 0 : i32
    return %arg0, %arg1, %c0_i32, %c0_i32_0 : i32, i32, i32, i32
  }
  func.func @transform_1(%arg0: i32, %arg1: i32) -> (i32, i32, i32, i32) {
    %c0_i32 = arith.constant 0 : i32
    %c0_i32_0 = arith.constant 0 : i32
    %c0_i32_1 = arith.constant 0 : i32
    %c0_i32_2 = arith.constant 0 : i32
    %c0_i32_3 = arith.constant 0 : i32
    return %c0_i32, %c0_i32_0, %c0_i32_1, %c0_i32_2 : i32, i32, i32, i32
  }
  func.func @transform_2(%arg0: i32, %arg1: i32) -> (i32, i32, i32, i32) {
    %c0_i32 = arith.constant 0 : i32
    %c0_i32_0 = arith.constant 0 : i32
    %c0_i32_1 = arith.constant 0 : i32
    %c0_i32_2 = arith.constant 0 : i32
    %c0_i32_3 = arith.constant 0 : i32
    return %c0_i32, %c0_i32_0, %c0_i32_1, %c0_i32_2 : i32, i32, i32, i32
  }
  func.func @transform_3(%arg0: i32, %arg1: i32) -> (i32, i32, i32, i32) {
    %c0_i32 = arith.constant 0 : i32
    %c0_i32_0 = arith.constant 0 : i32
    %c0_i32_1 = arith.constant 0 : i32
    return %arg0, %arg1, %c0_i32, %c0_i32_0 : i32, i32, i32, i32
  }
}

module attributes {stable_mosaic.version = 11 : i64} {
  func.func @_conv_stats_kernel(%arg0: i32, %arg1: i32, %arg2: memref<2x18x18x128xf32, #tpu.memory_space<any>>, %arg3: memref<9x128x128xbf16, #tpu.memory_space<vmem>>, %arg4: memref<1x16x16x128xf32, #tpu.memory_space<vmem>>, %arg5: memref<1x1x1x128xf32, #tpu.memory_space<vmem>>, %arg6: memref<1x1x1x128xf32, #tpu.memory_space<vmem>>, %arg7: memref<18x18x128xf32, #tpu.memory_space<vmem>>, %arg8: memref<256x128xf32, #tpu.memory_space<vmem>>, %arg9: memref<!tpu.dma_semaphore, #tpu.memory_space<semaphore_mem>>) attributes {dimension_semantics = [#tpu.dimension_semantics<parallel>, #tpu.dimension_semantics<parallel>], iteration_bounds = array<i64: 2, 1>, scalar_prefetch = 0 : i64, scratch_operands = 3 : i64, tpu.core_type = #tpu.core_type<tc>, window_params = [{}, {pipeline_mode = #tpu.pipeline_mode<synchronous>, transform_indices = @transform_1, window_bounds = array<i64: 9, 128, 128>}, {transform_indices = @transform_2, window_bounds = array<i64: 1, 16, 16, 128>}, {transform_indices = @transform_3, window_bounds = array<i64: 1, 1, 1, 128>}, {transform_indices = @transform_4, window_bounds = array<i64: 1, 1, 1, 128>}]} {
    %c16_i32 = arith.constant 16 : i32
    %0 = arith.muli %arg1, %c16_i32 : i32
    %1 = tpu.assume_multiple %0, 16 : i32
    %c0_i32 = arith.constant 0 : i32
    %c0_i32_0 = arith.constant 0 : i32
    %2 = tpu.memref_slice %arg2[%arg0, %1, %c0_i32, %c0_i32_0] : memref<2x18x18x128xf32, #tpu.memory_space<any>> -> memref<1x18x18x128xf32, #tpu.memory_space<any>>
    %3 = tpu.memref_squeeze %2 : memref<1x18x18x128xf32, #tpu.memory_space<any>> -> memref<18x18x128xf32, #tpu.memory_space<any>>
    tpu.enqueue_dma source(%3 : memref<18x18x128xf32, #tpu.memory_space<any>>) target(%arg7 : memref<18x18x128xf32, #tpu.memory_space<vmem>>) target_semaphore(%arg9 : memref<!tpu.dma_semaphore, #tpu.memory_space<semaphore_mem>>)
    %c0_i32_1 = arith.constant 0 : i32
    %c0_i32_2 = arith.constant 0 : i32
    %4 = tpu.memref_slice %arg2[%arg0, %1, %c0_i32_1, %c0_i32_2] : memref<2x18x18x128xf32, #tpu.memory_space<any>> -> memref<1x18x18x128xf32, #tpu.memory_space<any>>
    %5 = tpu.memref_squeeze %4 : memref<1x18x18x128xf32, #tpu.memory_space<any>> -> memref<18x18x128xf32, #tpu.memory_space<any>>
    tpu.wait_dma2 semaphore(%arg9 : memref<!tpu.dma_semaphore, #tpu.memory_space<semaphore_mem>>) src(%5 : memref<18x18x128xf32, #tpu.memory_space<any>>) dst(%arg7 : memref<18x18x128xf32, #tpu.memory_space<vmem>>)
    %cst = arith.constant 0.000000e+00 : f32
    %6 = vector.broadcast %cst : f32 to vector<256x128xf32>
    %c0 = arith.constant 0 : index
    %c0_3 = arith.constant 0 : index
    %7 = vector.load %arg8[%c0, %c0_3] : memref<256x128xf32, #tpu.memory_space<vmem>>, vector<256x128xf32>
    tpu.vector_store %arg8[%c0, %c0_3], %6 {strides = array<i32>} : memref<256x128xf32, #tpu.memory_space<vmem>>, vector<256x128xf32>,
    %c0_4 = arith.constant 0 : index
    %c0_5 = arith.constant 0 : index
    %c0_6 = arith.constant 0 : index
    %8 = vector.load %arg7[%c0_4, %c0_5, %c0_6] : memref<18x18x128xf32, #tpu.memory_space<vmem>>, vector<16x16x128xf32>
    %9 = arith.truncf %8 : vector<16x16x128xf32> to vector<16x16x128xbf16>
    %c0_7 = arith.constant 0 : index
    %c0_8 = arith.constant 0 : index
    %10 = vector.load %arg8[%c0_7, %c0_8] : memref<256x128xf32, #tpu.memory_space<vmem>>, vector<256x128xf32>
    %11 = vector.shape_cast %9 : vector<16x16x128xbf16> to vector<256x128xbf16>
    %c0_9 = arith.constant 0 : index
    %c0_10 = arith.constant 0 : index
    %c0_11 = arith.constant 0 : index
    %12 = vector.load %arg3[%c0_9, %c0_10, %c0_11] : memref<9x128x128xbf16, #tpu.memory_space<vmem>>, vector<1x128x128xbf16>
    %13 = vector.shape_cast %12 : vector<1x128x128xbf16> to vector<128x128xbf16>
    %cst_12 = arith.constant dense<0.000000e+00> : vector<256x128xf32>
    %14 = tpu.matmul %11, %13, %cst_12 {dimension_numbers = #tpu.dot_dimension_numbers<[1], [0], [0], [1], [0, 0, 1, 1], [], []>} : vector<256x128xbf16>, vector<128x128xbf16>, vector<256x128xf32> -> vector<256x128xf32>
    %15 = arith.addf %10, %14 : vector<256x128xf32>
    %c0_13 = arith.constant 0 : index
    %c0_14 = arith.constant 0 : index
    %16 = vector.load %arg8[%c0_13, %c0_14] : memref<256x128xf32, #tpu.memory_space<vmem>>, vector<256x128xf32>
    tpu.vector_store %arg8[%c0_13, %c0_14], %15 {strides = array<i32>} : memref<256x128xf32, #tpu.memory_space<vmem>>, vector<256x128xf32>,
    %c0_15 = arith.constant 0 : index
    %c1 = arith.constant 1 : index
    %c0_16 = arith.constant 0 : index
    %17 = vector.load %arg7[%c0_15, %c1, %c0_16] : memref<18x18x128xf32, #tpu.memory_space<vmem>>, vector<16x16x128xf32>
    %18 = arith.truncf %17 : vector<16x16x128xf32> to vector<16x16x128xbf16>
    %c0_17 = arith.constant 0 : index
    %c0_18 = arith.constant 0 : index
    %19 = vector.load %arg8[%c0_17, %c0_18] : memref<256x128xf32, #tpu.memory_space<vmem>>, vector<256x128xf32>
    %20 = vector.shape_cast %18 : vector<16x16x128xbf16> to vector<256x128xbf16>
    %c1_19 = arith.constant 1 : index
    %c0_20 = arith.constant 0 : index
    %c0_21 = arith.constant 0 : index
    %21 = vector.load %arg3[%c1_19, %c0_20, %c0_21] : memref<9x128x128xbf16, #tpu.memory_space<vmem>>, vector<1x128x128xbf16>
    %22 = vector.shape_cast %21 : vector<1x128x128xbf16> to vector<128x128xbf16>
    %cst_22 = arith.constant dense<0.000000e+00> : vector<256x128xf32>
    %23 = tpu.matmul %20, %22, %cst_22 {dimension_numbers = #tpu.dot_dimension_numbers<[1], [0], [0], [1], [0, 0, 1, 1], [], []>} : vector<256x128xbf16>, vector<128x128xbf16>, vector<256x128xf32> -> vector<256x128xf32>
    %24 = arith.addf %19, %23 : vector<256x128xf32>
    %c0_23 = arith.constant 0 : index
    %c0_24 = arith.constant 0 : index
    %25 = vector.load %arg8[%c0_23, %c0_24] : memref<256x128xf32, #tpu.memory_space<vmem>>, vector<256x128xf32>
    tpu.vector_store %arg8[%c0_23, %c0_24], %24 {strides = array<i32>} : memref<256x128xf32, #tpu.memory_space<vmem>>, vector<256x128xf32>,
    %c0_25 = arith.constant 0 : index
    %c2 = arith.constant 2 : index
    %c0_26 = arith.constant 0 : index
    %26 = vector.load %arg7[%c0_25, %c2, %c0_26] : memref<18x18x128xf32, #tpu.memory_space<vmem>>, vector<16x16x128xf32>
    %27 = arith.truncf %26 : vector<16x16x128xf32> to vector<16x16x128xbf16>
    %c0_27 = arith.constant 0 : index
    %c0_28 = arith.constant 0 : index
    %28 = vector.load %arg8[%c0_27, %c0_28] : memref<256x128xf32, #tpu.memory_space<vmem>>, vector<256x128xf32>
    %29 = vector.shape_cast %27 : vector<16x16x128xbf16> to vector<256x128xbf16>
    %c2_29 = arith.constant 2 : index
    %c0_30 = arith.constant 0 : index
    %c0_31 = arith.constant 0 : index
    %30 = vector.load %arg3[%c2_29, %c0_30, %c0_31] : memref<9x128x128xbf16, #tpu.memory_space<vmem>>, vector<1x128x128xbf16>
    %31 = vector.shape_cast %30 : vector<1x128x128xbf16> to vector<128x128xbf16>
    %cst_32 = arith.constant dense<0.000000e+00> : vector<256x128xf32>
    %32 = tpu.matmul %29, %31, %cst_32 {dimension_numbers = #tpu.dot_dimension_numbers<[1], [0], [0], [1], [0, 0, 1, 1], [], []>} : vector<256x128xbf16>, vector<128x128xbf16>, vector<256x128xf32> -> vector<256x128xf32>
    %33 = arith.addf %28, %32 : vector<256x128xf32>
    %c0_33 = arith.constant 0 : index
    %c0_34 = arith.constant 0 : index
    %34 = vector.load %arg8[%c0_33, %c0_34] : memref<256x128xf32, #tpu.memory_space<vmem>>, vector<256x128xf32>
    tpu.vector_store %arg8[%c0_33, %c0_34], %33 {strides = array<i32>} : memref<256x128xf32, #tpu.memory_space<vmem>>, vector<256x128xf32>,
    %c1_35 = arith.constant 1 : index
    %c0_36 = arith.constant 0 : index
    %c0_37 = arith.constant 0 : index
    %35 = vector.load %arg7[%c1_35, %c0_36, %c0_37] : memref<18x18x128xf32, #tpu.memory_space<vmem>>, vector<16x16x128xf32>
    %36 = arith.truncf %35 : vector<16x16x128xf32> to vector<16x16x128xbf16>
    %c0_38 = arith.constant 0 : index
    %c0_39 = arith.constant 0 : index
    %37 = vector.load %arg8[%c0_38, %c0_39] : memref<256x128xf32, #tpu.memory_space<vmem>>, vector<256x128xf32>
    %38 = vector.shape_cast %36 : vector<16x16x128xbf16> to vector<256x128xbf16>
    %c3 = arith.constant 3 : index
    %c0_40 = arith.constant 0 : index
    %c0_41 = arith.constant 0 : index
    %39 = vector.load %arg3[%c3, %c0_40, %c0_41] : memref<9x128x128xbf16, #tpu.memory_space<vmem>>, vector<1x128x128xbf16>
    %40 = vector.shape_cast %39 : vector<1x128x128xbf16> to vector<128x128xbf16>
    %cst_42 = arith.constant dense<0.000000e+00> : vector<256x128xf32>
    %41 = tpu.matmul %38, %40, %cst_42 {dimension_numbers = #tpu.dot_dimension_numbers<[1], [0], [0], [1], [0, 0, 1, 1], [], []>} : vector<256x128xbf16>, vector<128x128xbf16>, vector<256x128xf32> -> vector<256x128xf32>
    %42 = arith.addf %37, %41 : vector<256x128xf32>
    %c0_43 = arith.constant 0 : index
    %c0_44 = arith.constant 0 : index
    %43 = vector.load %arg8[%c0_43, %c0_44] : memref<256x128xf32, #tpu.memory_space<vmem>>, vector<256x128xf32>
    tpu.vector_store %arg8[%c0_43, %c0_44], %42 {strides = array<i32>} : memref<256x128xf32, #tpu.memory_space<vmem>>, vector<256x128xf32>,
    %c1_45 = arith.constant 1 : index
    %c1_46 = arith.constant 1 : index
    %c0_47 = arith.constant 0 : index
    %44 = vector.load %arg7[%c1_45, %c1_46, %c0_47] : memref<18x18x128xf32, #tpu.memory_space<vmem>>, vector<16x16x128xf32>
    %45 = arith.truncf %44 : vector<16x16x128xf32> to vector<16x16x128xbf16>
    %c0_48 = arith.constant 0 : index
    %c0_49 = arith.constant 0 : index
    %46 = vector.load %arg8[%c0_48, %c0_49] : memref<256x128xf32, #tpu.memory_space<vmem>>, vector<256x128xf32>
    %47 = vector.shape_cast %45 : vector<16x16x128xbf16> to vector<256x128xbf16>
    %c4 = arith.constant 4 : index
    %c0_50 = arith.constant 0 : index
    %c0_51 = arith.constant 0 : index
    %48 = vector.load %arg3[%c4, %c0_50, %c0_51] : memref<9x128x128xbf16, #tpu.memory_space<vmem>>, vector<1x128x128xbf16>
    %49 = vector.shape_cast %48 : vector<1x128x128xbf16> to vector<128x128xbf16>
    %cst_52 = arith.constant dense<0.000000e+00> : vector<256x128xf32>
    %50 = tpu.matmul %47, %49, %cst_52 {dimension_numbers = #tpu.dot_dimension_numbers<[1], [0], [0], [1], [0, 0, 1, 1], [], []>} : vector<256x128xbf16>, vector<128x128xbf16>, vector<256x128xf32> -> vector<256x128xf32>
    %51 = arith.addf %46, %50 : vector<256x128xf32>
    %c0_53 = arith.constant 0 : index
    %c0_54 = arith.constant 0 : index
    %52 = vector.load %arg8[%c0_53, %c0_54] : memref<256x128xf32, #tpu.memory_space<vmem>>, vector<256x128xf32>
    tpu.vector_store %arg8[%c0_53, %c0_54], %51 {strides = array<i32>} : memref<256x128xf32, #tpu.memory_space<vmem>>, vector<256x128xf32>,
    %c1_55 = arith.constant 1 : index
    %c2_56 = arith.constant 2 : index
    %c0_57 = arith.constant 0 : index
    %53 = vector.load %arg7[%c1_55, %c2_56, %c0_57] : memref<18x18x128xf32, #tpu.memory_space<vmem>>, vector<16x16x128xf32>
    %54 = arith.truncf %53 : vector<16x16x128xf32> to vector<16x16x128xbf16>
    %c0_58 = arith.constant 0 : index
    %c0_59 = arith.constant 0 : index
    %55 = vector.load %arg8[%c0_58, %c0_59] : memref<256x128xf32, #tpu.memory_space<vmem>>, vector<256x128xf32>
    %56 = vector.shape_cast %54 : vector<16x16x128xbf16> to vector<256x128xbf16>
    %c5 = arith.constant 5 : index
    %c0_60 = arith.constant 0 : index
    %c0_61 = arith.constant 0 : index
    %57 = vector.load %arg3[%c5, %c0_60, %c0_61] : memref<9x128x128xbf16, #tpu.memory_space<vmem>>, vector<1x128x128xbf16>
    %58 = vector.shape_cast %57 : vector<1x128x128xbf16> to vector<128x128xbf16>
    %cst_62 = arith.constant dense<0.000000e+00> : vector<256x128xf32>
    %59 = tpu.matmul %56, %58, %cst_62 {dimension_numbers = #tpu.dot_dimension_numbers<[1], [0], [0], [1], [0, 0, 1, 1], [], []>} : vector<256x128xbf16>, vector<128x128xbf16>, vector<256x128xf32> -> vector<256x128xf32>
    %60 = arith.addf %55, %59 : vector<256x128xf32>
    %c0_63 = arith.constant 0 : index
    %c0_64 = arith.constant 0 : index
    %61 = vector.load %arg8[%c0_63, %c0_64] : memref<256x128xf32, #tpu.memory_space<vmem>>, vector<256x128xf32>
    tpu.vector_store %arg8[%c0_63, %c0_64], %60 {strides = array<i32>} : memref<256x128xf32, #tpu.memory_space<vmem>>, vector<256x128xf32>,
    %c2_65 = arith.constant 2 : index
    %c0_66 = arith.constant 0 : index
    %c0_67 = arith.constant 0 : index
    %62 = vector.load %arg7[%c2_65, %c0_66, %c0_67] : memref<18x18x128xf32, #tpu.memory_space<vmem>>, vector<16x16x128xf32>
    %63 = arith.truncf %62 : vector<16x16x128xf32> to vector<16x16x128xbf16>
    %c0_68 = arith.constant 0 : index
    %c0_69 = arith.constant 0 : index
    %64 = vector.load %arg8[%c0_68, %c0_69] : memref<256x128xf32, #tpu.memory_space<vmem>>, vector<256x128xf32>
    %65 = vector.shape_cast %63 : vector<16x16x128xbf16> to vector<256x128xbf16>
    %c6 = arith.constant 6 : index
    %c0_70 = arith.constant 0 : index
    %c0_71 = arith.constant 0 : index
    %66 = vector.load %arg3[%c6, %c0_70, %c0_71] : memref<9x128x128xbf16, #tpu.memory_space<vmem>>, vector<1x128x128xbf16>
    %67 = vector.shape_cast %66 : vector<1x128x128xbf16> to vector<128x128xbf16>
    %cst_72 = arith.constant dense<0.000000e+00> : vector<256x128xf32>
    %68 = tpu.matmul %65, %67, %cst_72 {dimension_numbers = #tpu.dot_dimension_numbers<[1], [0], [0], [1], [0, 0, 1, 1], [], []>} : vector<256x128xbf16>, vector<128x128xbf16>, vector<256x128xf32> -> vector<256x128xf32>
    %69 = arith.addf %64, %68 : vector<256x128xf32>
    %c0_73 = arith.constant 0 : index
    %c0_74 = arith.constant 0 : index
    %70 = vector.load %arg8[%c0_73, %c0_74] : memref<256x128xf32, #tpu.memory_space<vmem>>, vector<256x128xf32>
    tpu.vector_store %arg8[%c0_73, %c0_74], %69 {strides = array<i32>} : memref<256x128xf32, #tpu.memory_space<vmem>>, vector<256x128xf32>,
    %c2_75 = arith.constant 2 : index
    %c1_76 = arith.constant 1 : index
    %c0_77 = arith.constant 0 : index
    %71 = vector.load %arg7[%c2_75, %c1_76, %c0_77] : memref<18x18x128xf32, #tpu.memory_space<vmem>>, vector<16x16x128xf32>
    %72 = arith.truncf %71 : vector<16x16x128xf32> to vector<16x16x128xbf16>
    %c0_78 = arith.constant 0 : index
    %c0_79 = arith.constant 0 : index
    %73 = vector.load %arg8[%c0_78, %c0_79] : memref<256x128xf32, #tpu.memory_space<vmem>>, vector<256x128xf32>
    %74 = vector.shape_cast %72 : vector<16x16x128xbf16> to vector<256x128xbf16>
    %c7 = arith.constant 7 : index
    %c0_80 = arith.constant 0 : index
    %c0_81 = arith.constant 0 : index
    %75 = vector.load %arg3[%c7, %c0_80, %c0_81] : memref<9x128x128xbf16, #tpu.memory_space<vmem>>, vector<1x128x128xbf16>
    %76 = vector.shape_cast %75 : vector<1x128x128xbf16> to vector<128x128xbf16>
    %cst_82 = arith.constant dense<0.000000e+00> : vector<256x128xf32>
    %77 = tpu.matmul %74, %76, %cst_82 {dimension_numbers = #tpu.dot_dimension_numbers<[1], [0], [0], [1], [0, 0, 1, 1], [], []>} : vector<256x128xbf16>, vector<128x128xbf16>, vector<256x128xf32> -> vector<256x128xf32>
    %78 = arith.addf %73, %77 : vector<256x128xf32>
    %c0_83 = arith.constant 0 : index
    %c0_84 = arith.constant 0 : index
    %79 = vector.load %arg8[%c0_83, %c0_84] : memref<256x128xf32, #tpu.memory_space<vmem>>, vector<256x128xf32>
    tpu.vector_store %arg8[%c0_83, %c0_84], %78 {strides = array<i32>} : memref<256x128xf32, #tpu.memory_space<vmem>>, vector<256x128xf32>,
    %c2_85 = arith.constant 2 : index
    %c2_86 = arith.constant 2 : index
    %c0_87 = arith.constant 0 : index
    %80 = vector.load %arg7[%c2_85, %c2_86, %c0_87] : memref<18x18x128xf32, #tpu.memory_space<vmem>>, vector<16x16x128xf32>
    %81 = arith.truncf %80 : vector<16x16x128xf32> to vector<16x16x128xbf16>
    %c0_88 = arith.constant 0 : index
    %c0_89 = arith.constant 0 : index
    %82 = vector.load %arg8[%c0_88, %c0_89] : memref<256x128xf32, #tpu.memory_space<vmem>>, vector<256x128xf32>
    %83 = vector.shape_cast %81 : vector<16x16x128xbf16> to vector<256x128xbf16>
    %c8 = arith.constant 8 : index
    %c0_90 = arith.constant 0 : index
    %c0_91 = arith.constant 0 : index
    %84 = vector.load %arg3[%c8, %c0_90, %c0_91] : memref<9x128x128xbf16, #tpu.memory_space<vmem>>, vector<1x128x128xbf16>
    %85 = vector.shape_cast %84 : vector<1x128x128xbf16> to vector<128x128xbf16>
    %cst_92 = arith.constant dense<0.000000e+00> : vector<256x128xf32>
    %86 = tpu.matmul %83, %85, %cst_92 {dimension_numbers = #tpu.dot_dimension_numbers<[1], [0], [0], [1], [0, 0, 1, 1], [], []>} : vector<256x128xbf16>, vector<128x128xbf16>, vector<256x128xf32> -> vector<256x128xf32>
    %87 = arith.addf %82, %86 : vector<256x128xf32>
    %c0_93 = arith.constant 0 : index
    %c0_94 = arith.constant 0 : index
    %88 = vector.load %arg8[%c0_93, %c0_94] : memref<256x128xf32, #tpu.memory_space<vmem>>, vector<256x128xf32>
    tpu.vector_store %arg8[%c0_93, %c0_94], %87 {strides = array<i32>} : memref<256x128xf32, #tpu.memory_space<vmem>>, vector<256x128xf32>,
    %c0_95 = arith.constant 0 : index
    %c0_96 = arith.constant 0 : index
    %89 = vector.load %arg8[%c0_95, %c0_96] : memref<256x128xf32, #tpu.memory_space<vmem>>, vector<256x128xf32>
    %90 = vector.shape_cast %89 : vector<256x128xf32> to vector<1x16x16x128xf32>
    %c0_97 = arith.constant 0 : index
    %c0_98 = arith.constant 0 : index
    %c0_99 = arith.constant 0 : index
    %c0_100 = arith.constant 0 : index
    %91 = vector.load %arg4[%c0_97, %c0_98, %c0_99, %c0_100] : memref<1x16x16x128xf32, #tpu.memory_space<vmem>>, vector<1x16x16x128xf32>
    tpu.vector_store %arg4[%c0_97, %c0_98, %c0_99, %c0_100], %90 {strides = array<i32>} : memref<1x16x16x128xf32, #tpu.memory_space<vmem>>, vector<1x16x16x128xf32>,
    %cst_101 = arith.constant dense<0.000000e+00> : vector<128xf32>
    %92 = vector.multi_reduction <add>, %89, %cst_101 [0] : vector<256x128xf32> to vector<128xf32>
    %93 = vector.shape_cast %92 : vector<128xf32> to vector<1x128xf32>
    %c0_102 = arith.constant 0 : index
    %c0_103 = arith.constant 0 : index
    %c0_104 = arith.constant 0 : index
    %c0_105 = arith.constant 0 : index
    %94 = vector.load %arg5[%c0_102, %c0_103, %c0_104, %c0_105] : memref<1x1x1x128xf32, #tpu.memory_space<vmem>>, vector<1x1x1x128xf32>
    %95 = vector.shape_cast %94 : vector<1x1x1x128xf32> to vector<1x128xf32>
    %96 = vector.shape_cast %93 : vector<1x128xf32> to vector<1x1x1x128xf32>
    tpu.vector_store %arg5[%c0_102, %c0_103, %c0_104, %c0_105], %96 {strides = array<i32>} : memref<1x1x1x128xf32, #tpu.memory_space<vmem>>, vector<1x1x1x128xf32>,
    %97 = arith.mulf %89, %89 : vector<256x128xf32>
    %cst_106 = arith.constant dense<0.000000e+00> : vector<128xf32>
    %98 = vector.multi_reduction <add>, %97, %cst_106 [0] : vector<256x128xf32> to vector<128xf32>
    %99 = vector.shape_cast %98 : vector<128xf32> to vector<1x128xf32>
    %c0_107 = arith.constant 0 : index
    %c0_108 = arith.constant 0 : index
    %c0_109 = arith.constant 0 : index
    %c0_110 = arith.constant 0 : index
    %100 = vector.load %arg6[%c0_107, %c0_108, %c0_109, %c0_110] : memref<1x1x1x128xf32, #tpu.memory_space<vmem>>, vector<1x1x1x128xf32>
    %101 = vector.shape_cast %100 : vector<1x1x1x128xf32> to vector<1x128xf32>
    %102 = vector.shape_cast %99 : vector<1x128xf32> to vector<1x1x1x128xf32>
    tpu.vector_store %arg6[%c0_107, %c0_108, %c0_109, %c0_110], %102 {strides = array<i32>} : memref<1x1x1x128xf32, #tpu.memory_space<vmem>>, vector<1x1x1x128xf32>,
    return
  }
  func.func @transform_1(%arg0: i32, %arg1: i32) -> (i32, i32, i32) {
    %c0_i32 = arith.constant 0 : i32
    %c0_i32_0 = arith.constant 0 : i32
    %c0_i32_1 = arith.constant 0 : i32
    %c0_i32_2 = arith.constant 0 : i32
    return %c0_i32, %c0_i32_0, %c0_i32_1 : i32, i32, i32
  }
  func.func @transform_2(%arg0: i32, %arg1: i32) -> (i32, i32, i32, i32) {
    %c0_i32 = arith.constant 0 : i32
    %c0_i32_0 = arith.constant 0 : i32
    %c0_i32_1 = arith.constant 0 : i32
    return %arg0, %arg1, %c0_i32, %c0_i32_0 : i32, i32, i32, i32
  }
  func.func @transform_3(%arg0: i32, %arg1: i32) -> (i32, i32, i32, i32) {
    %c0_i32 = arith.constant 0 : i32
    %c0_i32_0 = arith.constant 0 : i32
    %c0_i32_1 = arith.constant 0 : i32
    return %arg0, %arg1, %c0_i32, %c0_i32_0 : i32, i32, i32, i32
  }
  func.func @transform_4(%arg0: i32, %arg1: i32) -> (i32, i32, i32, i32) {
    %c0_i32 = arith.constant 0 : i32
    %c0_i32_0 = arith.constant 0 : i32
    %c0_i32_1 = arith.constant 0 : i32
    return %arg0, %arg1, %c0_i32, %c0_i32_0 : i32, i32, i32, i32
  }
}

</mosaic_0001>

<llo_original>
// kernel: conv_block_forward.5
$region0: #{conv_block_forward.5}
  #allocation0 [shape = 'u32[]', space=smem, size = 0x4, offset = 0x4, fixed_abs, tag = 'smem constant byte address 0x4 - core index']
  #allocation1 [shape = 'u32[144,128]{1,0:T(1,128)}', space=vmem, size = 0x12000, scoped, tag = 'internal scratch']
  %s0 = inlined_call_operand.vmem [shape: f32[2,16,16,128], index: 0, kind: input, shape index: {}]
  %s1 = inlined_call_operand.vmem [shape: f32[1,1,1,128], index: 1, kind: input, shape index: {}]
  %s2 = inlined_call_operand.vmem [shape: f32[1,1,1,128], index: 2, kind: input, shape index: {}]
  %s3 = inlined_call_operand.vmem [shape: f32[2,16,16,128], index: 3, kind: output, shape index: {}]
  %s4 = sld [smem:[#allocation0]]
  $region45: #{conv_block_forward.5} parent=0
    _
  %s6 = ssub.s32 1, %s4
  %s7 = scalar_select 0, %s6, %s4
  loop: start=0, step=1, limit=4
  $region2: #{conv_block_forward.5} parent=0 // loop_pre_header
    _
  $region3: #{conv_block_forward.5} parent=0 // loop_header
    %s9 = sphi 0, %s13
    %p10 = scmp.ge.s32.totalorder %s9, 4
    %s16 = sphi 0, %s28
    %s17 = sphi 0, %s24
    %s18 = sphi 0, %s16
    %s19 = sphi 0, %s17
    %s20 = sphi 0, %s18
    %s21 = sphi 0, %s19
    %s33 = sphi 0, %s35
    %s36 = sphi 0, %s33
    %s37 = sphi 0, %s36
    %s53 = sphi 0, %s37
    %s57 = sphi 0, %s57
    %s59 = sphi 0, %s57
    %s60 = sphi 0, %s59
    %s74 = sphi 0, %s60
    %s78 = sphi 0, %s78
    %s80 = sphi 0, %s78
    %s81 = sphi 0, %s80
    %s95 = sphi 0, %s81
    %s103 = sphi 0, %s105
    %s106 = sphi 0, %s103
    %s107 = sphi 0, %s106
    %s123 = sphi 0, %s107
  $region4: #{conv_block_forward.5} parent=0 // loop_header_branch
    %12 = sbr.rel (%p10) target = $region8
  $region5: #{conv_block_forward.5} parent=0 // loop_body
    %s14 = ssub.s32 %s9, 1
    %s15 = ssub.s32 %s9, 2
    %s22 = sadd.s32 1, %s17
    %p23 = scmp.ge.s32.totalorder %s22, 1
    %s24 = scalar_select %p23, 0, %s22
    %s25 = sadd.s32 1, %s16
    %s26 = scalar_select %p23, %s25, %s16
    %p27 = scmp.ge.s32.totalorder %s26, 2
    %s28 = scalar_select %p27, 0, %s26
    %s29 = ssub.s32 %s16, %s28
    %s30 = ssub.s32 %s17, %s24
    %s31 = sor.u32 %s29, %s30
    %p32 = scmp.eq.s32.totalorder %s31, 0
    %s34 = sadd.s32 %s33, 1
    %s35 = scalar_select %p32, %s33, %s34
    %p38 = pneg %p32
    %p39 = scmp.eq.s32.totalorder %s9, 1
    %p40 = por %p38, %p39
    %p41 = scmp.ne.s32.totalorder %s33, %s36
    %p42 = scmp.eq.s32.totalorder %s9, 0
    %p43 = por %p41, %p42
    %p44 = scmp.ne.s32.totalorder %s33, %s36
    %p45 = scmp.eq.s32.totalorder %s14, 1
    %p46 = por %p44, %p45
    %p47 = scmp.ne.s32.totalorder %s36, %s37
    %p48 = scmp.eq.s32.totalorder %s14, 0
    %p49 = por %p47, %p48
    %p50 = scmp.ne.s32.totalorder %s36, %s37
    %p51 = scmp.eq.s32.totalorder %s15, 1
    %p52 = por %p50, %p51
    %p54 = scmp.ne.s32.totalorder %s37, %s53
    %p55 = scmp.eq.s32.totalorder %s15, 0
    %p56 = por %p54, %p55
    %s58 = sadd.s32 %s57, 1
    %p61 = scmp.eq.s32.totalorder %s9, 1
    %p62 = scmp.ne.s32.totalorder %s57, %s59
    %p63 = scmp.eq.s32.totalorder %s9, 0
    %p64 = por %p62, %p63
    %p65 = scmp.ne.s32.totalorder %s57, %s59
    %p66 = scmp.eq.s32.totalorder %s14, 1
    %p67 = por %p65, %p66
    %p68 = scmp.ne.s32.totalorder %s59, %s60
    %p69 = scmp.eq.s32.totalorder %s14, 0
    %p70 = por %p68, %p69
    %p71 = scmp.ne.s32.totalorder %s59, %s60
    %p72 = scmp.eq.s32.totalorder %s15, 1
    %p73 = por %p71, %p72
    %p75 = scmp.ne.s32.totalorder %s60, %s74
    %p76 = scmp.eq.s32.totalorder %s15, 0
    %p77 = por %p75, %p76
    %s79 = sadd.s32 %s78, 1
    %p82 = scmp.eq.s32.totalorder %s9, 1
    %p83 = scmp.ne.s32.totalorder %s78, %s80
    %p84 = scmp.eq.s32.totalorder %s9, 0
    %p85 = por %p83, %p84
    %p86 = scmp.ne.s32.totalorder %s78, %s80
    %p87 = scmp.eq.s32.totalorder %s14, 1
    %p88 = por %p86, %p87
    %p89 = scmp.ne.s32.totalorder %s80, %s81
    %p90 = scmp.eq.s32.totalorder %s14, 0
    %p91 = por %p89, %p90
    %p92 = scmp.ne.s32.totalorder %s80, %s81
    %p93 = scmp.eq.s32.totalorder %s15, 1
    %p94 = por %p92, %p93
    %p96 = scmp.ne.s32.totalorder %s81, %s95
    %p97 = scmp.eq.s32.totalorder %s15, 0
    %p98 = por %p96, %p97
    %s99 = ssub.s32 %s16, %s28
    %s100 = ssub.s32 %s17, %s24
    %s101 = sor.u32 %s99, %s100
    %p102 = scmp.eq.s32.totalorder %s101, 0
    %s104 = sadd.s32 %s103, 1
    %s105 = scalar_select %p102, %s103, %s104
    %p108 = pneg %p102
    %p109 = scmp.eq.s32.totalorder %s9, 1
    %p110 = por %p108, %p109
    %p111 = scmp.ne.s32.totalorder %s103, %s106
    %p112 = scmp.eq.s32.totalorder %s9, 0
    %p113 = por %p111, %p112
    %p114 = scmp.ne.s32.totalorder %s103, %s106
    %p115 = scmp.eq.s32.totalorder %s14, 1
    %p116 = por %p114, %p115
    %p117 = scmp.ne.s32.totalorder %s106, %s107
    %p118 = scmp.eq.s32.totalorder %s14, 0
    %p119 = por %p117, %p118
    %p120 = scmp.ne.s32.totalorder %s106, %s107
    %p121 = scmp.eq.s32.totalorder %s15, 1
    %p122 = por %p120, %p121
    %p124 = scmp.ne.s32.totalorder %s107, %s123
    %p125 = scmp.eq.s32.totalorder %s15, 0
    %p126 = por %p124, %p125
    %p127 = scmp.le.s32.totalorder 1, %s9
    %p128 = scmp.lt.s32.totalorder %s9, 3
    %p129 = pnand %p127, %p128
    %p130 = pneg %p129
    // Predicated region
    $region9: #{conv_block_forward.5} parent=5 // pred_check
      _
    $region10: #{conv_block_forward.5} parent=5 // pred_check_branch
      %132 = sbr.rel (%p129) target = $region12
    $region11: #{conv_block_forward.5} parent=5 // pred_region
      %s133 = ssub.s32 %s9, 1
      // Predicated region
      $region13: #{conv_block_forward.5} parent=11 // pred_check
        %p134 = pneg %p70
      $region14: #{conv_block_forward.5} parent=11 // pred_check_branch
        %136 = sbr.rel (%p134) target = $region16
      $region15: #{conv_block_forward.5} parent=11 // pred_region
        _
      $region16: #{conv_block_forward.5} parent=11 // pred_fallthru
        _
      // Predicated region
      $region17: #{conv_block_forward.5} parent=11 // pred_check
        %p137 = pneg %p91
      $region18: #{conv_block_forward.5} parent=11 // pred_check_branch
        %139 = sbr.rel (%p137) target = $region20
      $region19: #{conv_block_forward.5} parent=11 // pred_region
        _
      $region20: #{conv_block_forward.5} parent=11 // pred_fallthru
        _
    $region12: #{conv_block_forward.5} parent=5 // pred_fallthru
      _
    %p140 = scmp.lt.s32.totalorder %s9, 2
    // Predicated region
    $region21: #{conv_block_forward.5} parent=5 // pred_check
      %p141 = pneg %p140
    $region22: #{conv_block_forward.5} parent=5 // pred_check_branch
      %143 = sbr.rel (%p141) target = $region24
    $region23: #{conv_block_forward.5} parent=5 // pred_region
      // Predicated region
      $region25: #{conv_block_forward.5} parent=23 // pred_check
        %p144 = pneg %p43
      $region26: #{conv_block_forward.5} parent=23 // pred_check_branch
        %146 = sbr.rel (%p144) target = $region28
      $region27: #{conv_block_forward.5} parent=23 // pred_region
        %s147 = smul.u32 16, %s17
        %p148 = scmp.lt.s32.totalorder %s16, 1
        %s149 = scalar_select %p148, %s16, 1
        %p150 = scmp.lt.s32.totalorder %s147, 15
        %s151 = scalar_select %p150, %s147, 15
        %s152 = smul.addr %s151, 2
        %s153 = smul.addr %s149, 32
        %s154 = sadd.s32 %s152, %s153
        %s155 = smul.addr %s154, 8
        %s156 = scalar_lea.vmem %s0, %s155
        %s157 = smul.u32 16, %s17
      $region28: #{conv_block_forward.5} parent=23 // pred_fallthru
        _
    $region24: #{conv_block_forward.5} parent=5 // pred_fallthru
      _
    %p158 = scmp.le.s32.totalorder 1, %s9
    %p159 = scmp.lt.s32.totalorder %s9, 3
    %p160 = pnand %p158, %p159
    %p161 = pneg %p160
    // Predicated region
    $region29: #{conv_block_forward.5} parent=5 // pred_check
      _
    $region30: #{conv_block_forward.5} parent=5 // pred_check_branch
      %163 = sbr.rel (%p160) target = $region32
    $region31: #{conv_block_forward.5} parent=5 // pred_region
      %s164 = ssub.s32 %s9, 1
      %s165 = smul.u32 16, %s19
      %p166 = scmp.lt.s32.totalorder %s18, 1
      %s167 = scalar_select %p166, %s18, 1
      %p168 = scmp.lt.s32.totalorder %s165, 15
      %s169 = scalar_select %p168, %s165, 15
      %s170 = smul.addr %s169, 2
      %s171 = smul.addr %s167, 32
      %s172 = sadd.s32 %s170, %s171
      %s173 = smul.addr %s172, 8
      %s174 = scalar_lea.vmem %s0, %s173
      %p175 = pneg %p49
      %p176 = pneg %p46
      %p177 = pneg %p70
      %p178 = pneg %p67
      %p179 = pneg %p91
      %p180 = pneg %p88
      %p181 = pneg %p119
      %p182 = pneg %p116
      %s183 = smul.u32 16, %s19
      %p184 = scmp.lt.s32.totalorder %s18, 1
      %s185 = scalar_select %p184, %s18, 1
      %p186 = scmp.lt.s32.totalorder %s183, 15
      %s187 = scalar_select %p186, %s183, 15
      %s188 = smul.addr %s187, 2
      %s189 = smul.addr %s185, 32
      %s190 = sadd.s32 %s188, %s189
      %s191 = smul.addr %s190, 8
      %s192 = scalar_lea.vmem %s3, %s191
      %s193 = smul.u32 16, %s19
      %p194 = scmp.lt.s32.totalorder %s18, 1
      %s195 = scalar_select %p194, %s18, 1
      %p196 = scmp.lt.s32.totalorder %s193, 15
      %s197 = scalar_select %p196, %s193, 15
      %s198 = smul.addr %s197, 2
      %s199 = smul.addr %s195, 32
      %s200 = sadd.s32 %s198, %s199
      %s201 = smul.addr %s200, 8
      %s202 = scalar_lea.vmem %s0, %s201
      %s203 = smul.u32 16, %s19
      %s204 = smul.u32 16, %s19
      %p205 = scmp.lt.s32.totalorder %s18, 1
      %s206 = scalar_select %p205, %s18, 1
      %p207 = scmp.lt.s32.totalorder %s204, 15
      %s208 = scalar_select %p207, %s204, 15
      %s209 = smul.addr %s208, 2
      %s210 = smul.addr %s206, 32
      %s211 = sadd.s32 %s209, %s210
      %s212 = smul.addr %s211, 8
      %s213 = scalar_lea.vmem %s3, %s212
      %s214 = smul.u32 16, %s19
      %v215 = vld [vmem:[%s202] sm:$0xff]
      %v216 = vld [vmem:[%s202 + $0x8] sm:$0xff]
      %v217 = vld [vmem:[%s202 + $0x10] sm:$0xff]
      %v218 = vld [vmem:[%s202 + $0x18] sm:$0xff]
      %v219 = vld [vmem:[%s202 + $0x20] sm:$0xff]
      %v220 = vld [vmem:[%s202 + $0x28] sm:$0xff]
      %v221 = vld [vmem:[%s202 + $0x30] sm:$0xff]
      %v222 = vld [vmem:[%s202 + $0x38] sm:$0xff]
      %v223 = vld [vmem:[%s202 + $0x40] sm:$0xff]
      %v224 = vld [vmem:[%s202 + $0x48] sm:$0xff]
      %v225 = vld [vmem:[%s202 + $0x50] sm:$0xff]
      %v226 = vld [vmem:[%s202 + $0x58] sm:$0xff]
      %v227 = vld [vmem:[%s202 + $0x60] sm:$0xff]
      %v228 = vld [vmem:[%s202 + $0x68] sm:$0xff]
      %v229 = vld [vmem:[%s202 + $0x70] sm:$0xff]
      %v230 = vld [vmem:[%s202 + $0x78] sm:$0xff]
      %v231 = vld [vmem:[%s202 + $0x80] sm:$0xff]
      %v232 = vld [vmem:[%s202 + $0x88] sm:$0xff]
      %v233 = vld [vmem:[%s202 + $0x90] sm:$0xff]
      %v234 = vld [vmem:[%s202 + $0x98] sm:$0xff]
      %v235 = vld [vmem:[%s202 + $0xa0] sm:$0xff]
      %v236 = vld [vmem:[%s202 + $0xa8] sm:$0xff]
      %v237 = vld [vmem:[%s202 + $0xb0] sm:$0xff]
      %v238 = vld [vmem:[%s202 + $0xb8] sm:$0xff]
      %v239 = vld [vmem:[%s202 + $0xc0] sm:$0xff]
      %v240 = vld [vmem:[%s202 + $0xc8] sm:$0xff]
      %v241 = vld [vmem:[%s202 + $0xd0] sm:$0xff]
      %v242 = vld [vmem:[%s202 + $0xd8] sm:$0xff]
      %v243 = vld [vmem:[%s202 + $0xe0] sm:$0xff]
      %v244 = vld [vmem:[%s202 + $0xe8] sm:$0xff]
      %v245 = vld [vmem:[%s202 + $0xf0] sm:$0xff]
      %v246 = vld [vmem:[%s202 + $0xf8] sm:$0xff]
      %v247 = vld [vmem:[%s1] sm:$0x1]
      %v249 = vlaneseq
      %v250 = vshrl.u32 %v249, 7
      %v251 = vsub.s32 0, %v250
      %v252 = vrot.slane %v247, %v251
      %v254 = vmul.f32 %v215, %v252
      %v255 = vmul.f32 %v216, %v252
      %v256 = vmul.f32 %v217, %v252
      %v257 = vmul.f32 %v218, %v252
      %v258 = vmul.f32 %v219, %v252
      %v259 = vmul.f32 %v220, %v252
      %v260 = vmul.f32 %v221, %v252
      %v261 = vmul.f32 %v222, %v252
      %v262 = vmul.f32 %v223, %v252
      %v263 = vmul.f32 %v224, %v252
      %v264 = vmul.f32 %v225, %v252
      %v265 = vmul.f32 %v226, %v252
      %v266 = vmul.f32 %v227, %v252
      %v267 = vmul.f32 %v228, %v252
      %v268 = vmul.f32 %v229, %v252
      %v269 = vmul.f32 %v230, %v252
      %v270 = vmul.f32 %v231, %v252
      %v271 = vmul.f32 %v232, %v252
      %v272 = vmul.f32 %v233, %v252
      %v273 = vmul.f32 %v234, %v252
      %v274 = vmul.f32 %v235, %v252
      %v275 = vmul.f32 %v236, %v252
      %v276 = vmul.f32 %v237, %v252
      %v277 = vmul.f32 %v238, %v252
      %v278 = vmul.f32 %v239, %v252
      %v279 = vmul.f32 %v240, %v252
      %v280 = vmul.f32 %v241, %v252
      %v281 = vmul.f32 %v242, %v252
      %v282 = vmul.f32 %v243, %v252
      %v283 = vmul.f32 %v244, %v252
      %v284 = vmul.f32 %v245, %v252
      %v285 = vmul.f32 %v246, %v252
      %v286 = vld [vmem:[%s2] sm:$0x1]
      %v288 = vlaneseq
      %v289 = vshrl.u32 %v288, 7
      %v290 = vsub.s32 0, %v289
      %v291 = vrot.slane %v286, %v290
      %v293 = vadd.f32 %v254, %v291
      %v294 = vadd.f32 %v255, %v291
      %v295 = vadd.f32 %v256, %v291
      %v296 = vadd.f32 %v257, %v291
      %v297 = vadd.f32 %v258, %v291
      %v298 = vadd.f32 %v259, %v291
      %v299 = vadd.f32 %v260, %v291
      %v300 = vadd.f32 %v261, %v291
      %v301 = vadd.f32 %v262, %v291
      %v302 = vadd.f32 %v263, %v291
      %v303 = vadd.f32 %v264, %v291
      %v304 = vadd.f32 %v265, %v291
      %v305 = vadd.f32 %v266, %v291
      %v306 = vadd.f32 %v267, %v291
      %v307 = vadd.f32 %v268, %v291
      %v308 = vadd.f32 %v269, %v291
      %v309 = vadd.f32 %v270, %v291
      %v310 = vadd.f32 %v271, %v291
      %v311 = vadd.f32 %v272, %v291
      %v312 = vadd.f32 %v273, %v291
      %v313 = vadd.f32 %v274, %v291
      %v314 = vadd.f32 %v275, %v291
      %v315 = vadd.f32 %v276, %v291
      %v316 = vadd.f32 %v277, %v291
      %v317 = vadd.f32 %v278, %v291
      %v318 = vadd.f32 %v279, %v291
      %v319 = vadd.f32 %v280, %v291
      %v320 = vadd.f32 %v281, %v291
      %v321 = vadd.f32 %v282, %v291
      %v322 = vadd.f32 %v283, %v291
      %v323 = vadd.f32 %v284, %v291
      %v324 = vadd.f32 %v285, %v291
      %v325 = vmax.f32 %v293, 0.0
      %v326 = vmax.f32 %v294, 0.0
      %v327 = vmax.f32 %v295, 0.0
      %v328 = vmax.f32 %v296, 0.0
      %v329 = vmax.f32 %v297, 0.0
      %v330 = vmax.f32 %v298, 0.0
      %v331 = vmax.f32 %v299, 0.0
      %v332 = vmax.f32 %v300, 0.0
      %v333 = vmax.f32 %v301, 0.0
      %v334 = vmax.f32 %v302, 0.0
      %v335 = vmax.f32 %v303, 0.0
      %v336 = vmax.f32 %v304, 0.0
      %v337 = vmax.f32 %v305, 0.0
      %v338 = vmax.f32 %v306, 0.0
      %v339 = vmax.f32 %v307, 0.0
      %v340 = vmax.f32 %v308, 0.0
      %v341 = vmax.f32 %v309, 0.0
      %v342 = vmax.f32 %v310, 0.0
      %v343 = vmax.f32 %v311, 0.0
      %v344 = vmax.f32 %v312, 0.0
      %v345 = vmax.f32 %v313, 0.0
      %v346 = vmax.f32 %v314, 0.0
      %v347 = vmax.f32 %v315, 0.0
      %v348 = vmax.f32 %v316, 0.0
      %v349 = vmax.f32 %v317, 0.0
      %v350 = vmax.f32 %v318, 0.0
      %v351 = vmax.f32 %v319, 0.0
      %v352 = vmax.f32 %v320, 0.0
      %v353 = vmax.f32 %v321, 0.0
      %v354 = vmax.f32 %v322, 0.0
      %v355 = vmax.f32 %v323, 0.0
      %v356 = vmax.f32 %v324, 0.0
      %357 = vst [vmem:[%s213] sm:$0xff] %v325
      %358 = vst [vmem:[%s213 + $0x8] sm:$0xff] %v326
      %359 = vst [vmem:[%s213 + $0x10] sm:$0xff] %v327
      %360 = vst [vmem:[%s213 + $0x18] sm:$0xff] %v328
      %361 = vst [vmem:[%s213 + $0x20] sm:$0xff] %v329
      %362 = vst [vmem:[%s213 + $0x28] sm:$0xff] %v330
      %363 = vst [vmem:[%s213 + $0x30] sm:$0xff] %v331
      %364 = vst [vmem:[%s213 + $0x38] sm:$0xff] %v332
      %365 = vst [vmem:[%s213 + $0x40] sm:$0xff] %v333
      %366 = vst [vmem:[%s213 + $0x48] sm:$0xff] %v334
      %367 = vst [vmem:[%s213 + $0x50] sm:$0xff] %v335
      %368 = vst [vmem:[%s213 + $0x58] sm:$0xff] %v336
      %369 = vst [vmem:[%s213 + $0x60] sm:$0xff] %v337
      %370 = vst [vmem:[%s213 + $0x68] sm:$0xff] %v338
      %371 = vst [vmem:[%s213 + $0x70] sm:$0xff] %v339
      %372 = vst [vmem:[%s213 + $0x78] sm:$0xff] %v340
      %373 = vst [vmem:[%s213 + $0x80] sm:$0xff] %v341
      %374 = vst [vmem:[%s213 + $0x88] sm:$0xff] %v342
      %375 = vst [vmem:[%s213 + $0x90] sm:$0xff] %v343
      %376 = vst [vmem:[%s213 + $0x98] sm:$0xff] %v344
      %377 = vst [vmem:[%s213 + $0xa0] sm:$0xff] %v345
      %378 = vst [vmem:[%s213 + $0xa8] sm:$0xff] %v346
      %379 = vst [vmem:[%s213 + $0xb0] sm:$0xff] %v347
      %380 = vst [vmem:[%s213 + $0xb8] sm:$0xff] %v348
      %381 = vst [vmem:[%s213 + $0xc0] sm:$0xff] %v349
      %382 = vst [vmem:[%s213 + $0xc8] sm:$0xff] %v350
      %383 = vst [vmem:[%s213 + $0xd0] sm:$0xff] %v351
      %384 = vst [vmem:[%s213 + $0xd8] sm:$0xff] %v352
      %385 = vst [vmem:[%s213 + $0xe0] sm:$0xff] %v353
      %386 = vst [vmem:[%s213 + $0xe8] sm:$0xff] %v354
      %387 = vst [vmem:[%s213 + $0xf0] sm:$0xff] %v355
      %388 = vst [vmem:[%s213 + $0xf8] sm:$0xff] %v356
      %s389 = smul.u32 16, %s19
      %p390 = scmp.lt.s32.totalorder %s18, 1
      %s391 = scalar_select %p390, %s18, 1
      %p392 = scmp.lt.s32.totalorder %s389, 15
      %s393 = scalar_select %p392, %s389, 15
      %s394 = smul.addr %s393, 2
      %s395 = smul.addr %s391, 32
      %s396 = sadd.s32 %s394, %s395
      %s397 = smul.addr %s396, 8
      %s398 = scalar_lea.vmem %s3, %s397
      // Predicated region
      $region33: #{conv_block_forward.5} parent=31 // pred_check
        %p399 = pneg %p116
      $region34: #{conv_block_forward.5} parent=31 // pred_check_branch
        %401 = sbr.rel (%p399) target = $region36
      $region35: #{conv_block_forward.5} parent=31 // pred_region
        %s402 = smul.u32 16, %s19
      $region36: #{conv_block_forward.5} parent=31 // pred_fallthru
        _
    $region32: #{conv_block_forward.5} parent=5 // pred_fallthru
      _
    %p403 = scmp.le.s32.totalorder 2, %s9
    // Predicated region
    $region37: #{conv_block_forward.5} parent=5 // pred_check
      %p404 = pneg %p403
    $region38: #{conv_block_forward.5} parent=5 // pred_check_branch
      %406 = sbr.rel (%p404) target = $region40
    $region39: #{conv_block_forward.5} parent=5 // pred_region
      %s407 = ssub.s32 %s9, 2
      // Predicated region
      $region41: #{conv_block_forward.5} parent=39 // pred_check
        %p408 = pneg %p122
      $region42: #{conv_block_forward.5} parent=39 // pred_check_branch
        %410 = sbr.rel (%p408) target = $region44
      $region43: #{conv_block_forward.5} parent=39 // pred_region
        %s411 = smul.u32 16, %s21
        %p412 = scmp.lt.s32.totalorder %s20, 1
        %s413 = scalar_select %p412, %s20, 1
        %p414 = scmp.lt.s32.totalorder %s411, 15
        %s415 = scalar_select %p414, %s411, 15
        %s416 = smul.addr %s415, 2
        %s417 = smul.addr %s413, 32
        %s418 = sadd.s32 %s416, %s417
        %s419 = smul.addr %s418, 8
        %s420 = scalar_lea.vmem %s3, %s419
      $region44: #{conv_block_forward.5} parent=39 // pred_fallthru
        _
    $region40: #{conv_block_forward.5} parent=5 // pred_fallthru
      _
  $region6: #{conv_block_forward.5} parent=0 // loop_footer
    %s13 = sadd.s32 1, %s9
  $region7: #{conv_block_forward.5} parent=0 // loop_footer_branch
    %8 = sbr.rel target = $region3
  $region8: #{conv_block_forward.5} parent=0 // loop_exit
    _

// kernel: conv_block_forward.4
$region0: #{conv_block_forward.4}
  #allocation0 [shape = 'u32[]', space=smem, size = 0x4, offset = 0x4, fixed_abs, tag = 'smem constant byte address 0x4 - core index']
  #allocation1 [shape = 'u32[144,128]{1,0:T(1,128)}', space=vmem, size = 0x12000, scoped, tag = 'internal scratch']
  #allocation2 [shape = 'f32[18,18,128]{2,1,0:T(8,128)}', space=vmem, size = 0x36000, scoped, tag = 'scratch operand']
  #allocation3 [shape = 'f32[256,128]{1,0:T(8,128)}', space=vmem, size = 0x20000, scoped, tag = 'scratch operand']
  #allocation4 [shape = 's32[1]{0}', space=sflag, size = 0x4, scoped, tag = 'scratch operand']
  #allocation5 [shape = 's32[]', space=sflag, size = 0x4, offset = 0, fixed_abs, tag = 'sflag constant byte address 0x0 - dummy sync flag']
  %s0 = inlined_call_operand.vmem [shape: f32[2,18,18,128], index: 0, kind: input, shape index: {}]
  %s1 = inlined_call_operand.vmem [shape: bf16[9,128,128], index: 1, kind: input, shape index: {}]
  %s2 = inlined_call_operand.vmem [shape: f32[2,16,16,128], index: 2, kind: output, shape index: {0}]
  %s3 = inlined_call_operand.vmem [shape: f32[2,1,1,128], index: 3, kind: output, shape index: {1}]
  %s4 = inlined_call_operand.vmem [shape: f32[2,1,1,128], index: 4, kind: output, shape index: {2}]
  %5 = xla_tuple %s2, %s3, %s4
  %s6 = sld [smem:[#allocation0]]
  $region90: #{conv_block_forward.4} parent=0
    _
  %s8 = ssub.s32 1, %s6
  %s9 = scalar_select 0, %s8, %s6
  loop: start=0, step=1, limit=4
  $region2: #{conv_block_forward.4} parent=0 // loop_pre_header
    _
  $region3: #{conv_block_forward.4} parent=0 // loop_header
    %s11 = sphi 0, %s15
    %p12 = scmp.ge.s32.totalorder %s11, 4
    %s18 = sphi 0, %s30
    %s19 = sphi 0, %s26
    %s20 = sphi 0, %s18
    %s21 = sphi 0, %s19
    %s22 = sphi 0, %s20
    %s23 = sphi 0, %s21
    %s31 = sphi 0, %s31
    %s33 = sphi 0, %s31
    %s34 = sphi 0, %s33
    %s48 = sphi 0, %s34
    %s56 = sphi 0, %s58
    %s59 = sphi 0, %s56
    %s60 = sphi 0, %s59
    %s76 = sphi 0, %s60
    %s84 = sphi 0, %s86
    %s87 = sphi 0, %s84
    %s88 = sphi 0, %s87
    %s104 = sphi 0, %s88
    %s112 = sphi 0, %s114
    %s115 = sphi 0, %s112
    %s116 = sphi 0, %s115
    %s132 = sphi 0, %s116
  $region4: #{conv_block_forward.4} parent=0 // loop_header_branch
    %14 = sbr.rel (%p12) target = $region8
  $region5: #{conv_block_forward.4} parent=0 // loop_body
    %s16 = ssub.s32 %s11, 1
    %s17 = ssub.s32 %s11, 2
    %s24 = sadd.s32 1, %s19
    %p25 = scmp.ge.s32.totalorder %s24, 1
    %s26 = scalar_select %p25, 0, %s24
    %s27 = sadd.s32 1, %s18
    %s28 = scalar_select %p25, %s27, %s18
    %p29 = scmp.ge.s32.totalorder %s28, 2
    %s30 = scalar_select %p29, 0, %s28
    %s32 = sadd.s32 %s31, 1
    %p35 = scmp.eq.s32.totalorder %s11, 1
    %p36 = scmp.ne.s32.totalorder %s31, %s33
    %p37 = scmp.eq.s32.totalorder %s11, 0
    %p38 = por %p36, %p37
    %p39 = scmp.ne.s32.totalorder %s31, %s33
    %p40 = scmp.eq.s32.totalorder %s16, 1
    %p41 = por %p39, %p40
    %p42 = scmp.ne.s32.totalorder %s33, %s34
    %p43 = scmp.eq.s32.totalorder %s16, 0
    %p44 = por %p42, %p43
    %p45 = scmp.ne.s32.totalorder %s33, %s34
    %p46 = scmp.eq.s32.totalorder %s17, 1
    %p47 = por %p45, %p46
    %p49 = scmp.ne.s32.totalorder %s34, %s48
    %p50 = scmp.eq.s32.totalorder %s17, 0
    %p51 = por %p49, %p50
    %s52 = ssub.s32 %s18, %s30
    %s53 = ssub.s32 %s19, %s26
    %s54 = sor.u32 %s52, %s53
    %p55 = scmp.eq.s32.totalorder %s54, 0
    %s57 = sadd.s32 %s56, 1
    %s58 = scalar_select %p55, %s56, %s57
    %p61 = pneg %p55
    %p62 = scmp.eq.s32.totalorder %s11, 1
    %p63 = por %p61, %p62
    %p64 = scmp.ne.s32.totalorder %s56, %s59
    %p65 = scmp.eq.s32.totalorder %s11, 0
    %p66 = por %p64, %p65
    %p67 = scmp.ne.s32.totalorder %s56, %s59
    %p68 = scmp.eq.s32.totalorder %s16, 1
    %p69 = por %p67, %p68
    %p70 = scmp.ne.s32.totalorder %s59, %s60
    %p71 = scmp.eq.s32.totalorder %s16, 0
    %p72 = por %p70, %p71
    %p73 = scmp.ne.s32.totalorder %s59, %s60
    %p74 = scmp.eq.s32.totalorder %s17, 1
    %p75 = por %p73, %p74
    %p77 = scmp.ne.s32.totalorder %s60, %s76
    %p78 = scmp.eq.s32.totalorder %s17, 0
    %p79 = por %p77, %p78
    %s80 = ssub.s32 %s18, %s30
    %s81 = ssub.s32 %s19, %s26
    %s82 = sor.u32 %s80, %s81
    %p83 = scmp.eq.s32.totalorder %s82, 0
    %s85 = sadd.s32 %s84, 1
    %s86 = scalar_select %p83, %s84, %s85
    %p89 = pneg %p83
    %p90 = scmp.eq.s32.totalorder %s11, 1
    %p91 = por %p89, %p90
    %p92 = scmp.ne.s32.totalorder %s84, %s87
    %p93 = scmp.eq.s32.totalorder %s11, 0
    %p94 = por %p92, %p93
    %p95 = scmp.ne.s32.totalorder %s84, %s87
    %p96 = scmp.eq.s32.totalorder %s16, 1
    %p97 = por %p95, %p96
    %p98 = scmp.ne.s32.totalorder %s87, %s88
    %p99 = scmp.eq.s32.totalorder %s16, 0
    %p100 = por %p98, %p99
    %p101 = scmp.ne.s32.totalorder %s87, %s88
    %p102 = scmp.eq.s32.totalorder %s17, 1
    %p103 = por %p101, %p102
    %p105 = scmp.ne.s32.totalorder %s88, %s104
    %p106 = scmp.eq.s32.totalorder %s17, 0
    %p107 = por %p105, %p106
    %s108 = ssub.s32 %s18, %s30
    %s109 = ssub.s32 %s19, %s26
    %s110 = sor.u32 %s108, %s109
    %p111 = scmp.eq.s32.totalorder %s110, 0
    %s113 = sadd.s32 %s112, 1
    %s114 = scalar_select %p111, %s112, %s113
    %p117 = pneg %p111
    %p118 = scmp.eq.s32.totalorder %s11, 1
    %p119 = por %p117, %p118
    %p120 = scmp.ne.s32.totalorder %s112, %s115
    %p121 = scmp.eq.s32.totalorder %s11, 0
    %p122 = por %p120, %p121
    %p123 = scmp.ne.s32.totalorder %s112, %s115
    %p124 = scmp.eq.s32.totalorder %s16, 1
    %p125 = por %p123, %p124
    %p126 = scmp.ne.s32.totalorder %s115, %s116
    %p127 = scmp.eq.s32.totalorder %s16, 0
    %p128 = por %p126, %p127
    %p129 = scmp.ne.s32.totalorder %s115, %s116
    %p130 = scmp.eq.s32.totalorder %s17, 1
    %p131 = por %p129, %p130
    %p133 = scmp.ne.s32.totalorder %s116, %s132
    %p134 = scmp.eq.s32.totalorder %s17, 0
    %p135 = por %p133, %p134
    %p136 = scmp.le.s32.totalorder 1, %s11
    %p137 = scmp.lt.s32.totalorder %s11, 3
    %p138 = pnand %p136, %p137
    %p139 = pneg %p138
    // Predicated region
    $region9: #{conv_block_forward.4} parent=5 // pred_check
      _
    $region10: #{conv_block_forward.4} parent=5 // pred_check_branch
      %141 = sbr.rel (%p138) target = $region12
    $region11: #{conv_block_forward.4} parent=5 // pred_region
      %s142 = ssub.s32 %s11, 1
      // Predicated region
      $region13: #{conv_block_forward.4} parent=11 // pred_check
        %p143 = pneg %p44
      $region14: #{conv_block_forward.4} parent=11 // pred_check_branch
        %145 = sbr.rel (%p143) target = $region16
      $region15: #{conv_block_forward.4} parent=11 // pred_region
        _
      $region16: #{conv_block_forward.4} parent=11 // pred_fallthru
        _
    $region12: #{conv_block_forward.4} parent=5 // pred_fallthru
      _
    %p146 = scmp.lt.s32.totalorder %s11, 2
    // Predicated region
    $region17: #{conv_block_forward.4} parent=5 // pred_check
      %p147 = pneg %p146
    $region18: #{conv_block_forward.4} parent=5 // pred_check_branch
      %149 = sbr.rel (%p147) target = $region20
    $region19: #{conv_block_forward.4} parent=5 // pred_region
      _
    $region20: #{conv_block_forward.4} parent=5 // pred_fallthru
      _
    %p150 = scmp.le.s32.totalorder 1, %s11
    %p151 = scmp.lt.s32.totalorder %s11, 3
    %p152 = pnand %p150, %p151
    %p153 = pneg %p152
    // Predicated region
    $region21: #{conv_block_forward.4} parent=5 // pred_check
      _
    $region22: #{conv_block_forward.4} parent=5 // pred_check_branch
      %155 = sbr.rel (%p152) target = $region24
    $region23: #{conv_block_forward.4} parent=5 // pred_region
      %s156 = ssub.s32 %s11, 1
      %p157 = pneg %p44
      %p158 = pneg %p41
      %p159 = pneg %p72
      %p160 = pneg %p69
      %s161 = smul.u32 16, %s21
      %p162 = scmp.lt.s32.totalorder %s20, 1
      %s163 = scalar_select %p162, %s20, 1
      %p164 = scmp.lt.s32.totalorder %s161, 15
      %s165 = scalar_select %p164, %s161, 15
      %s166 = smul.addr %s165, 2
      %s167 = smul.addr %s163, 32
      %s168 = sadd.s32 %s166, %s167
      %s169 = smul.addr %s168, 8
      %s170 = scalar_lea.vmem %s2, %s169
      %p171 = pneg %p100
      %p172 = pneg %p97
      %p173 = scmp.lt.s32.totalorder %s20, 1
      %s174 = scalar_select %p173, %s20, 1
      %p175 = scmp.lt.s32.totalorder %s21, 0
      %s176 = scalar_select %p175, %s21, 0
      %s177 = sadd.s32 %s176, %s174
      %s178 = scalar_lea.vmem %s3, %s177
      %p179 = pneg %p128
      %p180 = pneg %p125
      %p181 = scmp.lt.s32.totalorder %s20, 1
      %s182 = scalar_select %p181, %s20, 1
      %p183 = scmp.lt.s32.totalorder %s21, 0
      %s184 = scalar_select %p183, %s21, 0
      %s185 = sadd.s32 %s184, %s182
      %s186 = scalar_lea.vmem %s4, %s185
      %s187 = smul.u32 16, %s21
      %p188 = scmp.lt.s32.totalorder %s20, 1
      %s189 = scalar_select %p188, %s20, 1
      %p190 = scmp.lt.s32.totalorder %s187, 15
      %s191 = scalar_select %p190, %s187, 15
      %s192 = smul.addr %s191, 2
      %s193 = smul.addr %s189, 32
      %s194 = sadd.s32 %s192, %s193
      %s195 = smul.addr %s194, 8
      %s196 = scalar_lea.vmem %s2, %s195
      %s197 = smul.u32 16, %s21
      %p198 = scmp.lt.s32.totalorder %s20, 1
      %s199 = scalar_select %p198, %s20, 1
      %p200 = scmp.lt.s32.totalorder %s21, 0
      %s201 = scalar_select %p200, %s21, 0
      %s202 = sadd.s32 %s201, %s199
      %s203 = scalar_lea.vmem %s3, %s202
      %p204 = scmp.lt.s32.totalorder %s20, 1
      %s205 = scalar_select %p204, %s20, 1
      %p206 = scmp.lt.s32.totalorder %s21, 0
      %s207 = scalar_select %p206, %s21, 0
      %s208 = sadd.s32 %s207, %s205
      %s209 = scalar_lea.vmem %s4, %s208
      %s211 = smul.u32 %s21, 16
      %s212 = smul.u32 %s211, 24
      %s213 = smul.u32 %s20, 432
      %s214 = sadd.s32 %s212, %s213
      %s215 = scalar_lea.vmem %s0, %s214
      %p217 = scmp.lt.u32.totalorder 18, 8
      %p218 = pneg %p217
      // Predicated region
      $region25: #{conv_block_forward.4} parent=23 // pred_check
        _
      $region26: #{conv_block_forward.4} parent=23 // pred_check_branch
        %220 = sbr.rel (%p217) target = $region28
      $region27: #{conv_block_forward.4} parent=23 // pred_region
        %s269 = sand.u32 18, 7
        %p270 = scmp.eq.s32.totalorder %s269, 0
        %p271 = pneg %p270
        // Predicated region
        $region40: #{conv_block_forward.4} parent=27 // pred_check
          _
        $region41: #{conv_block_forward.4} parent=27 // pred_check_branch
          %273 = sbr.rel (%p270) target = $region43
        $region42: #{conv_block_forward.4} parent=27 // pred_region
          %s274 = sand.u32 18, 7
          %s275 = ssub.s32 18, %s274
          %s276 = scalar_lea.vmem %s215, %s275
          %s277 = ssub.s32 18, %s274
          %s278 = scalar_lea.vmem [#allocation2], %s277
          loop: start=0, step=1, limit=1
          $region44: #{conv_block_forward.4} parent=42 // loop_pre_header
            _
          $region45: #{conv_block_forward.4} parent=42 // loop_header
            %s280 = sphi 0, %s284
            %p281 = scmp.ge.s32.totalorder %s280, 1
            %s285 = sphi %s215, %s215
            %s286 = sphi [#allocation2], [#allocation2]
          $region46: #{conv_block_forward.4} parent=42 // loop_header_branch
            %283 = sbr.rel (%p281) target = $region50
          $region47: #{conv_block_forward.4} parent=42 // loop_body
            %v287 = vld [vmem:[%s285] sm:$0xff]
            %288 = vst [vmem:[%s286] sm:$0xff] %v287
            %v289 = vld [vmem:[%s285 + $0x8] sm:$0xff]
            %290 = vst [vmem:[%s286 + $0x8] sm:$0xff] %v289
            %v291 = vld [vmem:[%s285 + $0x18] sm:$0xff]
            %292 = vst [vmem:[%s286 + $0x18] sm:$0xff] %v291
            %v293 = vld [vmem:[%s285 + $0x20] sm:$0xff]
            %294 = vst [vmem:[%s286 + $0x20] sm:$0xff] %v293
            %v295 = vld [vmem:[%s285 + $0x30] sm:$0xff]
            %296 = vst [vmem:[%s286 + $0x30] sm:$0xff] %v295
            %v297 = vld [vmem:[%s285 + $0x38] sm:$0xff]
            %298 = vst [vmem:[%s286 + $0x38] sm:$0xff] %v297
            %v299 = vld [vmem:[%s285 + $0x48] sm:$0xff]
            %300 = vst [vmem:[%s286 + $0x48] sm:$0xff] %v299
            %v301 = vld [vmem:[%s285 + $0x50] sm:$0xff]
            %302 = vst [vmem:[%s286 + $0x50] sm:$0xff] %v301
            %v303 = vld [vmem:[%s285 + $0x60] sm:$0xff]
            %304 = vst [vmem:[%s286 + $0x60] sm:$0xff] %v303
            %v305 = vld [vmem:[%s285 + $0x68] sm:$0xff]
            %306 = vst [vmem:[%s286 + $0x68] sm:$0xff] %v305
            %v307 = vld [vmem:[%s285 + $0x78] sm:$0xff]
            %308 = vst [vmem:[%s286 + $0x78] sm:$0xff] %v307
            %v309 = vld [vmem:[%s285 + $0x80] sm:$0xff]
            %310 = vst [vmem:[%s286 + $0x80] sm:$0xff] %v309
            %v311 = vld [vmem:[%s285 + $0x90] sm:$0xff]
            %312 = vst [vmem:[%s286 + $0x90] sm:$0xff] %v311
            %v313 = vld [vmem:[%s285 + $0x98] sm:$0xff]
            %314 = vst [vmem:[%s286 + $0x98] sm:$0xff] %v313
            %v315 = vld [vmem:[%s285 + $0xa8] sm:$0xff]
            %316 = vst [vmem:[%s286 + $0xa8] sm:$0xff] %v315
            %v317 = vld [vmem:[%s285 + $0xb0] sm:$0xff]
            %318 = vst [vmem:[%s286 + $0xb0] sm:$0xff] %v317
            %v319 = vld [vmem:[%s285 + $0xc0] sm:$0xff]
            %320 = vst [vmem:[%s286 + $0xc0] sm:$0xff] %v319
            %v321 = vld [vmem:[%s285 + $0xc8] sm:$0xff]
            %322 = vst [vmem:[%s286 + $0xc8] sm:$0xff] %v321
            %v323 = vld [vmem:[%s285 + $0xd8] sm:$0xff]
            %324 = vst [vmem:[%s286 + $0xd8] sm:$0xff] %v323
            %v325 = vld [vmem:[%s285 + $0xe0] sm:$0xff]
            %326 = vst [vmem:[%s286 + $0xe0] sm:$0xff] %v325
            %v327 = vld [vmem:[%s285 + $0xf0] sm:$0xff]
            %328 = vst [vmem:[%s286 + $0xf0] sm:$0xff] %v327
            %v329 = vld [vmem:[%s285 + $0xf8] sm:$0xff]
            %330 = vst [vmem:[%s286 + $0xf8] sm:$0xff] %v329
            %v331 = vld [vmem:[%s285 + $0x108] sm:$0xff]
            %332 = vst [vmem:[%s286 + $0x108] sm:$0xff] %v331
            %v333 = vld [vmem:[%s285 + $0x110] sm:$0xff]
            %334 = vst [vmem:[%s286 + $0x110] sm:$0xff] %v333
            %v335 = vld [vmem:[%s285 + $0x120] sm:$0xff]
            %336 = vst [vmem:[%s286 + $0x120] sm:$0xff] %v335
            %v337 = vld [vmem:[%s285 + $0x128] sm:$0xff]
            %338 = vst [vmem:[%s286 + $0x128] sm:$0xff] %v337
            %v339 = vld [vmem:[%s285 + $0x138] sm:$0xff]
            %340 = vst [vmem:[%s286 + $0x138] sm:$0xff] %v339
            %v341 = vld [vmem:[%s285 + $0x140] sm:$0xff]
            %342 = vst [vmem:[%s286 + $0x140] sm:$0xff] %v341
            %v343 = vld [vmem:[%s285 + $0x150] sm:$0xff]
            %344 = vst [vmem:[%s286 + $0x150] sm:$0xff] %v343
            %v345 = vld [vmem:[%s285 + $0x158] sm:$0xff]
            %346 = vst [vmem:[%s286 + $0x158] sm:$0xff] %v345
            %v347 = vld [vmem:[%s285 + $0x168] sm:$0xff]
            %348 = vst [vmem:[%s286 + $0x168] sm:$0xff] %v347
            %v349 = vld [vmem:[%s285 + $0x170] sm:$0xff]
            %350 = vst [vmem:[%s286 + $0x170] sm:$0xff] %v349
            %v351 = vld [vmem:[%s285 + $0x180] sm:$0xff]
            %352 = vst [vmem:[%s286 + $0x180] sm:$0xff] %v351
            %v353 = vld [vmem:[%s285 + $0x188] sm:$0xff]
            %354 = vst [vmem:[%s286 + $0x188] sm:$0xff] %v353
            %v355 = vld [vmem:[%s285 + $0x198] sm:$0xff]
            %356 = vst [vmem:[%s286 + $0x198] sm:$0xff] %v355
            %v357 = vld [vmem:[%s285 + $0x1a0] sm:$0xff]
            %358 = vst [vmem:[%s286 + $0x1a0] sm:$0xff] %v357
          $region48: #{conv_block_forward.4} parent=42 // loop_footer
            %s284 = sadd.s32 1, %s280
          $region49: #{conv_block_forward.4} parent=42 // loop_footer_branch
            %279 = sbr.rel target = $region45
          $region50: #{conv_block_forward.4} parent=42 // loop_exit
            _
          %s359 = sshllo.u32 0, %s274
          loop: start=0, step=1, limit=1
          $region51: #{conv_block_forward.4} parent=42 // loop_pre_header
            _
          $region52: #{conv_block_forward.4} parent=42 // loop_header
            %s361 = sphi 0, %s365
            %p362 = scmp.ge.s32.totalorder %s361, 1
            %s366 = sphi %s276, %s276
            %s367 = sphi %s278, %s278
          $region53: #{conv_block_forward.4} parent=42 // loop_header_branch
            %364 = sbr.rel (%p362) target = $region57
          $region54: #{conv_block_forward.4} parent=42 // loop_body
            %v368 = vld [vmem:[%s366] sm:%s359]
            %369 = vst [vmem:[%s367] sm:%s359] %v368
            %v370 = vld [vmem:[%s366 + $0x18] sm:%s359]
            %371 = vst [vmem:[%s367 + $0x18] sm:%s359] %v370
            %v372 = vld [vmem:[%s366 + $0x30] sm:%s359]
            %373 = vst [vmem:[%s367 + $0x30] sm:%s359] %v372
            %v374 = vld [vmem:[%s366 + $0x48] sm:%s359]
            %375 = vst [vmem:[%s367 + $0x48] sm:%s359] %v374
            %v376 = vld [vmem:[%s366 + $0x60] sm:%s359]
            %377 = vst [vmem:[%s367 + $0x60] sm:%s359] %v376
            %v378 = vld [vmem:[%s366 + $0x78] sm:%s359]
            %379 = vst [vmem:[%s367 + $0x78] sm:%s359] %v378
            %v380 = vld [vmem:[%s366 + $0x90] sm:%s359]
            %381 = vst [vmem:[%s367 + $0x90] sm:%s359] %v380
            %v382 = vld [vmem:[%s366 + $0xa8] sm:%s359]
            %383 = vst [vmem:[%s367 + $0xa8] sm:%s359] %v382
            %v384 = vld [vmem:[%s366 + $0xc0] sm:%s359]
            %385 = vst [vmem:[%s367 + $0xc0] sm:%s359] %v384
            %v386 = vld [vmem:[%s366 + $0xd8] sm:%s359]
            %387 = vst [vmem:[%s367 + $0xd8] sm:%s359] %v386
            %v388 = vld [vmem:[%s366 + $0xf0] sm:%s359]
            %389 = vst [vmem:[%s367 + $0xf0] sm:%s359] %v388
            %v390 = vld [vmem:[%s366 + $0x108] sm:%s359]
            %391 = vst [vmem:[%s367 + $0x108] sm:%s359] %v390
            %v392 = vld [vmem:[%s366 + $0x120] sm:%s359]
            %393 = vst [vmem:[%s367 + $0x120] sm:%s359] %v392
            %v394 = vld [vmem:[%s366 + $0x138] sm:%s359]
            %395 = vst [vmem:[%s367 + $0x138] sm:%s359] %v394
            %v396 = vld [vmem:[%s366 + $0x150] sm:%s359]
            %397 = vst [vmem:[%s367 + $0x150] sm:%s359] %v396
            %v398 = vld [vmem:[%s366 + $0x168] sm:%s359]
            %399 = vst [vmem:[%s367 + $0x168] sm:%s359] %v398
            %v400 = vld [vmem:[%s366 + $0x180] sm:%s359]
            %401 = vst [vmem:[%s367 + $0x180] sm:%s359] %v400
            %v402 = vld [vmem:[%s366 + $0x198] sm:%s359]
            %403 = vst [vmem:[%s367 + $0x198] sm:%s359] %v402
          $region55: #{conv_block_forward.4} parent=42 // loop_footer
            %s365 = sadd.s32 1, %s361
          $region56: #{conv_block_forward.4} parent=42 // loop_footer_branch
            %360 = sbr.rel target = $region52
          $region57: #{conv_block_forward.4} parent=42 // loop_exit
            _
        $region43: #{conv_block_forward.4} parent=27 // pred_fallthru
          _
      $region28: #{conv_block_forward.4} parent=23 // pred_fallthru
        _
      // Predicated region
      $region29: #{conv_block_forward.4} parent=23 // pred_check
        %p221 = pneg %p217
      $region30: #{conv_block_forward.4} parent=23 // pred_check_branch
        %223 = sbr.rel (%p221) target = $region32
      $region31: #{conv_block_forward.4} parent=23 // pred_region
        %s224 = sshllo.u32 0, 18
        loop: start=0, step=1, limit=1
        $region33: #{conv_block_forward.4} parent=31 // loop_pre_header
          _
        $region34: #{conv_block_forward.4} parent=31 // loop_header
          %s226 = sphi 0, %s230
          %p227 = scmp.ge.s32.totalorder %s226, 1
          %s231 = sphi %s215, %s215
          %s232 = sphi [#allocation2], [#allocation2]
        $region35: #{conv_block_forward.4} parent=31 // loop_header_branch
          %229 = sbr.rel (%p227) target = $region39
        $region36: #{conv_block_forward.4} parent=31 // loop_body
          %v233 = vld [vmem:[%s231] sm:%s224]
          %234 = vst [vmem:[%s232] sm:%s224] %v233
          %v235 = vld [vmem:[%s231 + $0x18] sm:%s224]
          %236 = vst [vmem:[%s232 + $0x18] sm:%s224] %v235
          %v237 = vld [vmem:[%s231 + $0x30] sm:%s224]
          %238 = vst [vmem:[%s232 + $0x30] sm:%s224] %v237
          %v239 = vld [vmem:[%s231 + $0x48] sm:%s224]
          %240 = vst [vmem:[%s232 + $0x48] sm:%s224] %v239
          %v241 = vld [vmem:[%s231 + $0x60] sm:%s224]
          %242 = vst [vmem:[%s232 + $0x60] sm:%s224] %v241
          %v243 = vld [vmem:[%s231 + $0x78] sm:%s224]
          %244 = vst [vmem:[%s232 + $0x78] sm:%s224] %v243
          %v245 = vld [vmem:[%s231 + $0x90] sm:%s224]
          %246 = vst [vmem:[%s232 + $0x90] sm:%s224] %v245
          %v247 = vld [vmem:[%s231 + $0xa8] sm:%s224]
          %248 = vst [vmem:[%s232 + $0xa8] sm:%s224] %v247
          %v249 = vld [vmem:[%s231 + $0xc0] sm:%s224]
          %250 = vst [vmem:[%s232 + $0xc0] sm:%s224] %v249
          %v251 = vld [vmem:[%s231 + $0xd8] sm:%s224]
          %252 = vst [vmem:[%s232 + $0xd8] sm:%s224] %v251
          %v253 = vld [vmem:[%s231 + $0xf0] sm:%s224]
          %254 = vst [vmem:[%s232 + $0xf0] sm:%s224] %v253
          %v255 = vld [vmem:[%s231 + $0x108] sm:%s224]
          %256 = vst [vmem:[%s232 + $0x108] sm:%s224] %v255
          %v257 = vld [vmem:[%s231 + $0x120] sm:%s224]
          %258 = vst [vmem:[%s232 + $0x120] sm:%s224] %v257
          %v259 = vld [vmem:[%s231 + $0x138] sm:%s224]
          %260 = vst [vmem:[%s232 + $0x138] sm:%s224] %v259
          %v261 = vld [vmem:[%s231 + $0x150] sm:%s224]
          %262 = vst [vmem:[%s232 + $0x150] sm:%s224] %v261
          %v263 = vld [vmem:[%s231 + $0x168] sm:%s224]
          %264 = vst [vmem:[%s232 + $0x168] sm:%s224] %v263
          %v265 = vld [vmem:[%s231 + $0x180] sm:%s224]
          %266 = vst [vmem:[%s232 + $0x180] sm:%s224] %v265
          %v267 = vld [vmem:[%s231 + $0x198] sm:%s224]
          %268 = vst [vmem:[%s232 + $0x198] sm:%s224] %v267
        $region37: #{conv_block_forward.4} parent=31 // loop_footer
          %s230 = sadd.s32 1, %s226
        $region38: #{conv_block_forward.4} parent=31 // loop_footer_branch
          %225 = sbr.rel target = $region34
        $region39: #{conv_block_forward.4} parent=31 // loop_exit
          _
      $region32: #{conv_block_forward.4} parent=23 // pred_fallthru
        _
      // Predicated region
      $region58: #{conv_block_forward.4} parent=23 // pred_check
        _
      $region59: #{conv_block_forward.4} parent=23 // pred_check_branch
        %406 = sbr.rel (0) target = $region61
      $region60: #{conv_block_forward.4} parent=23 // pred_region
        %407 = vsyncadd [#allocation4], 5184
      $region61: #{conv_block_forward.4} parent=23 // pred_fallthru
        _
      %s408 = smul.u32 18, 18
      %s409 = smul.u32 %s408, 1
      %s410 = sshll.u32 %s409, 4
      %411 = dma.done [#allocation4], %s410
      %412 = vst [vmem:[#allocation3] sm:$0xff] 0.0
      %413 = vst [vmem:[#allocation3 + $0x8] sm:$0xff] 0.0
      %414 = vst [vmem:[#allocation3 + $0x10] sm:$0xff] 0.0
      %415 = vst [vmem:[#allocation3 + $0x18] sm:$0xff] 0.0
      %416 = vst [vmem:[#allocation3 + $0x20] sm:$0xff] 0.0
      %417 = vst [vmem:[#allocation3 + $0x28] sm:$0xff] 0.0
      %418 = vst [vmem:[#allocation3 + $0x30] sm:$0xff] 0.0
      %419 = vst [vmem:[#allocation3 + $0x38] sm:$0xff] 0.0
      %420 = vst [vmem:[#allocation3 + $0x40] sm:$0xff] 0.0
      %421 = vst [vmem:[#allocation3 + $0x48] sm:$0xff] 0.0
      %422 = vst [vmem:[#allocation3 + $0x50] sm:$0xff] 0.0
      %423 = vst [vmem:[#allocation3 + $0x58] sm:$0xff] 0.0
      %424 = vst [vmem:[#allocation3 + $0x60] sm:$0xff] 0.0
      %425 = vst [vmem:[#allocation3 + $0x68] sm:$0xff] 0.0
      %426 = vst [vmem:[#allocation3 + $0x70] sm:$0xff] 0.0
      %427 = vst [vmem:[#allocation3 + $0x78] sm:$0xff] 0.0
      %428 = vst [vmem:[#allocation3 + $0x80] sm:$0xff] 0.0
      %429 = vst [vmem:[#allocation3 + $0x88] sm:$0xff] 0.0
      %430 = vst [vmem:[#allocation3 + $0x90] sm:$0xff] 0.0
      %431 = vst [vmem:[#allocation3 + $0x98] sm:$0xff] 0.0
      %432 = vst [vmem:[#allocation3 + $0xa0] sm:$0xff] 0.0
      %433 = vst [vmem:[#allocation3 + $0xa8] sm:$0xff] 0.0
      %434 = vst [vmem:[#allocation3 + $0xb0] sm:$0xff] 0.0
      %435 = vst [vmem:[#allocation3 + $0xb8] sm:$0xff] 0.0
      %436 = vst [vmem:[#allocation3 + $0xc0] sm:$0xff] 0.0
      %437 = vst [vmem:[#allocation3 + $0xc8] sm:$0xff] 0.0
      %438 = vst [vmem:[#allocation3 + $0xd0] sm:$0xff] 0.0
      %439 = vst [vmem:[#allocation3 + $0xd8] sm:$0xff] 0.0
      %440 = vst [vmem:[#allocation3 + $0xe0] sm:$0xff] 0.0
      %441 = vst [vmem:[#allocation3 + $0xe8] sm:$0xff] 0.0
      %442 = vst [vmem:[#allocation3 + $0xf0] sm:$0xff] 0.0
      %443 = vst [vmem:[#allocation3 + $0xf8] sm:$0xff] 0.0
      %v444 = vld [vmem:[#allocation2] sm:$0xff]
      %v445 = vld [vmem:[#allocation2 + $0x8] sm:$0xff]
      %v446 = vld [vmem:[#allocation2 + $0x18] sm:$0xff]
      %v447 = vld [vmem:[#allocation2 + $0x20] sm:$0xff]
      %v448 = vld [vmem:[#allocation2 + $0x30] sm:$0xff]
      %v449 = vld [vmem:[#allocation2 + $0x38] sm:$0xff]
      %v450 = vld [vmem:[#allocation2 + $0x48] sm:$0xff]
      %v451 = vld [vmem:[#allocation2 + $0x50] sm:$0xff]
      %v452 = vld [vmem:[#allocation2 + $0x60] sm:$0xff]
      %v453 = vld [vmem:[#allocation2 + $0x68] sm:$0xff]
      %v454 = vld [vmem:[#allocation2 + $0x78] sm:$0xff]
      %v455 = vld [vmem:[#allocation2 + $0x80] sm:$0xff]
      %v456 = vld [vmem:[#allocation2 + $0x90] sm:$0xff]
      %v457 = vld [vmem:[#allocation2 + $0x98] sm:$0xff]
      %v458 = vld [vmem:[#allocation2 + $0xa8] sm:$0xff]
      %v459 = vld [vmem:[#allocation2 + $0xb0] sm:$0xff]
      %v460 = vld [vmem:[#allocation2 + $0xc0] sm:$0xff]
      %v461 = vld [vmem:[#allocation2 + $0xc8] sm:$0xff]
      %v462 = vld [vmem:[#allocation2 + $0xd8] sm:$0xff]
      %v463 = vld [vmem:[#allocation2 + $0xe0] sm:$0xff]
      %v464 = vld [vmem:[#allocation2 + $0xf0] sm:$0xff]
      %v465 = vld [vmem:[#allocation2 + $0xf8] sm:$0xff]
      %v466 = vld [vmem:[#allocation2 + $0x108] sm:$0xff]
      %v467 = vld [vmem:[#allocation2 + $0x110] sm:$0xff]
      %v468 = vld [vmem:[#allocation2 + $0x120] sm:$0xff]
      %v469 = vld [vmem:[#allocation2 + $0x128] sm:$0xff]
      %v470 = vld [vmem:[#allocation2 + $0x138] sm:$0xff]
      %v471 = vld [vmem:[#allocation2 + $0x140] sm:$0xff]
      %v472 = vld [vmem:[#allocation2 + $0x150] sm:$0xff]
      %v473 = vld [vmem:[#allocation2 + $0x158] sm:$0xff]
      %v474 = vld [vmem:[#allocation2 + $0x168] sm:$0xff]
      %v475 = vld [vmem:[#allocation2 + $0x170] sm:$0xff]
      %v476 = vpack.c.bf16 %v445, %v444
      %v477 = vpack.c.bf16 %v447, %v446
      %v478 = vpack.c.bf16 %v449, %v448
      %v479 = vpack.c.bf16 %v451, %v450
      %v480 = vpack.c.bf16 %v453, %v452
      %v481 = vpack.c.bf16 %v455, %v454
      %v482 = vpack.c.bf16 %v457, %v456
      %v483 = vpack.c.bf16 %v459, %v458
      %v484 = vpack.c.bf16 %v461, %v460
      %v485 = vpack.c.bf16 %v463, %v462
      %v486 = vpack.c.bf16 %v465, %v464
      %v487 = vpack.c.bf16 %v467, %v466
      %v488 = vpack.c.bf16 %v469, %v468
      %v489 = vpack.c.bf16 %v471, %v470
      %v490 = vpack.c.bf16 %v473, %v472
      %v491 = vpack.c.bf16 %v475, %v474
      %v492 = vld [vmem:[#allocation3] sm:$0xff]
      %v493 = vld [vmem:[#allocation3 + $0x8] sm:$0xff]
      %v494 = vld [vmem:[#allocation3 + $0x10] sm:$0xff]
      %v495 = vld [vmem:[#allocation3 + $0x18] sm:$0xff]
      %v496 = vld [vmem:[#allocation3 + $0x20] sm:$0xff]
      %v497 = vld [vmem:[#allocation3 + $0x28] sm:$0xff]
      %v498 = vld [vmem:[#allocation3 + $0x30] sm:$0xff]
      %v499 = vld [vmem:[#allocation3 + $0x38] sm:$0xff]
      %v500 = vld [vmem:[#allocation3 + $0x40] sm:$0xff]
      %v501 = vld [vmem:[#allocation3 + $0x48] sm:$0xff]
      %v502 = vld [vmem:[#allocation3 + $0x50] sm:$0xff]
      %v503 = vld [vmem:[#allocation3 + $0x58] sm:$0xff]
      %v504 = vld [vmem:[#allocation3 + $0x60] sm:$0xff]
      %v505 = vld [vmem:[#allocation3 + $0x68] sm:$0xff]
      %v506 = vld [vmem:[#allocation3 + $0x70] sm:$0xff]
      %v507 = vld [vmem:[#allocation3 + $0x78] sm:$0xff]
      %v508 = vld [vmem:[#allocation3 + $0x80] sm:$0xff]
      %v509 = vld [vmem:[#allocation3 + $0x88] sm:$0xff]
      %v510 = vld [vmem:[#allocation3 + $0x90] sm:$0xff]
      %v511 = vld [vmem:[#allocation3 + $0x98] sm:$0xff]
      %v512 = vld [vmem:[#allocation3 + $0xa0] sm:$0xff]
      %v513 = vld [vmem:[#allocation3 + $0xa8] sm:$0xff]
      %v514 = vld [vmem:[#allocation3 + $0xb0] sm:$0xff]
      %v515 = vld [vmem:[#allocation3 + $0xb8] sm:$0xff]
      %v516 = vld [vmem:[#allocation3 + $0xc0] sm:$0xff]
      %v517 = vld [vmem:[#allocation3 + $0xc8] sm:$0xff]
      %v518 = vld [vmem:[#allocation3 + $0xd0] sm:$0xff]
      %v519 = vld [vmem:[#allocation3 + $0xd8] sm:$0xff]
      %v520 = vld [vmem:[#allocation3 + $0xe0] sm:$0xff]
      %v521 = vld [vmem:[#allocation3 + $0xe8] sm:$0xff]
      %v522 = vld [vmem:[#allocation3 + $0xf0] sm:$0xff]
      %v523 = vld [vmem:[#allocation3 + $0xf8] sm:$0xff]
      %v524 = vld [vmem:[%s1] sm:$0xf]
      %v525 = vld [vmem:[%s1 + $0x4] sm:$0xf]
      %v526 = vld [vmem:[%s1 + $0x8] sm:$0xf]
      %v527 = vld [vmem:[%s1 + $0xc] sm:$0xf]
      %v528 = vld [vmem:[%s1 + $0x10] sm:$0xf]
      %v529 = vld [vmem:[%s1 + $0x14] sm:$0xf]
      %v530 = vld [vmem:[%s1 + $0x18] sm:$0xf]
      %v531 = vld [vmem:[%s1 + $0x1c] sm:$0xf]
      %v532 = vld [vmem:[%s1 + $0x20] sm:$0xf]
      %v533 = vld [vmem:[%s1 + $0x24] sm:$0xf]
      %v534 = vld [vmem:[%s1 + $0x28] sm:$0xf]
      %v535 = vld [vmem:[%s1 + $0x2c] sm:$0xf]
      %v536 = vld [vmem:[%s1 + $0x30] sm:$0xf]
      %v537 = vld [vmem:[%s1 + $0x34] sm:$0xf]
      %v538 = vld [vmem:[%s1 + $0x38] sm:$0xf]
      %v539 = vld [vmem:[%s1 + $0x3c] sm:$0xf]
      %v556 = vunpack.c.l.b16 %v524
      %v557 = vunpack.c.l.b16 %v525
      %v558 = vunpack.c.l.b16 %v526
      %v559 = vunpack.c.l.b16 %v527
      %v560 = vunpack.c.l.b16 %v528
      %v561 = vunpack.c.l.b16 %v529
      %v562 = vunpack.c.l.b16 %v530
      %v563 = vunpack.c.l.b16 %v531
      %v564 = vunpack.c.l.b16 %v532
      %v565 = vunpack.c.l.b16 %v533
      %v566 = vunpack.c.l.b16 %v534
      %v567 = vunpack.c.l.b16 %v535
      %v568 = vunpack.c.l.b16 %v536
      %v569 = vunpack.c.l.b16 %v537
      %v570 = vunpack.c.l.b16 %v538
      %v571 = vunpack.c.l.b16 %v539
      %v572 = vpack.c.b16 %v557, %v556
      %v573 = vpack.c.b16 %v559, %v558
      %v574 = vpack.c.b16 %v561, %v560
      %v575 = vpack.c.b16 %v563, %v562
      %v576 = vpack.c.b16 %v565, %v564
      %v577 = vpack.c.b16 %v567, %v566
      %v578 = vpack.c.b16 %v569, %v568
      %v579 = vpack.c.b16 %v571, %v570
      %588 = vmatprep.subr.bf16.mxu0 0
      %589 = vmatpush1.bf16.msra.mxu0 %v572
      %590 = vmatprep.subr.bf16.mxu0 0
      %591 = vmatpush1.bf16.msra.mxu0 %v573
      %592 = vmatprep.subr.bf16.mxu0 0
      %593 = vmatpush1.bf16.msra.mxu0 %v574
      %594 = vmatprep.subr.bf16.mxu0 0
      %595 = vmatpush1.bf16.msra.mxu0 %v575
      %596 = vmatprep.subr.bf16.mxu0 0
      %597 = vmatpush1.bf16.msra.mxu0 %v576
      %598 = vmatprep.subr.bf16.mxu0 0
      %599 = vmatpush1.bf16.msra.mxu0 %v577
      %600 = vmatprep.subr.bf16.mxu0 0
      %601 = vmatpush1.bf16.msra.mxu0 %v578
      %602 = vmatprep.subr.bf16.mxu0 0
      %603 = vmatpush1.bf16.msra.mxu0 %v579
      %604 = vmatprep.subr.bf16.mxu0 0
      %605 = vmatpush1.bf16.msra.mxu0 0
      %606 = vmatprep.subr.bf16.mxu0 0
      %607 = vmatpush1.bf16.msra.mxu0 0
      %608 = vmatprep.subr.bf16.mxu0 0
      %609 = vmatpush1.bf16.msra.mxu0 0
      %610 = vmatprep.subr.bf16.mxu0 0
      %611 = vmatpush1.bf16.msra.mxu0 0
      %612 = vmatprep.subr.bf16.mxu0 0
      %613 = vmatpush1.bf16.msra.mxu0 0
      %614 = vmatprep.subr.bf16.mxu0 0
      %615 = vmatpush1.bf16.msra.mxu0 0
      %616 = vmatprep.subr.bf16.mxu0 0
      %617 = vmatpush1.bf16.msra.mxu0 0
      %618 = vmatprep.subr.bf16.mxu0 0
      %619 = vmatpush1.bf16.msra.mxu0 0
      %620 = vmatprep.mubr.bf16.mxu0 0
      %621 = vmatmul.mubr.bf16.gmra.mrb[0].mxu0 %v476
      %v622 = vpop.f32.mrb[0].mxu0
      %v623 = vadd.f32 0.0, %v622
      %v624 = vpop.f32.mrb[0].mxu0
      %v625 = vpop.f32.mrb[0].mxu0
      %v626 = vadd.f32 0.0, %v625
      %v627 = vpop.f32.mrb[0].mxu0
      %628 = vmatprep.mubr.bf16.mxu0 0
      %629 = vmatmul.mubr.bf16.gmra.mrb[0].mxu0 %v477
      %v630 = vpop.f32.mrb[0].mxu0
      %v631 = vadd.f32 0.0, %v630
      %v632 = vpop.f32.mrb[0].mxu0
      %v633 = vpop.f32.mrb[0].mxu0
      %v634 = vadd.f32 0.0, %v633
      %v635 = vpop.f32.mrb[0].mxu0
      %636 = vmatprep.mubr.bf16.mxu0 0
      %637 = vmatmul.mubr.bf16.gmra.mrb[0].mxu0 %v478
      %v638 = vpop.f32.mrb[0].mxu0
      %v639 = vadd.f32 0.0, %v638
      %v640 = vpop.f32.mrb[0].mxu0
      %v641 = vpop.f32.mrb[0].mxu0
      %v642 = vadd.f32 0.0, %v641
      %v643 = vpop.f32.mrb[0].mxu0
      %644 = vmatprep.mubr.bf16.mxu0 0
      %645 = vmatmul.mubr.bf16.gmra.mrb[0].mxu0 %v479
      %v646 = vpop.f32.mrb[0].mxu0
      %v647 = vadd.f32 0.0, %v646
      %v648 = vpop.f32.mrb[0].mxu0
      %v649 = vpop.f32.mrb[0].mxu0
      %v650 = vadd.f32 0.0, %v649
      %v651 = vpop.f32.mrb[0].mxu0
      %652 = vmatprep.mubr.bf16.mxu0 0
      %653 = vmatmul.mubr.bf16.gmra.mrb[0].mxu0 %v480
      %v654 = vpop.f32.mrb[0].mxu0
      %v655 = vadd.f32 0.0, %v654
      %v656 = vpop.f32.mrb[0].mxu0
      %v657 = vpop.f32.mrb[0].mxu0
      %v658 = vadd.f32 0.0, %v657
      %v659 = vpop.f32.mrb[0].mxu0
      %660 = vmatprep.mubr.bf16.mxu0 0
      %661 = vmatmul.mubr.bf16.gmra.mrb[0].mxu0 %v481
      %v662 = vpop.f32.mrb[0].mxu0
      %v663 = vadd.f32 0.0, %v662
      %v664 = vpop.f32.mrb[0].mxu0
      %v665 = vpop.f32.mrb[0].mxu0
      %v666 = vadd.f32 0.0, %v665
      %v667 = vpop.f32.mrb[0].mxu0
      %668 = vmatprep.mubr.bf16.mxu0 0
      %669 = vmatmul.mubr.bf16.gmra.mrb[0].mxu0 %v482
      %v670 = vpop.f32.mrb[0].mxu0
      %v671 = vadd.f32 0.0, %v670
      %v672 = vpop.f32.mrb[0].mxu0
      %v673 = vpop.f32.mrb[0].mxu0
      %v674 = vadd.f32 0.0, %v673
      %v675 = vpop.f32.mrb[0].mxu0
      %676 = vmatprep.mubr.bf16.mxu0 0
      %677 = vmatmul.mubr.bf16.gmra.mrb[0].mxu0 %v483
      %v678 = vpop.f32.mrb[0].mxu0
      %v679 = vadd.f32 0.0, %v678
      %v680 = vpop.f32.mrb[0].mxu0
      %v681 = vpop.f32.mrb[0].mxu0
      %v682 = vadd.f32 0.0, %v681
      %v683 = vpop.f32.mrb[0].mxu0
      %684 = vmatprep.mubr.bf16.mxu0 0
      %685 = vmatmul.mubr.bf16.gmra.mrb[0].mxu0 %v484
      %v686 = vpop.f32.mrb[0].mxu0
      %v687 = vadd.f32 0.0, %v686
      %v688 = vpop.f32.mrb[0].mxu0
      %v689 = vpop.f32.mrb[0].mxu0
      %v690 = vadd.f32 0.0, %v689
      %v691 = vpop.f32.mrb[0].mxu0
      %692 = vmatprep.mubr.bf16.mxu0 0
      %693 = vmatmul.mubr.bf16.gmra.mrb[0].mxu0 %v485
      %v694 = vpop.f32.mrb[0].mxu0
      %v695 = vadd.f32 0.0, %v694
      %v696 = vpop.f32.mrb[0].mxu0
      %v697 = vpop.f32.mrb[0].mxu0
      %v698 = vadd.f32 0.0, %v697
      %v699 = vpop.f32.mrb[0].mxu0
      %700 = vmatprep.mubr.bf16.mxu0 0
      %701 = vmatmul.mubr.bf16.gmra.mrb[0].mxu0 %v486
      %v702 = vpop.f32.mrb[0].mxu0
      %v703 = vadd.f32 0.0, %v702
      %v704 = vpop.f32.mrb[0].mxu0
      %v705 = vpop.f32.mrb[0].mxu0
      %v706 = vadd.f32 0.0, %v705
      %v707 = vpop.f32.mrb[0].mxu0
      %708 = vmatprep.mubr.bf16.mxu0 0
      %709 = vmatmul.mubr.bf16.gmra.mrb[0].mxu0 %v487
      %v710 = vpop.f32.mrb[0].mxu0
      %v711 = vadd.f32 0.0, %v710
      %v712 = vpop.f32.mrb[0].mxu0
      %v713 = vpop.f32.mrb[0].mxu0
      %v714 = vadd.f32 0.0, %v713
      %v715 = vpop.f32.mrb[0].mxu0
      %716 = vmatprep.mubr.bf16.mxu0 0
      %717 = vmatmul.mubr.bf16.gmra.mrb[0].mxu0 %v488
      %v718 = vpop.f32.mrb[0].mxu0
      %v719 = vadd.f32 0.0, %v718
      %v720 = vpop.f32.mrb[0].mxu0
      %v721 = vpop.f32.mrb[0].mxu0
      %v722 = vadd.f32 0.0, %v721
      %v723 = vpop.f32.mrb[0].mxu0
      %724 = vmatprep.mubr.bf16.mxu0 0
      %725 = vmatmul.mubr.bf16.gmra.mrb[0].mxu0 %v489
      %v726 = vpop.f32.mrb[0].mxu0
      %v727 = vadd.f32 0.0, %v726
      %v728 = vpop.f32.mrb[0].mxu0
      %v729 = vpop.f32.mrb[0].mxu0
      %v730 = vadd.f32 0.0, %v729
      %v731 = vpop.f32.mrb[0].mxu0
      %732 = vmatprep.mubr.bf16.mxu0 0
      %733 = vmatmul.mubr.bf16.gmra.mrb[0].mxu0 %v490
      %v734 = vpop.f32.mrb[0].mxu0
      %v735 = vadd.f32 0.0, %v734
      %v736 = vpop.f32.mrb[0].mxu0
      %v737 = vpop.f32.mrb[0].mxu0
      %v738 = vadd.f32 0.0, %v737
      %v739 = vpop.f32.mrb[0].mxu0
      %740 = vmatprep.mubr.bf16.mxu0 0
      %741 = vmatmul.mubr.bf16.gmra.mrb[0].mxu0 %v491
      %v742 = vpop.f32.mrb[0].mxu0
      %v743 = vadd.f32 0.0, %v742
      %v744 = vpop.f32.mrb[0].mxu0
      %v745 = vpop.f32.mrb[0].mxu0
      %v746 = vadd.f32 0.0, %v745
      %v747 = vpop.f32.mrb[0].mxu0
      %748 = vdwg.mxu0
      %v749 = vadd.f32 %v492, %v623
      %v750 = vadd.f32 %v493, %v626
      %v751 = vadd.f32 %v494, %v631
      %v752 = vadd.f32 %v495, %v634
      %v753 = vadd.f32 %v496, %v639
      %v754 = vadd.f32 %v497, %v642
      %v755 = vadd.f32 %v498, %v647
      %v756 = vadd.f32 %v499, %v650
      %v757 = vadd.f32 %v500, %v655
      %v758 = vadd.f32 %v501, %v658
      %v759 = vadd.f32 %v502, %v663
      %v760 = vadd.f32 %v503, %v666
      %v761 = vadd.f32 %v504, %v671
      %v762 = vadd.f32 %v505, %v674
      %v763 = vadd.f32 %v506, %v679
      %v764 = vadd.f32 %v507, %v682
      %v765 = vadd.f32 %v508, %v687
      %v766 = vadd.f32 %v509, %v690
      %v767 = vadd.f32 %v510, %v695
      %v768 = vadd.f32 %v511, %v698
      %v769 = vadd.f32 %v512, %v703
      %v770 = vadd.f32 %v513, %v706
      %v771 = vadd.f32 %v514, %v711
      %v772 = vadd.f32 %v515, %v714
      %v773 = vadd.f32 %v516, %v719
      %v774 = vadd.f32 %v517, %v722
      %v775 = vadd.f32 %v518, %v727
      %v776 = vadd.f32 %v519, %v730
      %v777 = vadd.f32 %v520, %v735
      %v778 = vadd.f32 %v521, %v738
      %v779 = vadd.f32 %v522, %v743
      %v780 = vadd.f32 %v523, %v746
      %781 = vst [vmem:[#allocation3] sm:$0xff] %v749
      %782 = vst [vmem:[#allocation3 + $0x8] sm:$0xff] %v750
      %783 = vst [vmem:[#allocation3 + $0x10] sm:$0xff] %v751
      %784 = vst [vmem:[#allocation3 + $0x18] sm:$0xff] %v752
      %785 = vst [vmem:[#allocation3 + $0x20] sm:$0xff] %v753
      %786 = vst [vmem:[#allocation3 + $0x28] sm:$0xff] %v754
      %787 = vst [vmem:[#allocation3 + $0x30] sm:$0xff] %v755
      %788 = vst [vmem:[#allocation3 + $0x38] sm:$0xff] %v756
      %789 = vst [vmem:[#allocation3 + $0x40] sm:$0xff] %v757
      %790 = vst [vmem:[#allocation3 + $0x48] sm:$0xff] %v758
      %791 = vst [vmem:[#allocation3 + $0x50] sm:$0xff] %v759
      %792 = vst [vmem:[#allocation3 + $0x58] sm:$0xff] %v760
      %793 = vst [vmem:[#allocation3 + $0x60] sm:$0xff] %v761
      %794 = vst [vmem:[#allocation3 + $0x68] sm:$0xff] %v762
      %795 = vst [vmem:[#allocation3 + $0x70] sm:$0xff] %v763
      %796 = vst [vmem:[#allocation3 + $0x78] sm:$0xff] %v764
      %797 = vst [vmem:[#allocation3 + $0x80] sm:$0xff] %v765
      %798 = vst [vmem:[#allocation3 + $0x88] sm:$0xff] %v766
      %799 = vst [vmem:[#allocation3 + $0x90] sm:$0xff] %v767
      %800 = vst [vmem:[#allocation3 + $0x98] sm:$0xff] %v768
      %801 = vst [vmem:[#allocation3 + $0xa0] sm:$0xff] %v769
      %802 = vst [vmem:[#allocation3 + $0xa8] sm:$0xff] %v770
      %803 = vst [vmem:[#allocation3 + $0xb0] sm:$0xff] %v771
      %804 = vst [vmem:[#allocation3 + $0xb8] sm:$0xff] %v772
      %805 = vst [vmem:[#allocation3 + $0xc0] sm:$0xff] %v773
      %806 = vst [vmem:[#allocation3 + $0xc8] sm:$0xff] %v774
      %807 = vst [vmem:[#allocation3 + $0xd0] sm:$0xff] %v775
      %808 = vst [vmem:[#allocation3 + $0xd8] sm:$0xff] %v776
      %809 = vst [vmem:[#allocation3 + $0xe0] sm:$0xff] %v777
      %810 = vst [vmem:[#allocation3 + $0xe8] sm:$0xff] %v778
      %811 = vst [vmem:[#allocation3 + $0xf0] sm:$0xff] %v779
      %812 = vst [vmem:[#allocation3 + $0xf8] sm:$0xff] %v780
      %v813 = vld [vmem:[#allocation2 + $0x1] sm:$0xff]
      %v814 = vld [vmem:[#allocation2 + $0x9] sm:$0xff]
      %v815 = vld [vmem:[#allocation2 + $0x19] sm:$0xff]
      %v816 = vld [vmem:[#allocation2 + $0x21] sm:$0xff]
      %v817 = vld [vmem:[#allocation2 + $0x31] sm:$0xff]
      %v818 = vld [vmem:[#allocation2 + $0x39] sm:$0xff]
      %v819 = vld [vmem:[#allocation2 + $0x49] sm:$0xff]
      %v820 = vld [vmem:[#allocation2 + $0x51] sm:$0xff]
      %v821 = vld [vmem:[#allocation2 + $0x61] sm:$0xff]
      %v822 = vld [vmem:[#allocation2 + $0x69] sm:$0xff]
      %v823 = vld [vmem:[#allocation2 + $0x79] sm:$0xff]
      %v824 = vld [vmem:[#allocation2 + $0x81] sm:$0xff]
      %v825 = vld [vmem:[#allocation2 + $0x91] sm:$0xff]
      %v826 = vld [vmem:[#allocation2 + $0x99] sm:$0xff]
      %v827 = vld [vmem:[#allocation2 + $0xa9] sm:$0xff]
      %v828 = vld [vmem:[#allocation2 + $0xb1] sm:$0xff]
      %v829 = vld [vmem:[#allocation2 + $0xc1] sm:$0xff]
      %v830 = vld [vmem:[#allocation2 + $0xc9] sm:$0xff]
      %v831 = vld [vmem:[#allocation2 + $0xd9] sm:$0xff]
      %v832 = vld [vmem:[#allocation2 + $0xe1] sm:$0xff]
      %v833 = vld [vmem:[#allocation2 + $0xf1] sm:$0xff]
      %v834 = vld [vmem:[#allocation2 + $0xf9] sm:$0xff]
      %v835 = vld [vmem:[#allocation2 + $0x109] sm:$0xff]
      %v836 = vld [vmem:[#allocation2 + $0x111] sm:$0xff]
      %v837 = vld [vmem:[#allocation2 + $0x121] sm:$0xff]
      %v838 = vld [vmem:[#allocation2 + $0x129] sm:$0xff]
      %v839 = vld [vmem:[#allocation2 + $0x139] sm:$0xff]
      %v840 = vld [vmem:[#allocation2 + $0x141] sm:$0xff]
      %v841 = vld [vmem:[#allocation2 + $0x151] sm:$0xff]
      %v842 = vld [vmem:[#allocation2 + $0x159] sm:$0xff]
      %v843 = vld [vmem:[#allocation2 + $0x169] sm:$0xff]
      %v844 = vld [vmem:[#allocation2 + $0x171] sm:$0xff]
      %v845 = vpack.c.bf16 %v814, %v813
      %v846 = vpack.c.bf16 %v816, %v815
      %v847 = vpack.c.bf16 %v818, %v817
      %v848 = vpack.c.bf16 %v820, %v819
      %v849 = vpack.c.bf16 %v822, %v821
      %v850 = vpack.c.bf16 %v824, %v823
      %v851 = vpack.c.bf16 %v826, %v825
      %v852 = vpack.c.bf16 %v828, %v827
      %v853 = vpack.c.bf16 %v830, %v829
      %v854 = vpack.c.bf16 %v832, %v831
      %v855 = vpack.c.bf16 %v834, %v833
      %v856 = vpack.c.bf16 %v836, %v835
      %v857 = vpack.c.bf16 %v838, %v837
      %v858 = vpack.c.bf16 %v840, %v839
      %v859 = vpack.c.bf16 %v842, %v841
      %v860 = vpack.c.bf16 %v844, %v843
      %v861 = vld [vmem:[#allocation3] sm:$0xff]
      %v862 = vld [vmem:[#allocation3 + $0x8] sm:$0xff]
      %v863 = vld [vmem:[#allocation3 + $0x10] sm:$0xff]
      %v864 = vld [vmem:[#allocation3 + $0x18] sm:$0xff]
      %v865 = vld [vmem:[#allocation3 + $0x20] sm:$0xff]
      %v866 = vld [vmem:[#allocation3 + $0x28] sm:$0xff]
      %v867 = vld [vmem:[#allocation3 + $0x30] sm:$0xff]
      %v868 = vld [vmem:[#allocation3 + $0x38] sm:$0xff]
      %v869 = vld [vmem:[#allocation3 + $0x40] sm:$0xff]
      %v870 = vld [vmem:[#allocation3 + $0x48] sm:$0xff]
      %v871 = vld [vmem:[#allocation3 + $0x50] sm:$0xff]
      %v872 = vld [vmem:[#allocation3 + $0x58] sm:$0xff]
      %v873 = vld [vmem:[#allocation3 + $0x60] sm:$0xff]
      %v874 = vld [vmem:[#allocation3 + $0x68] sm:$0xff]
      %v875 = vld [vmem:[#allocation3 + $0x70] sm:$0xff]
      %v876 = vld [vmem:[#allocation3 + $0x78] sm:$0xff]
      %v877 = vld [vmem:[#allocation3 + $0x80] sm:$0xff]
      %v878 = vld [vmem:[#allocation3 + $0x88] sm:$0xff]
      %v879 = vld [vmem:[#allocation3 + $0x90] sm:$0xff]
      %v880 = vld [vmem:[#allocation3 + $0x98] sm:$0xff]
      %v881 = vld [vmem:[#allocation3 + $0xa0] sm:$0xff]
      %v882 = vld [vmem:[#allocation3 + $0xa8] sm:$0xff]
      %v883 = vld [vmem:[#allocation3 + $0xb0] sm:$0xff]
      %v884 = vld [vmem:[#allocation3 + $0xb8] sm:$0xff]
      %v885 = vld [vmem:[#allocation3 + $0xc0] sm:$0xff]
      %v886 = vld [vmem:[#allocation3 + $0xc8] sm:$0xff]
      %v887 = vld [vmem:[#allocation3 + $0xd0] sm:$0xff]
      %v888 = vld [vmem:[#allocation3 + $0xd8] sm:$0xff]
      %v889 = vld [vmem:[#allocation3 + $0xe0] sm:$0xff]
      %v890 = vld [vmem:[#allocation3 + $0xe8] sm:$0xff]
      %v891 = vld [vmem:[#allocation3 + $0xf0] sm:$0xff]
      %v892 = vld [vmem:[#allocation3 + $0xf8] sm:$0xff]
      %s893 = scalar_lea.vmem %s1, 64
      %v894 = vld [vmem:[%s893] sm:$0xf]
      %v895 = vld [vmem:[%s893 + $0x4] sm:$0xf]
      %v896 = vld [vmem:[%s893 + $0x8] sm:$0xf]
      %v897 = vld [vmem:[%s893 + $0xc] sm:$0xf]
      %v898 = vld [vmem:[%s893 + $0x10] sm:$0xf]
      %v899 = vld [vmem:[%s893 + $0x14] sm:$0xf]
      %v900 = vld [vmem:[%s893 + $0x18] sm:$0xf]
      %v901 = vld [vmem:[%s893 + $0x1c] sm:$0xf]
      %v902 = vld [vmem:[%s893 + $0x20] sm:$0xf]
      %v903 = vld [vmem:[%s893 + $0x24] sm:$0xf]
      %v904 = vld [vmem:[%s893 + $0x28] sm:$0xf]
      %v905 = vld [vmem:[%s893 + $0x2c] sm:$0xf]
      %v906 = vld [vmem:[%s893 + $0x30] sm:$0xf]
      %v907 = vld [vmem:[%s893 + $0x34] sm:$0xf]
      %v908 = vld [vmem:[%s893 + $0x38] sm:$0xf]
      %v909 = vld [vmem:[%s893 + $0x3c] sm:$0xf]
      %v926 = vunpack.c.l.b16 %v894
      %v927 = vunpack.c.l.b16 %v895
      %v928 = vunpack.c.l.b16 %v896
      %v929 = vunpack.c.l.b16 %v897
      %v930 = vunpack.c.l.b16 %v898
      %v931 = vunpack.c.l.b16 %v899
      %v932 = vunpack.c.l.b16 %v900
      %v933 = vunpack.c.l.b16 %v901
      %v934 = vunpack.c.l.b16 %v902
      %v935 = vunpack.c.l.b16 %v903
      %v936 = vunpack.c.l.b16 %v904
      %v937 = vunpack.c.l.b16 %v905
      %v938 = vunpack.c.l.b16 %v906
      %v939 = vunpack.c.l.b16 %v907
      %v940 = vunpack.c.l.b16 %v908
      %v941 = vunpack.c.l.b16 %v909
      %v942 = vpack.c.b16 %v927, %v926
      %v943 = vpack.c.b16 %v929, %v928
      %v944 = vpack.c.b16 %v931, %v930
      %v945 = vpack.c.b16 %v933, %v932
      %v946 = vpack.c.b16 %v935, %v934
      %v947 = vpack.c.b16 %v937, %v936
      %v948 = vpack.c.b16 %v939, %v938
      %v949 = vpack.c.b16 %v941, %v940
      %958 = vmatprep.subr.bf16.mxu0 0
      %959 = vmatpush1.bf16.msra.mxu0 %v942
      %960 = vmatprep.subr.bf16.mxu0 0
      %961 = vmatpush1.bf16.msra.mxu0 %v943
      %962 = vmatprep.subr.bf16.mxu0 0
      %963 = vmatpush1.bf16.msra.mxu0 %v944
      %964 = vmatprep.subr.bf16.mxu0 0
      %965 = vmatpush1.bf16.msra.mxu0 %v945
      %966 = vmatprep.subr.bf16.mxu0 0
      %967 = vmatpush1.bf16.msra.mxu0 %v946
      %968 = vmatprep.subr.bf16.mxu0 0
      %969 = vmatpush1.bf16.msra.mxu0 %v947
      %970 = vmatprep.subr.bf16.mxu0 0
      %971 = vmatpush1.bf16.msra.mxu0 %v948
      %972 = vmatprep.subr.bf16.mxu0 0
      %973 = vmatpush1.bf16.msra.mxu0 %v949
      %974 = vmatprep.subr.bf16.mxu0 0
      %975 = vmatpush1.bf16.msra.mxu0 0
      %976 = vmatprep.subr.bf16.mxu0 0
      %977 = vmatpush1.bf16.msra.mxu0 0
      %978 = vmatprep.subr.bf16.mxu0 0
      %979 = vmatpush1.bf16.msra.mxu0 0
      %980 = vmatprep.subr.bf16.mxu0 0
      %981 = vmatpush1.bf16.msra.mxu0 0
      %982 = vmatprep.subr.bf16.mxu0 0
      %983 = vmatpush1.bf16.msra.mxu0 0
      %984 = vmatprep.subr.bf16.mxu0 0
      %985 = vmatpush1.bf16.msra.mxu0 0
      %986 = vmatprep.subr.bf16.mxu0 0
      %987 = vmatpush1.bf16.msra.mxu0 0
      %988 = vmatprep.subr.bf16.mxu0 0
      %989 = vmatpush1.bf16.msra.mxu0 0
      %990 = vmatprep.mubr.bf16.mxu0 0
      %991 = vmatmul.mubr.bf16.gmra.mrb[0].mxu0 %v845
      %v992 = vpop.f32.mrb[0].mxu0
      %v993 = vadd.f32 0.0, %v992
      %v994 = vpop.f32.mrb[0].mxu0
      %v995 = vpop.f32.mrb[0].mxu0
      %v996 = vadd.f32 0.0, %v995
      %v997 = vpop.f32.mrb[0].mxu0
      %998 = vmatprep.mubr.bf16.mxu0 0
      %999 = vmatmul.mubr.bf16.gmra.mrb[0].mxu0 %v846
      %v1000 = vpop.f32.mrb[0].mxu0
      %v1001 = vadd.f32 0.0, %v1000
      %v1002 = vpop.f32.mrb[0].mxu0
      %v1003 = vpop.f32.mrb[0].mxu0
      %v1004 = vadd.f32 0.0, %v1003
      %v1005 = vpop.f32.mrb[0].mxu0
      %1006 = vmatprep.mubr.bf16.mxu0 0
      %1007 = vmatmul.mubr.bf16.gmra.mrb[0].mxu0 %v847
      %v1008 = vpop.f32.mrb[0].mxu0
      %v1009 = vadd.f32 0.0, %v1008
      %v1010 = vpop.f32.mrb[0].mxu0
      %v1011 = vpop.f32.mrb[0].mxu0
      %v1012 = vadd.f32 0.0, %v1011
      %v1013 = vpop.f32.mrb[0].mxu0
      %1014 = vmatprep.mubr.bf16.mxu0 0
      %1015 = vmatmul.mubr.bf16.gmra.mrb[0].mxu0 %v848
      %v1016 = vpop.f32.mrb[0].mxu0
      %v1017 = vadd.f32 0.0, %v1016
      %v1018 = vpop.f32.mrb[0].mxu0
      %v1019 = vpop.f32.mrb[0].mxu0
      %v1020 = vadd.f32 0.0, %v1019
      %v1021 = vpop.f32.mrb[0].mxu0
      %1022 = vmatprep.mubr.bf16.mxu0 0
      %1023 = vmatmul.mubr.bf16.gmra.mrb[0].mxu0 %v849
      %v1024 = vpop.f32.mrb[0].mxu0
      %v1025 = vadd.f32 0.0, %v1024
      %v1026 = vpop.f32.mrb[0].mxu0
      %v1027 = vpop.f32.mrb[0].mxu0
      %v1028 = vadd.f32 0.0, %v1027
      %v1029 = vpop.f32.mrb[0].mxu0
      %1030 = vmatprep.mubr.bf16.mxu0 0
      %1031 = vmatmul.mubr.bf16.gmra.mrb[0].mxu0 %v850
      %v1032 = vpop.f32.mrb[0].mxu0
      %v1033 = vadd.f32 0.0, %v1032
      %v1034 = vpop.f32.mrb[0].mxu0
      %v1035 = vpop.f32.mrb[0].mxu0
      %v1036 = vadd.f32 0.0, %v1035
      %v1037 = vpop.f32.mrb[0].mxu0
      %1038 = vmatprep.mubr.bf16.mxu0 0
      %1039 = vmatmul.mubr.bf16.gmra.mrb[0].mxu0 %v851
      %v1040 = vpop.f32.mrb[0].mxu0
      %v1041 = vadd.f32 0.0, %v1040
      %v1042 = vpop.f32.mrb[0].mxu0
      %v1043 = vpop.f32.mrb[0].mxu0
      %v1044 = vadd.f32 0.0, %v1043
      %v1045 = vpop.f32.mrb[0].mxu0
      %1046 = vmatprep.mubr.bf16.mxu0 0
      %1047 = vmatmul.mubr.bf16.gmra.mrb[0].mxu0 %v852
      %v1048 = vpop.f32.mrb[0].mxu0
      %v1049 = vadd.f32 0.0, %v1048
      %v1050 = vpop.f32.mrb[0].mxu0
      %v1051 = vpop.f32.mrb[0].mxu0
      %v1052 = vadd.f32 0.0, %v1051
      %v1053 = vpop.f32.mrb[0].mxu0
      %1054 = vmatprep.mubr.bf16.mxu0 0
      %1055 = vmatmul.mubr.bf16.gmra.mrb[0].mxu0 %v853
      %v1056 = vpop.f32.mrb[0].mxu0
      %v1057 = vadd.f32 0.0, %v1056
      %v1058 = vpop.f32.mrb[0].mxu0
      %v1059 = vpop.f32.mrb[0].mxu0
      %v1060 = vadd.f32 0.0, %v1059
      %v1061 = vpop.f32.mrb[0].mxu0
      %1062 = vmatprep.mubr.bf16.mxu0 0
      %1063 = vmatmul.mubr.bf16.gmra.mrb[0].mxu0 %v854
      %v1064 = vpop.f32.mrb[0].mxu0
      %v1065 = vadd.f32 0.0, %v1064
      %v1066 = vpop.f32.mrb[0].mxu0
      %v1067 = vpop.f32.mrb[0].mxu0
      %v1068 = vadd.f32 0.0, %v1067
      %v1069 = vpop.f32.mrb[0].mxu0
      %1070 = vmatprep.mubr.bf16.mxu0 0
      %1071 = vmatmul.mubr.bf16.gmra.mrb[0].mxu0 %v855
      %v1072 = vpop.f32.mrb[0].mxu0
      %v1073 = vadd.f32 0.0, %v1072
      %v1074 = vpop.f32.mrb[0].mxu0
      %v1075 = vpop.f32.mrb[0].mxu0
      %v1076 = vadd.f32 0.0, %v1075
      %v1077 = vpop.f32.mrb[0].mxu0
      %1078 = vmatprep.mubr.bf16.mxu0 0
      %1079 = vmatmul.mubr.bf16.gmra.mrb[0].mxu0 %v856
      %v1080 = vpop.f32.mrb[0].mxu0
      %v1081 = vadd.f32 0.0, %v1080
      %v1082 = vpop.f32.mrb[0].mxu0
      %v1083 = vpop.f32.mrb[0].mxu0
      %v1084 = vadd.f32 0.0, %v1083
      %v1085 = vpop.f32.mrb[0].mxu0
      %1086 = vmatprep.mubr.bf16.mxu0 0
      %1087 = vmatmul.mubr.bf16.gmra.mrb[0].mxu0 %v857
      %v1088 = vpop.f32.mrb[0].mxu0
      %v1089 = vadd.f32 0.0, %v1088
      %v1090 = vpop.f32.mrb[0].mxu0
      %v1091 = vpop.f32.mrb[0].mxu0
      %v1092 = vadd.f32 0.0, %v1091
      %v1093 = vpop.f32.mrb[0].mxu0
      %1094 = vmatprep.mubr.bf16.mxu0 0
      %1095 = vmatmul.mubr.bf16.gmra.mrb[0].mxu0 %v858
      %v1096 = vpop.f32.mrb[0].mxu0
      %v1097 = vadd.f32 0.0, %v1096
      %v1098 = vpop.f32.mrb[0].mxu0
      %v1099 = vpop.f32.mrb[0].mxu0
      %v1100 = vadd.f32 0.0, %v1099
      %v1101 = vpop.f32.mrb[0].mxu0
      %1102 = vmatprep.mubr.bf16.mxu0 0
      %1103 = vmatmul.mubr.bf16.gmra.mrb[0].mxu0 %v859
      %v1104 = vpop.f32.mrb[0].mxu0
      %v1105 = vadd.f32 0.0, %v1104
      %v1106 = vpop.f32.mrb[0].mxu0
      %v1107 = vpop.f32.mrb[0].mxu0
      %v1108 = vadd.f32 0.0, %v1107
      %v1109 = vpop.f32.mrb[0].mxu0
      %1110 = vmatprep.mubr.bf16.mxu0 0
      %1111 = vmatmul.mubr.bf16.gmra.mrb[0].mxu0 %v860
      %v1112 = vpop.f32.mrb[0].mxu0
      %v1113 = vadd.f32 0.0, %v1112
      %v1114 = vpop.f32.mrb[0].mxu0
      %v1115 = vpop.f32.mrb[0].mxu0
      %v1116 = vadd.f32 0.0, %v1115
      %v1117 = vpop.f32.mrb[0].mxu0
      %1118 = vdwg.mxu0
      %v1119 = vadd.f32 %v861, %v993
      %v1120 = vadd.f32 %v862, %v996
      %v1121 = vadd.f32 %v863, %v1001
      %v1122 = vadd.f32 %v864, %v1004
      %v1123 = vadd.f32 %v865, %v1009
      %v1124 = vadd.f32 %v866, %v1012
      %v1125 = vadd.f32 %v867, %v1017
      %v1126 = vadd.f32 %v868, %v1020
      %v1127 = vadd.f32 %v869, %v1025
      %v1128 = vadd.f32 %v870, %v1028
      %v1129 = vadd.f32 %v871, %v1033
      %v1130 = vadd.f32 %v872, %v1036
      %v1131 = vadd.f32 %v873, %v1041
      %v1132 = vadd.f32 %v874, %v1044
      %v1133 = vadd.f32 %v875, %v1049
      %v1134 = vadd.f32 %v876, %v1052
      %v1135 = vadd.f32 %v877, %v1057
      %v1136 = vadd.f32 %v878, %v1060
      %v1137 = vadd.f32 %v879, %v1065
      %v1138 = vadd.f32 %v880, %v1068
      %v1139 = vadd.f32 %v881, %v1073
      %v1140 = vadd.f32 %v882, %v1076
      %v1141 = vadd.f32 %v883, %v1081
      %v1142 = vadd.f32 %v884, %v1084
      %v1143 = vadd.f32 %v885, %v1089
      %v1144 = vadd.f32 %v886, %v1092
      %v1145 = vadd.f32 %v887, %v1097
      %v1146 = vadd.f32 %v888, %v1100
      %v1147 = vadd.f32 %v889, %v1105
      %v1148 = vadd.f32 %v890, %v1108
      %v1149 = vadd.f32 %v891, %v1113
      %v1150 = vadd.f32 %v892, %v1116
      %1151 = vst [vmem:[#allocation3] sm:$0xff] %v1119
      %1152 = vst [vmem:[#allocation3 + $0x8] sm:$0xff] %v1120
      %1153 = vst [vmem:[#allocation3 + $0x10] sm:$0xff] %v1121
      %1154 = vst [vmem:[#allocation3 + $0x18] sm:$0xff] %v1122
      %1155 = vst [vmem:[#allocation3 + $0x20] sm:$0xff] %v1123
      %1156 = vst [vmem:[#allocation3 + $0x28] sm:$0xff] %v1124
      %1157 = vst [vmem:[#allocation3 + $0x30] sm:$0xff] %v1125
      %1158 = vst [vmem:[#allocation3 + $0x38] sm:$0xff] %v1126
      %1159 = vst [vmem:[#allocation3 + $0x40] sm:$0xff] %v1127
      %1160 = vst [vmem:[#allocation3 + $0x48] sm:$0xff] %v1128
      %1161 = vst [vmem:[#allocation3 + $0x50] sm:$0xff] %v1129
      %1162 = vst [vmem:[#allocation3 + $0x58] sm:$0xff] %v1130
      %1163 = vst [vmem:[#allocation3 + $0x60] sm:$0xff] %v1131
      %1164 = vst [vmem:[#allocation3 + $0x68] sm:$0xff] %v1132
      %1165 = vst [vmem:[#allocation3 + $0x70] sm:$0xff] %v1133
      %1166 = vst [vmem:[#allocation3 + $0x78] sm:$0xff] %v1134
      %1167 = vst [vmem:[#allocation3 + $0x80] sm:$0xff] %v1135
      %1168 = vst [vmem:[#allocation3 + $0x88] sm:$0xff] %v1136
      %1169 = vst [vmem:[#allocation3 + $0x90] sm:$0xff] %v1137
      %1170 = vst [vmem:[#allocation3 + $0x98] sm:$0xff] %v1138
      %1171 = vst [vmem:[#allocation3 + $0xa0] sm:$0xff] %v1139
      %1172 = vst [vmem:[#allocation3 + $0xa8] sm:$0xff] %v1140
      %1173 = vst [vmem:[#allocation3 + $0xb0] sm:$0xff] %v1141
      %1174 = vst [vmem:[#allocation3 + $0xb8] sm:$0xff] %v1142
      %1175 = vst [vmem:[#allocation3 + $0xc0] sm:$0xff] %v1143
      %1176 = vst [vmem:[#allocation3 + $0xc8] sm:$0xff] %v1144
      %1177 = vst [vmem:[#allocation3 + $0xd0] sm:$0xff] %v1145
      %1178 = vst [vmem:[#allocation3 + $0xd8] sm:$0xff] %v1146
      %1179 = vst [vmem:[#allocation3 + $0xe0] sm:$0xff] %v1147
      %1180 = vst [vmem:[#allocation3 + $0xe8] sm:$0xff] %v1148
      %1181 = vst [vmem:[#allocation3 + $0xf0] sm:$0xff] %v1149
      %1182 = vst [vmem:[#allocation3 + $0xf8] sm:$0xff] %v1150
      %v1183 = vld [vmem:[#allocation2 + $0x2] sm:$0xff]
      %v1184 = vld [vmem:[#allocation2 + $0xa] sm:$0xff]
      %v1185 = vld [vmem:[#allocation2 + $0x1a] sm:$0xff]
      %v1186 = vld [vmem:[#allocation2 + $0x22] sm:$0xff]
      %v1187 = vld [vmem:[#allocation2 + $0x32] sm:$0xff]
      %v1188 = vld [vmem:[#allocation2 + $0x3a] sm:$0xff]
      %v1189 = vld [vmem:[#allocation2 + $0x4a] sm:$0xff]
      %v1190 = vld [vmem:[#allocation2 + $0x52] sm:$0xff]
      %v1191 = vld [vmem:[#allocation2 + $0x62] sm:$0xff]
      %v1192 = vld [vmem:[#allocation2 + $0x6a] sm:$0xff]
      %v1193 = vld [vmem:[#allocation2 + $0x7a] sm:$0xff]
      %v1194 = vld [vmem:[#allocation2 + $0x82] sm:$0xff]
      %v1195 = vld [vmem:[#allocation2 + $0x92] sm:$0xff]
      %v1196 = vld [vmem:[#allocation2 + $0x9a] sm:$0xff]
      %v1197 = vld [vmem:[#allocation2 + $0xaa] sm:$0xff]
      %v1198 = vld [vmem:[#allocation2 + $0xb2] sm:$0xff]
      %v1199 = vld [vmem:[#allocation2 + $0xc2] sm:$0xff]
      %v1200 = vld [vmem:[#allocation2 + $0xca] sm:$0xff]
      %v1201 = vld [vmem:[#allocation2 + $0xda] sm:$0xff]
      %v1202 = vld [vmem:[#allocation2 + $0xe2] sm:$0xff]
      %v1203 = vld [vmem:[#allocation2 + $0xf2] sm:$0xff]
      %v1204 = vld [vmem:[#allocation2 + $0xfa] sm:$0xff]
      %v1205 = vld [vmem:[#allocation2 + $0x10a] sm:$0xff]
      %v1206 = vld [vmem:[#allocation2 + $0x112] sm:$0xff]
      %v1207 = vld [vmem:[#allocation2 + $0x122] sm:$0xff]
      %v1208 = vld [vmem:[#allocation2 + $0x12a] sm:$0xff]
      %v1209 = vld [vmem:[#allocation2 + $0x13a] sm:$0xff]
      %v1210 = vld [vmem:[#allocation2 + $0x142] sm:$0xff]
      %v1211 = vld [vmem:[#allocation2 + $0x152] sm:$0xff]
      %v1212 = vld [vmem:[#allocation2 + $0x15a] sm:$0xff]
      %v1213 = vld [vmem:[#allocation2 + $0x16a] sm:$0xff]
      %v1214 = vld [vmem:[#allocation2 + $0x172] sm:$0xff]
      %v1215 = vpack.c.bf16 %v1184, %v1183
      %v1216 = vpack.c.bf16 %v1186, %v1185
      %v1217 = vpack.c.bf16 %v1188, %v1187
      %v1218 = vpack.c.bf16 %v1190, %v1189
      %v1219 = vpack.c.bf16 %v1192, %v1191
      %v1220 = vpack.c.bf16 %v1194, %v1193
      %v1221 = vpack.c.bf16 %v1196, %v1195
      %v1222 = vpack.c.bf16 %v1198, %v1197
      %v1223 = vpack.c.bf16 %v1200, %v1199
      %v1224 = vpack.c.bf16 %v1202, %v1201
      %v1225 = vpack.c.bf16 %v1204, %v1203
      %v1226 = vpack.c.bf16 %v1206, %v1205
      %v1227 = vpack.c.bf16 %v1208, %v1207
      %v1228 = vpack.c.bf16 %v1210, %v1209
      %v1229 = vpack.c.bf16 %v1212, %v1211
      %v1230 = vpack.c.bf16 %v1214, %v1213
      %v1231 = vld [vmem:[#allocation3] sm:$0xff]
      %v1232 = vld [vmem:[#allocation3 + $0x8] sm:$0xff]
      %v1233 = vld [vmem:[#allocation3 + $0x10] sm:$0xff]
      %v1234 = vld [vmem:[#allocation3 + $0x18] sm:$0xff]
      %v1235 = vld [vmem:[#allocation3 + $0x20] sm:$0xff]
      %v1236 = vld [vmem:[#allocation3 + $0x28] sm:$0xff]
      %v1237 = vld [vmem:[#allocation3 + $0x30] sm:$0xff]
      %v1238 = vld [vmem:[#allocation3 + $0x38] sm:$0xff]
      %v1239 = vld [vmem:[#allocation3 + $0x40] sm:$0xff]
      %v1240 = vld [vmem:[#allocation3 + $0x48] sm:$0xff]
      %v1241 = vld [vmem:[#allocation3 + $0x50] sm:$0xff]
      %v1242 = vld [vmem:[#allocation3 + $0x58] sm:$0xff]
      %v1243 = vld [vmem:[#allocation3 + $0x60] sm:$0xff]
      %v1244 = vld [vmem:[#allocation3 + $0x68] sm:$0xff]
      %v1245 = vld [vmem:[#allocation3 + $0x70] sm:$0xff]
      %v1246 = vld [vmem:[#allocation3 + $0x78] sm:$0xff]
      %v1247 = vld [vmem:[#allocation3 + $0x80] sm:$0xff]
      %v1248 = vld [vmem:[#allocation3 + $0x88] sm:$0xff]
      %v1249 = vld [vmem:[#allocation3 + $0x90] sm:$0xff]
      %v1250 = vld [vmem:[#allocation3 + $0x98] sm:$0xff]
      %v1251 = vld [vmem:[#allocation3 + $0xa0] sm:$0xff]
      %v1252 = vld [vmem:[#allocation3 + $0xa8] sm:$0xff]
      %v1253 = vld [vmem:[#allocation3 + $0xb0] sm:$0xff]
      %v1254 = vld [vmem:[#allocation3 + $0xb8] sm:$0xff]
      %v1255 = vld [vmem:[#allocation3 + $0xc0] sm:$0xff]
      %v1256 = vld [vmem:[#allocation3 + $0xc8] sm:$0xff]
      %v1257 = vld [vmem:[#allocation3 + $0xd0] sm:$0xff]
      %v1258 = vld [vmem:[#allocation3 + $0xd8] sm:$0xff]
      %v1259 = vld [vmem:[#allocation3 + $0xe0] sm:$0xff]
      %v1260 = vld [vmem:[#allocation3 + $0xe8] sm:$0xff]
      %v1261 = vld [vmem:[#allocation3 + $0xf0] sm:$0xff]
      %v1262 = vld [vmem:[#allocation3 + $0xf8] sm:$0xff]
      %s1263 = scalar_lea.vmem %s1, 128
      %v1264 = vld [vmem:[%s1263] sm:$0xf]
      %v1265 = vld [vmem:[%s1263 + $0x4] sm:$0xf]
      %v1266 = vld [vmem:[%s1263 + $0x8] sm:$0xf]
      %v1267 = vld [vmem:[%s1263 + $0xc] sm:$0xf]
      %v1268 = vld [vmem:[%s1263 + $0x10] sm:$0xf]
      %v1269 = vld [vmem:[%s1263 + $0x14] sm:$0xf]
      %v1270 = vld [vmem:[%s1263 + $0x18] sm:$0xf]
      %v1271 = vld [vmem:[%s1263 + $0x1c] sm:$0xf]
      %v1272 = vld [vmem:[%s1263 + $0x20] sm:$0xf]
      %v1273 = vld [vmem:[%s1263 + $0x24] sm:$0xf]
      %v1274 = vld [vmem:[%s1263 + $0x28] sm:$0xf]
      %v1275 = vld [vmem:[%s1263 + $0x2c] sm:$0xf]
      %v1276 = vld [vmem:[%s1263 + $0x30] sm:$0xf]
      %v1277 = vld [vmem:[%s1263 + $0x34] sm:$0xf]
      %v1278 = vld [vmem:[%s1263 + $0x38] sm:$0xf]
      %v1279 = vld [vmem:[%s1263 + $0x3c] sm:$0xf]
      %v1296 = vunpack.c.l.b16 %v1264
      %v1297 = vunpack.c.l.b16 %v1265
      %v1298 = vunpack.c.l.b16 %v1266
      %v1299 = vunpack.c.l.b16 %v1267
      %v1300 = vunpack.c.l.b16 %v1268
      %v1301 = vunpack.c.l.b16 %v1269
      %v1302 = vunpack.c.l.b16 %v1270
      %v1303 = vunpack.c.l.b16 %v1271
      %v1304 = vunpack.c.l.b16 %v1272
      %v1305 = vunpack.c.l.b16 %v1273
      %v1306 = vunpack.c.l.b16 %v1274
      %v1307 = vunpack.c.l.b16 %v1275
      %v1308 = vunpack.c.l.b16 %v1276
      %v1309 = vunpack.c.l.b16 %v1277
      %v1310 = vunpack.c.l.b16 %v1278
      %v1311 = vunpack.c.l.b16 %v1279
      %v1312 = vpack.c.b16 %v1297, %v1296
      %v1313 = vpack.c.b16 %v1299, %v1298
      %v1314 = vpack.c.b16 %v1301, %v1300
      %v1315 = vpack.c.b16 %v1303, %v1302
      %v1316 = vpack.c.b16 %v1305, %v1304
      %v1317 = vpack.c.b16 %v1307, %v1306
      %v1318 = vpack.c.b16 %v1309, %v1308
      %v1319 = vpack.c.b16 %v1311, %v1310
      %1328 = vmatprep.subr.bf16.mxu0 0
      %1329 = vmatpush1.bf16.msra.mxu0 %v1312
      %1330 = vmatprep.subr.bf16.mxu0 0
      %1331 = vmatpush1.bf16.msra.mxu0 %v1313
      %1332 = vmatprep.subr.bf16.mxu0 0
      %1333 = vmatpush1.bf16.msra.mxu0 %v1314
      %1334 = vmatprep.subr.bf16.mxu0 0
      %1335 = vmatpush1.bf16.msra.mxu0 %v1315
      %1336 = vmatprep.subr.bf16.mxu0 0
      %1337 = vmatpush1.bf16.msra.mxu0 %v1316
      %1338 = vmatprep.subr.bf16.mxu0 0
      %1339 = vmatpush1.bf16.msra.mxu0 %v1317
      %1340 = vmatprep.subr.bf16.mxu0 0
      %1341 = vmatpush1.bf16.msra.mxu0 %v1318
      %1342 = vmatprep.subr.bf16.mxu0 0
      %1343 = vmatpush1.bf16.msra.mxu0 %v1319
      %1344 = vmatprep.subr.bf16.mxu0 0
      %1345 = vmatpush1.bf16.msra.mxu0 0
      %1346 = vmatprep.subr.bf16.mxu0 0
      %1347 = vmatpush1.bf16.msra.mxu0 0
      %1348 = vmatprep.subr.bf16.mxu0 0
      %1349 = vmatpush1.bf16.msra.mxu0 0
      %1350 = vmatprep.subr.bf16.mxu0 0
      %1351 = vmatpush1.bf16.msra.mxu0 0
      %1352 = vmatprep.subr.bf16.mxu0 0
      %1353 = vmatpush1.bf16.msra.mxu0 0
      %1354 = vmatprep.subr.bf16.mxu0 0
      %1355 = vmatpush1.bf16.msra.mxu0 0
      %1356 = vmatprep.subr.bf16.mxu0 0
      %1357 = vmatpush1.bf16.msra.mxu0 0
      %1358 = vmatprep.subr.bf16.mxu0 0
      %1359 = vmatpush1.bf16.msra.mxu0 0
      %1360 = vmatprep.mubr.bf16.mxu0 0
      %1361 = vmatmul.mubr.bf16.gmra.mrb[0].mxu0 %v1215
      %v1362 = vpop.f32.mrb[0].mxu0
      %v1363 = vadd.f32 0.0, %v1362
      %v1364 = vpop.f32.mrb[0].mxu0
      %v1365 = vpop.f32.mrb[0].mxu0
      %v1366 = vadd.f32 0.0, %v1365
      %v1367 = vpop.f32.mrb[0].mxu0
      %1368 = vmatprep.mubr.bf16.mxu0 0
      %1369 = vmatmul.mubr.bf16.gmra.mrb[0].mxu0 %v1216
      %v1370 = vpop.f32.mrb[0].mxu0
      %v1371 = vadd.f32 0.0, %v1370
      %v1372 = vpop.f32.mrb[0].mxu0
      %v1373 = vpop.f32.mrb[0].mxu0
      %v1374 = vadd.f32 0.0, %v1373
      %v1375 = vpop.f32.mrb[0].mxu0
      %1376 = vmatprep.mubr.bf16.mxu0 0
      %1377 = vmatmul.mubr.bf16.gmra.mrb[0].mxu0 %v1217
      %v1378 = vpop.f32.mrb[0].mxu0
      %v1379 = vadd.f32 0.0, %v1378
      %v1380 = vpop.f32.mrb[0].mxu0
      %v1381 = vpop.f32.mrb[0].mxu0
      %v1382 = vadd.f32 0.0, %v1381
      %v1383 = vpop.f32.mrb[0].mxu0
      %1384 = vmatprep.mubr.bf16.mxu0 0
      %1385 = vmatmul.mubr.bf16.gmra.mrb[0].mxu0 %v1218
      %v1386 = vpop.f32.mrb[0].mxu0
      %v1387 = vadd.f32 0.0, %v1386
      %v1388 = vpop.f32.mrb[0].mxu0
      %v1389 = vpop.f32.mrb[0].mxu0
      %v1390 = vadd.f32 0.0, %v1389
      %v1391 = vpop.f32.mrb[0].mxu0
      %1392 = vmatprep.mubr.bf16.mxu0 0
      %1393 = vmatmul.mubr.bf16.gmra.mrb[0].mxu0 %v1219
      %v1394 = vpop.f32.mrb[0].mxu0
      %v1395 = vadd.f32 0.0, %v1394
      %v1396 = vpop.f32.mrb[0].mxu0
      %v1397 = vpop.f32.mrb[0].mxu0
      %v1398 = vadd.f32 0.0, %v1397
      %v1399 = vpop.f32.mrb[0].mxu0
      %1400 = vmatprep.mubr.bf16.mxu0 0
      %1401 = vmatmul.mubr.bf16.gmra.mrb[0].mxu0 %v1220
      %v1402 = vpop.f32.mrb[0].mxu0
      %v1403 = vadd.f32 0.0, %v1402
      %v1404 = vpop.f32.mrb[0].mxu0
      %v1405 = vpop.f32.mrb[0].mxu0
      %v1406 = vadd.f32 0.0, %v1405
      %v1407 = vpop.f32.mrb[0].mxu0
      %1408 = vmatprep.mubr.bf16.mxu0 0
      %1409 = vmatmul.mubr.bf16.gmra.mrb[0].mxu0 %v1221
      %v1410 = vpop.f32.mrb[0].mxu0
      %v1411 = vadd.f32 0.0, %v1410
      %v1412 = vpop.f32.mrb[0].mxu0
      %v1413 = vpop.f32.mrb[0].mxu0
      %v1414 = vadd.f32 0.0, %v1413
      %v1415 = vpop.f32.mrb[0].mxu0
      %1416 = vmatprep.mubr.bf16.mxu0 0
      %1417 = vmatmul.mubr.bf16.gmra.mrb[0].mxu0 %v1222
      %v1418 = vpop.f32.mrb[0].mxu0
      %v1419 = vadd.f32 0.0, %v1418
      %v1420 = vpop.f32.mrb[0].mxu0
      %v1421 = vpop.f32.mrb[0].mxu0
      %v1422 = vadd.f32 0.0, %v1421
      %v1423 = vpop.f32.mrb[0].mxu0
      %1424 = vmatprep.mubr.bf16.mxu0 0
      %1425 = vmatmul.mubr.bf16.gmra.mrb[0].mxu0 %v1223
      %v1426 = vpop.f32.mrb[0].mxu0
      %v1427 = vadd.f32 0.0, %v1426
      %v1428 = vpop.f32.mrb[0].mxu0
      %v1429 = vpop.f32.mrb[0].mxu0
      %v1430 = vadd.f32 0.0, %v1429
      %v1431 = vpop.f32.mrb[0].mxu0
      %1432 = vmatprep.mubr.bf16.mxu0 0
      %1433 = vmatmul.mubr.bf16.gmra.mrb[0].mxu0 %v1224
      %v1434 = vpop.f32.mrb[0].mxu0
      %v1435 = vadd.f32 0.0, %v1434
      %v1436 = vpop.f32.mrb[0].mxu0
      %v1437 = vpop.f32.mrb[0].mxu0
      %v1438 = vadd.f32 0.0, %v1437
      %v1439 = vpop.f32.mrb[0].mxu0
      %1440 = vmatprep.mubr.bf16.mxu0 0
      %1441 = vmatmul.mubr.bf16.gmra.mrb[0].mxu0 %v1225
      %v1442 = vpop.f32.mrb[0].mxu0
      %v1443 = vadd.f32 0.0, %v1442
      %v1444 = vpop.f32.mrb[0].mxu0
      %v1445 = vpop.f32.mrb[0].mxu0
      %v1446 = vadd.f32 0.0, %v1445
      %v1447 = vpop.f32.mrb[0].mxu0
      %1448 = vmatprep.mubr.bf16.mxu0 0
      %1449 = vmatmul.mubr.bf16.gmra.mrb[0].mxu0 %v1226
      %v1450 = vpop.f32.mrb[0].mxu0
      %v1451 = vadd.f32 0.0, %v1450
      %v1452 = vpop.f32.mrb[0].mxu0
      %v1453 = vpop.f32.mrb[0].mxu0
      %v1454 = vadd.f32 0.0, %v1453
      %v1455 = vpop.f32.mrb[0].mxu0
      %1456 = vmatprep.mubr.bf16.mxu0 0
      %1457 = vmatmul.mubr.bf16.gmra.mrb[0].mxu0 %v1227
      %v1458 = vpop.f32.mrb[0].mxu0
      %v1459 = vadd.f32 0.0, %v1458
      %v1460 = vpop.f32.mrb[0].mxu0
      %v1461 = vpop.f32.mrb[0].mxu0
      %v1462 = vadd.f32 0.0, %v1461
      %v1463 = vpop.f32.mrb[0].mxu0
      %1464 = vmatprep.mubr.bf16.mxu0 0
      %1465 = vmatmul.mubr.bf16.gmra.mrb[0].mxu0 %v1228
      %v1466 = vpop.f32.mrb[0].mxu0
      %v1467 = vadd.f32 0.0, %v1466
      %v1468 = vpop.f32.mrb[0].mxu0
      %v1469 = vpop.f32.mrb[0].mxu0
      %v1470 = vadd.f32 0.0, %v1469
      %v1471 = vpop.f32.mrb[0].mxu0
      %1472 = vmatprep.mubr.bf16.mxu0 0
      %1473 = vmatmul.mubr.bf16.gmra.mrb[0].mxu0 %v1229
      %v1474 = vpop.f32.mrb[0].mxu0
      %v1475 = vadd.f32 0.0, %v1474
      %v1476 = vpop.f32.mrb[0].mxu0
      %v1477 = vpop.f32.mrb[0].mxu0
      %v1478 = vadd.f32 0.0, %v1477
      %v1479 = vpop.f32.mrb[0].mxu0
      %1480 = vmatprep.mubr.bf16.mxu0 0
      %1481 = vmatmul.mubr.bf16.gmra.mrb[0].mxu0 %v1230
      %v1482 = vpop.f32.mrb[0].mxu0
      %v1483 = vadd.f32 0.0, %v1482
      %v1484 = vpop.f32.mrb[0].mxu0
      %v1485 = vpop.f32.mrb[0].mxu0
      %v1486 = vadd.f32 0.0, %v1485
      %v1487 = vpop.f32.mrb[0].mxu0
      %1488 = vdwg.mxu0
      %v1489 = vadd.f32 %v1231, %v1363
      %v1490 = vadd.f32 %v1232, %v1366
      %v1491 = vadd.f32 %v1233, %v1371
      %v1492 = vadd.f32 %v1234, %v1374
      %v1493 = vadd.f32 %v1235, %v1379
      %v1494 = vadd.f32 %v1236, %v1382
      %v1495 = vadd.f32 %v1237, %v1387
      %v1496 = vadd.f32 %v1238, %v1390
      %v1497 = vadd.f32 %v1239, %v1395
      %v1498 = vadd.f32 %v1240, %v1398
      %v1499 = vadd.f32 %v1241, %v1403
      %v1500 = vadd.f32 %v1242, %v1406
      %v1501 = vadd.f32 %v1243, %v1411
      %v1502 = vadd.f32 %v1244, %v1414
      %v1503 = vadd.f32 %v1245, %v1419
      %v1504 = vadd.f32 %v1246, %v1422
      %v1505 = vadd.f32 %v1247, %v1427
      %v1506 = vadd.f32 %v1248, %v1430
      %v1507 = vadd.f32 %v1249, %v1435
      %v1508 = vadd.f32 %v1250, %v1438
      %v1509 = vadd.f32 %v1251, %v1443
      %v1510 = vadd.f32 %v1252, %v1446
      %v1511 = vadd.f32 %v1253, %v1451
      %v1512 = vadd.f32 %v1254, %v1454
      %v1513 = vadd.f32 %v1255, %v1459
      %v1514 = vadd.f32 %v1256, %v1462
      %v1515 = vadd.f32 %v1257, %v1467
      %v1516 = vadd.f32 %v1258, %v1470
      %v1517 = vadd.f32 %v1259, %v1475
      %v1518 = vadd.f32 %v1260, %v1478
      %v1519 = vadd.f32 %v1261, %v1483
      %v1520 = vadd.f32 %v1262, %v1486
      %1521 = vst [vmem:[#allocation3] sm:$0xff] %v1489
      %1522 = vst [vmem:[#allocation3 + $0x8] sm:$0xff] %v1490
      %1523 = vst [vmem:[#allocation3 + $0x10] sm:$0xff] %v1491
      %1524 = vst [vmem:[#allocation3 + $0x18] sm:$0xff] %v1492
      %1525 = vst [vmem:[#allocation3 + $0x20] sm:$0xff] %v1493
      %1526 = vst [vmem:[#allocation3 + $0x28] sm:$0xff] %v1494
      %1527 = vst [vmem:[#allocation3 + $0x30] sm:$0xff] %v1495
      %1528 = vst [vmem:[#allocation3 + $0x38] sm:$0xff] %v1496
      %1529 = vst [vmem:[#allocation3 + $0x40] sm:$0xff] %v1497
      %1530 = vst [vmem:[#allocation3 + $0x48] sm:$0xff] %v1498
      %1531 = vst [vmem:[#allocation3 + $0x50] sm:$0xff] %v1499
      %1532 = vst [vmem:[#allocation3 + $0x58] sm:$0xff] %v1500
      %1533 = vst [vmem:[#allocation3 + $0x60] sm:$0xff] %v1501
      %1534 = vst [vmem:[#allocation3 + $0x68] sm:$0xff] %v1502
      %1535 = vst [vmem:[#allocation3 + $0x70] sm:$0xff] %v1503
      %1536 = vst [vmem:[#allocation3 + $0x78] sm:$0xff] %v1504
      %1537 = vst [vmem:[#allocation3 + $0x80] sm:$0xff] %v1505
      %1538 = vst [vmem:[#allocation3 + $0x88] sm:$0xff] %v1506
      %1539 = vst [vmem:[#allocation3 + $0x90] sm:$0xff] %v1507
      %1540 = vst [vmem:[#allocation3 + $0x98] sm:$0xff] %v1508
      %1541 = vst [vmem:[#allocation3 + $0xa0] sm:$0xff] %v1509
      %1542 = vst [vmem:[#allocation3 + $0xa8] sm:$0xff] %v1510
      %1543 = vst [vmem:[#allocation3 + $0xb0] sm:$0xff] %v1511
      %1544 = vst [vmem:[#allocation3 + $0xb8] sm:$0xff] %v1512
      %1545 = vst [vmem:[#allocation3 + $0xc0] sm:$0xff] %v1513
      %1546 = vst [vmem:[#allocation3 + $0xc8] sm:$0xff] %v1514
      %1547 = vst [vmem:[#allocation3 + $0xd0] sm:$0xff] %v1515
      %1548 = vst [vmem:[#allocation3 + $0xd8] sm:$0xff] %v1516
      %1549 = vst [vmem:[#allocation3 + $0xe0] sm:$0xff] %v1517
      %1550 = vst [vmem:[#allocation3 + $0xe8] sm:$0xff] %v1518
      %1551 = vst [vmem:[#allocation3 + $0xf0] sm:$0xff] %v1519
      %1552 = vst [vmem:[#allocation3 + $0xf8] sm:$0xff] %v1520
      %s1553 = scalar_lea.vmem [#allocation2], 24
      %v1554 = vld [vmem:[%s1553] sm:$0xff]
      %v1555 = vld [vmem:[%s1553 + $0x8] sm:$0xff]
      %v1556 = vld [vmem:[%s1553 + $0x18] sm:$0xff]
      %v1557 = vld [vmem:[%s1553 + $0x20] sm:$0xff]
      %v1558 = vld [vmem:[%s1553 + $0x30] sm:$0xff]
      %v1559 = vld [vmem:[%s1553 + $0x38] sm:$0xff]
      %v1560 = vld [vmem:[%s1553 + $0x48] sm:$0xff]
      %v1561 = vld [vmem:[%s1553 + $0x50] sm:$0xff]
      %v1562 = vld [vmem:[%s1553 + $0x60] sm:$0xff]
      %v1563 = vld [vmem:[%s1553 + $0x68] sm:$0xff]
      %v1564 = vld [vmem:[%s1553 + $0x78] sm:$0xff]
      %v1565 = vld [vmem:[%s1553 + $0x80] sm:$0xff]
      %v1566 = vld [vmem:[%s1553 + $0x90] sm:$0xff]
      %v1567 = vld [vmem:[%s1553 + $0x98] sm:$0xff]
      %v1568 = vld [vmem:[%s1553 + $0xa8] sm:$0xff]
      %v1569 = vld [vmem:[%s1553 + $0xb0] sm:$0xff]
      %v1570 = vld [vmem:[%s1553 + $0xc0] sm:$0xff]
      %v1571 = vld [vmem:[%s1553 + $0xc8] sm:$0xff]
      %v1572 = vld [vmem:[%s1553 + $0xd8] sm:$0xff]
      %v1573 = vld [vmem:[%s1553 + $0xe0] sm:$0xff]
      %v1574 = vld [vmem:[%s1553 + $0xf0] sm:$0xff]
      %v1575 = vld [vmem:[%s1553 + $0xf8] sm:$0xff]
      %v1576 = vld [vmem:[%s1553 + $0x108] sm:$0xff]
      %v1577 = vld [vmem:[%s1553 + $0x110] sm:$0xff]
      %v1578 = vld [vmem:[%s1553 + $0x120] sm:$0xff]
      %v1579 = vld [vmem:[%s1553 + $0x128] sm:$0xff]
      %v1580 = vld [vmem:[%s1553 + $0x138] sm:$0xff]
      %v1581 = vld [vmem:[%s1553 + $0x140] sm:$0xff]
      %v1582 = vld [vmem:[%s1553 + $0x150] sm:$0xff]
      %v1583 = vld [vmem:[%s1553 + $0x158] sm:$0xff]
      %v1584 = vld [vmem:[%s1553 + $0x168] sm:$0xff]
      %v1585 = vld [vmem:[%s1553 + $0x170] sm:$0xff]
      %v1586 = vpack.c.bf16 %v1555, %v1554
      %v1587 = vpack.c.bf16 %v1557, %v1556
      %v1588 = vpack.c.bf16 %v1559, %v1558
      %v1589 = vpack.c.bf16 %v1561, %v1560
      %v1590 = vpack.c.bf16 %v1563, %v1562
      %v1591 = vpack.c.bf16 %v1565, %v1564
      %v1592 = vpack.c.bf16 %v1567, %v1566
      %v1593 = vpack.c.bf16 %v1569, %v1568
      %v1594 = vpack.c.bf16 %v1571, %v1570
      %v1595 = vpack.c.bf16 %v1573, %v1572
      %v1596 = vpack.c.bf16 %v1575, %v1574
      %v1597 = vpack.c.bf16 %v1577, %v1576
      %v1598 = vpack.c.bf16 %v1579, %v1578
      %v1599 = vpack.c.bf16 %v1581, %v1580
      %v1600 = vpack.c.bf16 %v1583, %v1582
      %v1601 = vpack.c.bf16 %v1585, %v1584
      %v1602 = vld [vmem:[#allocation3] sm:$0xff]
      %v1603 = vld [vmem:[#allocation3 + $0x8] sm:$0xff]
      %v1604 = vld [vmem:[#allocation3 + $0x10] sm:$0xff]
      %v1605 = vld [vmem:[#allocation3 + $0x18] sm:$0xff]
      %v1606 = vld [vmem:[#allocation3 + $0x20] sm:$0xff]
      %v1607 = vld [vmem:[#allocation3 + $0x28] sm:$0xff]
      %v1608 = vld [vmem:[#allocation3 + $0x30] sm:$0xff]
      %v1609 = vld [vmem:[#allocation3 + $0x38] sm:$0xff]
      %v1610 = vld [vmem:[#allocation3 + $0x40] sm:$0xff]
      %v1611 = vld [vmem:[#allocation3 + $0x48] sm:$0xff]
      %v1612 = vld [vmem:[#allocation3 + $0x50] sm:$0xff]
      %v1613 = vld [vmem:[#allocation3 + $0x58] sm:$0xff]
      %v1614 = vld [vmem:[#allocation3 + $0x60] sm:$0xff]
      %v1615 = vld [vmem:[#allocation3 + $0x68] sm:$0xff]
      %v1616 = vld [vmem:[#allocation3 + $0x70] sm:$0xff]
      %v1617 = vld [vmem:[#allocation3 + $0x78] sm:$0xff]
      %v1618 = vld [vmem:[#allocation3 + $0x80] sm:$0xff]
      %v1619 = vld [vmem:[#allocation3 + $0x88] sm:$0xff]
      %v1620 = vld [vmem:[#allocation3 + $0x90] sm:$0xff]
      %v1621 = vld [vmem:[#allocation3 + $0x98] sm:$0xff]
      %v1622 = vld [vmem:[#allocation3 + $0xa0] sm:$0xff]
      %v1623 = vld [vmem:[#allocation3 + $0xa8] sm:$0xff]
      %v1624 = vld [vmem:[#allocation3 + $0xb0] sm:$0xff]
      %v1625 = vld [vmem:[#allocation3 + $0xb8] sm:$0xff]
      %v1626 = vld [vmem:[#allocation3 + $0xc0] sm:$0xff]
      %v1627 = vld [vmem:[#allocation3 + $0xc8] sm:$0xff]
      %v1628 = vld [vmem:[#allocation3 + $0xd0] sm:$0xff]
      %v1629 = vld [vmem:[#allocation3 + $0xd8] sm:$0xff]
      %v1630 = vld [vmem:[#allocation3 + $0xe0] sm:$0xff]
      %v1631 = vld [vmem:[#allocation3 + $0xe8] sm:$0xff]
      %v1632 = vld [vmem:[#allocation3 + $0xf0] sm:$0xff]
      %v1633 = vld [vmem:[#allocation3 + $0xf8] sm:$0xff]
      %s1634 = scalar_lea.vmem %s1, 192
      %v1635 = vld [vmem:[%s1634] sm:$0xf]
      %v1636 = vld [vmem:[%s1634 + $0x4] sm:$0xf]
      %v1637 = vld [vmem:[%s1634 + $0x8] sm:$0xf]
      %v1638 = vld [vmem:[%s1634 + $0xc] sm:$0xf]
      %v1639 = vld [vmem:[%s1634 + $0x10] sm:$0xf]
      %v1640 = vld [vmem:[%s1634 + $0x14] sm:$0xf]
      %v1641 = vld [vmem:[%s1634 + $0x18] sm:$0xf]
      %v1642 = vld [vmem:[%s1634 + $0x1c] sm:$0xf]
      %v1643 = vld [vmem:[%s1634 + $0x20] sm:$0xf]
      %v1644 = vld [vmem:[%s1634 + $0x24] sm:$0xf]
      %v1645 = vld [vmem:[%s1634 + $0x28] sm:$0xf]
      %v1646 = vld [vmem:[%s1634 + $0x2c] sm:$0xf]
      %v1647 = vld [vmem:[%s1634 + $0x30] sm:$0xf]
      %v1648 = vld [vmem:[%s1634 + $0x34] sm:$0xf]
      %v1649 = vld [vmem:[%s1634 + $0x38] sm:$0xf]
      %v1650 = vld [vmem:[%s1634 + $0x3c] sm:$0xf]
      %v1667 = vunpack.c.l.b16 %v1635
      %v1668 = vunpack.c.l.b16 %v1636
      %v1669 = vunpack.c.l.b16 %v1637
      %v1670 = vunpack.c.l.b16 %v1638
      %v1671 = vunpack.c.l.b16 %v1639
      %v1672 = vunpack.c.l.b16 %v1640
      %v1673 = vunpack.c.l.b16 %v1641
      %v1674 = vunpack.c.l.b16 %v1642
      %v1675 = vunpack.c.l.b16 %v1643
      %v1676 = vunpack.c.l.b16 %v1644
      %v1677 = vunpack.c.l.b16 %v1645
      %v1678 = vunpack.c.l.b16 %v1646
      %v1679 = vunpack.c.l.b16 %v1647
      %v1680 = vunpack.c.l.b16 %v1648
      %v1681 = vunpack.c.l.b16 %v1649
      %v1682 = vunpack.c.l.b16 %v1650
      %v1683 = vpack.c.b16 %v1668, %v1667
      %v1684 = vpack.c.b16 %v1670, %v1669
      %v1685 = vpack.c.b16 %v1672, %v1671
      %v1686 = vpack.c.b16 %v1674, %v1673
      %v1687 = vpack.c.b16 %v1676, %v1675
      %v1688 = vpack.c.b16 %v1678, %v1677
      %v1689 = vpack.c.b16 %v1680, %v1679
      %v1690 = vpack.c.b16 %v1682, %v1681
      %1699 = vmatprep.subr.bf16.mxu0 0
      %1700 = vmatpush1.bf16.msra.mxu0 %v1683
      %1701 = vmatprep.subr.bf16.mxu0 0
      %1702 = vmatpush1.bf16.msra.mxu0 %v1684
      %1703 = vmatprep.subr.bf16.mxu0 0
      %1704 = vmatpush1.bf16.msra.mxu0 %v1685
      %1705 = vmatprep.subr.bf16.mxu0 0
      %1706 = vmatpush1.bf16.msra.mxu0 %v1686
      %1707 = vmatprep.subr.bf16.mxu0 0
      %1708 = vmatpush1.bf16.msra.mxu0 %v1687
      %1709 = vmatprep.subr.bf16.mxu0 0
      %1710 = vmatpush1.bf16.msra.mxu0 %v1688
      %1711 = vmatprep.subr.bf16.mxu0 0
      %1712 = vmatpush1.bf16.msra.mxu0 %v1689
      %1713 = vmatprep.subr.bf16.mxu0 0
      %1714 = vmatpush1.bf16.msra.mxu0 %v1690
      %1715 = vmatprep.subr.bf16.mxu0 0
      %1716 = vmatpush1.bf16.msra.mxu0 0
      %1717 = vmatprep.subr.bf16.mxu0 0
      %1718 = vmatpush1.bf16.msra.mxu0 0
      %1719 = vmatprep.subr.bf16.mxu0 0
      %1720 = vmatpush1.bf16.msra.mxu0 0
      %1721 = vmatprep.subr.bf16.mxu0 0
      %1722 = vmatpush1.bf16.msra.mxu0 0
      %1723 = vmatprep.subr.bf16.mxu0 0
      %1724 = vmatpush1.bf16.msra.mxu0 0
      %1725 = vmatprep.subr.bf16.mxu0 0
      %1726 = vmatpush1.bf16.msra.mxu0 0
      %1727 = vmatprep.subr.bf16.mxu0 0
      %1728 = vmatpush1.bf16.msra.mxu0 0
      %1729 = vmatprep.subr.bf16.mxu0 0
      %1730 = vmatpush1.bf16.msra.mxu0 0
      %1731 = vmatprep.mubr.bf16.mxu0 0
      %1732 = vmatmul.mubr.bf16.gmra.mrb[0].mxu0 %v1586
      %v1733 = vpop.f32.mrb[0].mxu0
      %v1734 = vadd.f32 0.0, %v1733
      %v1735 = vpop.f32.mrb[0].mxu0
      %v1736 = vpop.f32.mrb[0].mxu0
      %v1737 = vadd.f32 0.0, %v1736
      %v1738 = vpop.f32.mrb[0].mxu0
      %1739 = vmatprep.mubr.bf16.mxu0 0
      %1740 = vmatmul.mubr.bf16.gmra.mrb[0].mxu0 %v1587
      %v1741 = vpop.f32.mrb[0].mxu0
      %v1742 = vadd.f32 0.0, %v1741
      %v1743 = vpop.f32.mrb[0].mxu0
      %v1744 = vpop.f32.mrb[0].mxu0
      %v1745 = vadd.f32 0.0, %v1744
      %v1746 = vpop.f32.mrb[0].mxu0
      %1747 = vmatprep.mubr.bf16.mxu0 0
      %1748 = vmatmul.mubr.bf16.gmra.mrb[0].mxu0 %v1588
      %v1749 = vpop.f32.mrb[0].mxu0
      %v1750 = vadd.f32 0.0, %v1749
      %v1751 = vpop.f32.mrb[0].mxu0
      %v1752 = vpop.f32.mrb[0].mxu0
      %v1753 = vadd.f32 0.0, %v1752
      %v1754 = vpop.f32.mrb[0].mxu0
      %1755 = vmatprep.mubr.bf16.mxu0 0
      %1756 = vmatmul.mubr.bf16.gmra.mrb[0].mxu0 %v1589
      %v1757 = vpop.f32.mrb[0].mxu0
      %v1758 = vadd.f32 0.0, %v1757
      %v1759 = vpop.f32.mrb[0].mxu0
      %v1760 = vpop.f32.mrb[0].mxu0
      %v1761 = vadd.f32 0.0, %v1760
      %v1762 = vpop.f32.mrb[0].mxu0
      %1763 = vmatprep.mubr.bf16.mxu0 0
      %1764 = vmatmul.mubr.bf16.gmra.mrb[0].mxu0 %v1590
      %v1765 = vpop.f32.mrb[0].mxu0
      %v1766 = vadd.f32 0.0, %v1765
      %v1767 = vpop.f32.mrb[0].mxu0
      %v1768 = vpop.f32.mrb[0].mxu0
      %v1769 = vadd.f32 0.0, %v1768
      %v1770 = vpop.f32.mrb[0].mxu0
      %1771 = vmatprep.mubr.bf16.mxu0 0
      %1772 = vmatmul.mubr.bf16.gmra.mrb[0].mxu0 %v1591
      %v1773 = vpop.f32.mrb[0].mxu0
      %v1774 = vadd.f32 0.0, %v1773
      %v1775 = vpop.f32.mrb[0].mxu0
      %v1776 = vpop.f32.mrb[0].mxu0
      %v1777 = vadd.f32 0.0, %v1776
      %v1778 = vpop.f32.mrb[0].mxu0
      %1779 = vmatprep.mubr.bf16.mxu0 0
      %1780 = vmatmul.mubr.bf16.gmra.mrb[0].mxu0 %v1592
      %v1781 = vpop.f32.mrb[0].mxu0
      %v1782 = vadd.f32 0.0, %v1781
      %v1783 = vpop.f32.mrb[0].mxu0
      %v1784 = vpop.f32.mrb[0].mxu0
      %v1785 = vadd.f32 0.0, %v1784
      %v1786 = vpop.f32.mrb[0].mxu0
      %1787 = vmatprep.mubr.bf16.mxu0 0
      %1788 = vmatmul.mubr.bf16.gmra.mrb[0].mxu0 %v1593
      %v1789 = vpop.f32.mrb[0].mxu0
      %v1790 = vadd.f32 0.0, %v1789
      %v1791 = vpop.f32.mrb[0].mxu0
      %v1792 = vpop.f32.mrb[0].mxu0
      %v1793 = vadd.f32 0.0, %v1792
      %v1794 = vpop.f32.mrb[0].mxu0
      %1795 = vmatprep.mubr.bf16.mxu0 0
      %1796 = vmatmul.mubr.bf16.gmra.mrb[0].mxu0 %v1594
      %v1797 = vpop.f32.mrb[0].mxu0
      %v1798 = vadd.f32 0.0, %v1797
      %v1799 = vpop.f32.mrb[0].mxu0
      %v1800 = vpop.f32.mrb[0].mxu0
      %v1801 = vadd.f32 0.0, %v1800
      %v1802 = vpop.f32.mrb[0].mxu0
      %1803 = vmatprep.mubr.bf16.mxu0 0
      %1804 = vmatmul.mubr.bf16.gmra.mrb[0].mxu0 %v1595
      %v1805 = vpop.f32.mrb[0].mxu0
      %v1806 = vadd.f32 0.0, %v1805
      %v1807 = vpop.f32.mrb[0].mxu0
      %v1808 = vpop.f32.mrb[0].mxu0
      %v1809 = vadd.f32 0.0, %v1808
      %v1810 = vpop.f32.mrb[0].mxu0
      %1811 = vmatprep.mubr.bf16.mxu0 0
      %1812 = vmatmul.mubr.bf16.gmra.mrb[0].mxu0 %v1596
      %v1813 = vpop.f32.mrb[0].mxu0
      %v1814 = vadd.f32 0.0, %v1813
      %v1815 = vpop.f32.mrb[0].mxu0
      %v1816 = vpop.f32.mrb[0].mxu0
      %v1817 = vadd.f32 0.0, %v1816
      %v1818 = vpop.f32.mrb[0].mxu0
      %1819 = vmatprep.mubr.bf16.mxu0 0
      %1820 = vmatmul.mubr.bf16.gmra.mrb[0].mxu0 %v1597
      %v1821 = vpop.f32.mrb[0].mxu0
      %v1822 = vadd.f32 0.0, %v1821
      %v1823 = vpop.f32.mrb[0].mxu0
      %v1824 = vpop.f32.mrb[0].mxu0
      %v1825 = vadd.f32 0.0, %v1824
      %v1826 = vpop.f32.mrb[0].mxu0
      %1827 = vmatprep.mubr.bf16.mxu0 0
      %1828 = vmatmul.mubr.bf16.gmra.mrb[0].mxu0 %v1598
      %v1829 = vpop.f32.mrb[0].mxu0
      %v1830 = vadd.f32 0.0, %v1829
      %v1831 = vpop.f32.mrb[0].mxu0
      %v1832 = vpop.f32.mrb[0].mxu0
      %v1833 = vadd.f32 0.0, %v1832
      %v1834 = vpop.f32.mrb[0].mxu0
      %1835 = vmatprep.mubr.bf16.mxu0 0
      %1836 = vmatmul.mubr.bf16.gmra.mrb[0].mxu0 %v1599
      %v1837 = vpop.f32.mrb[0].mxu0
      %v1838 = vadd.f32 0.0, %v1837
      %v1839 = vpop.f32.mrb[0].mxu0
      %v1840 = vpop.f32.mrb[0].mxu0
      %v1841 = vadd.f32 0.0, %v1840
      %v1842 = vpop.f32.mrb[0].mxu0
      %1843 = vmatprep.mubr.bf16.mxu0 0
      %1844 = vmatmul.mubr.bf16.gmra.mrb[0].mxu0 %v1600
      %v1845 = vpop.f32.mrb[0].mxu0
      %v1846 = vadd.f32 0.0, %v1845
      %v1847 = vpop.f32.mrb[0].mxu0
      %v1848 = vpop.f32.mrb[0].mxu0
      %v1849 = vadd.f32 0.0, %v1848
      %v1850 = vpop.f32.mrb[0].mxu0
      %1851 = vmatprep.mubr.bf16.mxu0 0
      %1852 = vmatmul.mubr.bf16.gmra.mrb[0].mxu0 %v1601
      %v1853 = vpop.f32.mrb[0].mxu0
      %v1854 = vadd.f32 0.0, %v1853
      %v1855 = vpop.f32.mrb[0].mxu0
      %v1856 = vpop.f32.mrb[0].mxu0
      %v1857 = vadd.f32 0.0, %v1856
      %v1858 = vpop.f32.mrb[0].mxu0
      %1859 = vdwg.mxu0
      %v1860 = vadd.f32 %v1602, %v1734
      %v1861 = vadd.f32 %v1603, %v1737
      %v1862 = vadd.f32 %v1604, %v1742
      %v1863 = vadd.f32 %v1605, %v1745
      %v1864 = vadd.f32 %v1606, %v1750
      %v1865 = vadd.f32 %v1607, %v1753
      %v1866 = vadd.f32 %v1608, %v1758
      %v1867 = vadd.f32 %v1609, %v1761
      %v1868 = vadd.f32 %v1610, %v1766
      %v1869 = vadd.f32 %v1611, %v1769
      %v1870 = vadd.f32 %v1612, %v1774
      %v1871 = vadd.f32 %v1613, %v1777
      %v1872 = vadd.f32 %v1614, %v1782
      %v1873 = vadd.f32 %v1615, %v1785
      %v1874 = vadd.f32 %v1616, %v1790
      %v1875 = vadd.f32 %v1617, %v1793
      %v1876 = vadd.f32 %v1618, %v1798
      %v1877 = vadd.f32 %v1619, %v1801
      %v1878 = vadd.f32 %v1620, %v1806
      %v1879 = vadd.f32 %v1621, %v1809
      %v1880 = vadd.f32 %v1622, %v1814
      %v1881 = vadd.f32 %v1623, %v1817
      %v1882 = vadd.f32 %v1624, %v1822
      %v1883 = vadd.f32 %v1625, %v1825
      %v1884 = vadd.f32 %v1626, %v1830
      %v1885 = vadd.f32 %v1627, %v1833
      %v1886 = vadd.f32 %v1628, %v1838
      %v1887 = vadd.f32 %v1629, %v1841
      %v1888 = vadd.f32 %v1630, %v1846
      %v1889 = vadd.f32 %v1631, %v1849
      %v1890 = vadd.f32 %v1632, %v1854
      %v1891 = vadd.f32 %v1633, %v1857
      %1892 = vst [vmem:[#allocation3] sm:$0xff] %v1860
      %1893 = vst [vmem:[#allocation3 + $0x8] sm:$0xff] %v1861
      %1894 = vst [vmem:[#allocation3 + $0x10] sm:$0xff] %v1862
      %1895 = vst [vmem:[#allocation3 + $0x18] sm:$0xff] %v1863
      %1896 = vst [vmem:[#allocation3 + $0x20] sm:$0xff] %v1864
      %1897 = vst [vmem:[#allocation3 + $0x28] sm:$0xff] %v1865
      %1898 = vst [vmem:[#allocation3 + $0x30] sm:$0xff] %v1866
      %1899 = vst [vmem:[#allocation3 + $0x38] sm:$0xff] %v1867
      %1900 = vst [vmem:[#allocation3 + $0x40] sm:$0xff] %v1868
      %1901 = vst [vmem:[#allocation3 + $0x48] sm:$0xff] %v1869
      %1902 = vst [vmem:[#allocation3 + $0x50] sm:$0xff] %v1870
      %1903 = vst [vmem:[#allocation3 + $0x58] sm:$0xff] %v1871
      %1904 = vst [vmem:[#allocation3 + $0x60] sm:$0xff] %v1872
      %1905 = vst [vmem:[#allocation3 + $0x68] sm:$0xff] %v1873
      %1906 = vst [vmem:[#allocation3 + $0x70] sm:$0xff] %v1874
      %1907 = vst [vmem:[#allocation3 + $0x78] sm:$0xff] %v1875
      %1908 = vst [vmem:[#allocation3 + $0x80] sm:$0xff] %v1876
      %1909 = vst [vmem:[#allocation3 + $0x88] sm:$0xff] %v1877
      %1910 = vst [vmem:[#allocation3 + $0x90] sm:$0xff] %v1878
      %1911 = vst [vmem:[#allocation3 + $0x98] sm:$0xff] %v1879
      %1912 = vst [vmem:[#allocation3 + $0xa0] sm:$0xff] %v1880
      %1913 = vst [vmem:[#allocation3 + $0xa8] sm:$0xff] %v1881
      %1914 = vst [vmem:[#allocation3 + $0xb0] sm:$0xff] %v1882
      %1915 = vst [vmem:[#allocation3 + $0xb8] sm:$0xff] %v1883
      %1916 = vst [vmem:[#allocation3 + $0xc0] sm:$0xff] %v1884
      %1917 = vst [vmem:[#allocation3 + $0xc8] sm:$0xff] %v1885
      %1918 = vst [vmem:[#allocation3 + $0xd0] sm:$0xff] %v1886
      %1919 = vst [vmem:[#allocation3 + $0xd8] sm:$0xff] %v1887
      %1920 = vst [vmem:[#allocation3 + $0xe0] sm:$0xff] %v1888
      %1921 = vst [vmem:[#allocation3 + $0xe8] sm:$0xff] %v1889
      %1922 = vst [vmem:[#allocation3 + $0xf0] sm:$0xff] %v1890
      %1923 = vst [vmem:[#allocation3 + $0xf8] sm:$0xff] %v1891
      %v1924 = vld [vmem:[%s1553 + $0x1] sm:$0xff]
      %v1925 = vld [vmem:[%s1553 + $0x9] sm:$0xff]
      %v1926 = vld [vmem:[%s1553 + $0x19] sm:$0xff]
      %v1927 = vld [vmem:[%s1553 + $0x21] sm:$0xff]
      %v1928 = vld [vmem:[%s1553 + $0x31] sm:$0xff]
      %v1929 = vld [vmem:[%s1553 + $0x39] sm:$0xff]
      %v1930 = vld [vmem:[%s1553 + $0x49] sm:$0xff]
      %v1931 = vld [vmem:[%s1553 + $0x51] sm:$0xff]
      %v1932 = vld [vmem:[%s1553 + $0x61] sm:$0xff]
      %v1933 = vld [vmem:[%s1553 + $0x69] sm:$0xff]
      %v1934 = vld [vmem:[%s1553 + $0x79] sm:$0xff]
      %v1935 = vld [vmem:[%s1553 + $0x81] sm:$0xff]
      %v1936 = vld [vmem:[%s1553 + $0x91] sm:$0xff]
      %v1937 = vld [vmem:[%s1553 + $0x99] sm:$0xff]
      %v1938 = vld [vmem:[%s1553 + $0xa9] sm:$0xff]
      %v1939 = vld [vmem:[%s1553 + $0xb1] sm:$0xff]
      %v1940 = vld [vmem:[%s1553 + $0xc1] sm:$0xff]
      %v1941 = vld [vmem:[%s1553 + $0xc9] sm:$0xff]
      %v1942 = vld [vmem:[%s1553 + $0xd9] sm:$0xff]
      %v1943 = vld [vmem:[%s1553 + $0xe1] sm:$0xff]
      %v1944 = vld [vmem:[%s1553 + $0xf1] sm:$0xff]
      %v1945 = vld [vmem:[%s1553 + $0xf9] sm:$0xff]
      %v1946 = vld [vmem:[%s1553 + $0x109] sm:$0xff]
      %v1947 = vld [vmem:[%s1553 + $0x111] sm:$0xff]
      %v1948 = vld [vmem:[%s1553 + $0x121] sm:$0xff]
      %v1949 = vld [vmem:[%s1553 + $0x129] sm:$0xff]
      %v1950 = vld [vmem:[%s1553 + $0x139] sm:$0xff]
      %v1951 = vld [vmem:[%s1553 + $0x141] sm:$0xff]
      %v1952 = vld [vmem:[%s1553 + $0x151] sm:$0xff]
      %v1953 = vld [vmem:[%s1553 + $0x159] sm:$0xff]
      %v1954 = vld [vmem:[%s1553 + $0x169] sm:$0xff]
      %v1955 = vld [vmem:[%s1553 + $0x171] sm:$0xff]
      %v1956 = vpack.c.bf16 %v1925, %v1924
      %v1957 = vpack.c.bf16 %v1927, %v1926
      %v1958 = vpack.c.bf16 %v1929, %v1928
      %v1959 = vpack.c.bf16 %v1931, %v1930
      %v1960 = vpack.c.bf16 %v1933, %v1932
      %v1961 = vpack.c.bf16 %v1935, %v1934
      %v1962 = vpack.c.bf16 %v1937, %v1936
      %v1963 = vpack.c.bf16 %v1939, %v1938
      %v1964 = vpack.c.bf16 %v1941, %v1940
      %v1965 = vpack.c.bf16 %v1943, %v1942
      %v1966 = vpack.c.bf16 %v1945, %v1944
      %v1967 = vpack.c.bf16 %v1947, %v1946
      %v1968 = vpack.c.bf16 %v1949, %v1948
      %v1969 = vpack.c.bf16 %v1951, %v1950
      %v1970 = vpack.c.bf16 %v1953, %v1952
      %v1971 = vpack.c.bf16 %v1955, %v1954
      %v1972 = vld [vmem:[#allocation3] sm:$0xff]
      %v1973 = vld [vmem:[#allocation3 + $0x8] sm:$0xff]
      %v1974 = vld [vmem:[#allocation3 + $0x10] sm:$0xff]
      %v1975 = vld [vmem:[#allocation3 + $0x18] sm:$0xff]
      %v1976 = vld [vmem:[#allocation3 + $0x20] sm:$0xff]
      %v1977 = vld [vmem:[#allocation3 + $0x28] sm:$0xff]
      %v1978 = vld [vmem:[#allocation3 + $0x30] sm:$0xff]
      %v1979 = vld [vmem:[#allocation3 + $0x38] sm:$0xff]
      %v1980 = vld [vmem:[#allocation3 + $0x40] sm:$0xff]
      %v1981 = vld [vmem:[#allocation3 + $0x48] sm:$0xff]
      %v1982 = vld [vmem:[#allocation3 + $0x50] sm:$0xff]
      %v1983 = vld [vmem:[#allocation3 + $0x58] sm:$0xff]
      %v1984 = vld [vmem:[#allocation3 + $0x60] sm:$0xff]
      %v1985 = vld [vmem:[#allocation3 + $0x68] sm:$0xff]
      %v1986 = vld [vmem:[#allocation3 + $0x70] sm:$0xff]
      %v1987 = vld [vmem:[#allocation3 + $0x78] sm:$0xff]
      %v1988 = vld [vmem:[#allocation3 + $0x80] sm:$0xff]
      %v1989 = vld [vmem:[#allocation3 + $0x88] sm:$0xff]
      %v1990 = vld [vmem:[#allocation3 + $0x90] sm:$0xff]
      %v1991 = vld [vmem:[#allocation3 + $0x98] sm:$0xff]
      %v1992 = vld [vmem:[#allocation3 + $0xa0] sm:$0xff]
      %v1993 = vld [vmem:[#allocation3 + $0xa8] sm:$0xff]
      %v1994 = vld [vmem:[#allocation3 + $0xb0] sm:$0xff]
      %v1995 = vld [vmem:[#allocation3 + $0xb8] sm:$0xff]
      %v1996 = vld [vmem:[#allocation3 + $0xc0] sm:$0xff]
      %v1997 = vld [vmem:[#allocation3 + $0xc8] sm:$0xff]
      %v1998 = vld [vmem:[#allocation3 + $0xd0] sm:$0xff]
      %v1999 = vld [vmem:[#allocation3 + $0xd8] sm:$0xff]
      %v2000 = vld [vmem:[#allocation3 + $0xe0] sm:$0xff]
      %v2001 = vld [vmem:[#allocation3 + $0xe8] sm:$0xff]
      %v2002 = vld [vmem:[#allocation3 + $0xf0] sm:$0xff]
      %v2003 = vld [vmem:[#allocation3 + $0xf8] sm:$0xff]
      %s2004 = scalar_lea.vmem %s1, 256
      %v2005 = vld [vmem:[%s2004] sm:$0xf]
      %v2006 = vld [vmem:[%s2004 + $0x4] sm:$0xf]
      %v2007 = vld [vmem:[%s2004 + $0x8] sm:$0xf]
      %v2008 = vld [vmem:[%s2004 + $0xc] sm:$0xf]
      %v2009 = vld [vmem:[%s2004 + $0x10] sm:$0xf]
      %v2010 = vld [vmem:[%s2004 + $0x14] sm:$0xf]
      %v2011 = vld [vmem:[%s2004 + $0x18] sm:$0xf]
      %v2012 = vld [vmem:[%s2004 + $0x1c] sm:$0xf]
      %v2013 = vld [vmem:[%s2004 + $0x20] sm:$0xf]
      %v2014 = vld [vmem:[%s2004 + $0x24] sm:$0xf]
      %v2015 = vld [vmem:[%s2004 + $0x28] sm:$0xf]
      %v2016 = vld [vmem:[%s2004 + $0x2c] sm:$0xf]
      %v2017 = vld [vmem:[%s2004 + $0x30] sm:$0xf]
      %v2018 = vld [vmem:[%s2004 + $0x34] sm:$0xf]
      %v2019 = vld [vmem:[%s2004 + $0x38] sm:$0xf]
      %v2020 = vld [vmem:[%s2004 + $0x3c] sm:$0xf]
      %v2037 = vunpack.c.l.b16 %v2005
      %v2038 = vunpack.c.l.b16 %v2006
      %v2039 = vunpack.c.l.b16 %v2007
      %v2040 = vunpack.c.l.b16 %v2008
      %v2041 = vunpack.c.l.b16 %v2009
      %v2042 = vunpack.c.l.b16 %v2010
      %v2043 = vunpack.c.l.b16 %v2011
      %v2044 = vunpack.c.l.b16 %v2012
      %v2045 = vunpack.c.l.b16 %v2013
      %v2046 = vunpack.c.l.b16 %v2014
      %v2047 = vunpack.c.l.b16 %v2015
      %v2048 = vunpack.c.l.b16 %v2016
      %v2049 = vunpack.c.l.b16 %v2017
      %v2050 = vunpack.c.l.b16 %v2018
      %v2051 = vunpack.c.l.b16 %v2019
      %v2052 = vunpack.c.l.b16 %v2020
      %v2053 = vpack.c.b16 %v2038, %v2037
      %v2054 = vpack.c.b16 %v2040, %v2039
      %v2055 = vpack.c.b16 %v2042, %v2041
      %v2056 = vpack.c.b16 %v2044, %v2043
      %v2057 = vpack.c.b16 %v2046, %v2045
      %v2058 = vpack.c.b16 %v2048, %v2047
      %v2059 = vpack.c.b16 %v2050, %v2049
      %v2060 = vpack.c.b16 %v2052, %v2051
      %2069 = vmatprep.subr.bf16.mxu0 0
      %2070 = vmatpush1.bf16.msra.mxu0 %v2053
      %2071 = vmatprep.subr.bf16.mxu0 0
      %2072 = vmatpush1.bf16.msra.mxu0 %v2054
      %2073 = vmatprep.subr.bf16.mxu0 0
      %2074 = vmatpush1.bf16.msra.mxu0 %v2055
      %2075 = vmatprep.subr.bf16.mxu0 0
      %2076 = vmatpush1.bf16.msra.mxu0 %v2056
      %2077 = vmatprep.subr.bf16.mxu0 0
      %2078 = vmatpush1.bf16.msra.mxu0 %v2057
      %2079 = vmatprep.subr.bf16.mxu0 0
      %2080 = vmatpush1.bf16.msra.mxu0 %v2058
      %2081 = vmatprep.subr.bf16.mxu0 0
      %2082 = vmatpush1.bf16.msra.mxu0 %v2059
      %2083 = vmatprep.subr.bf16.mxu0 0
      %2084 = vmatpush1.bf16.msra.mxu0 %v2060
      %2085 = vmatprep.subr.bf16.mxu0 0
      %2086 = vmatpush1.bf16.msra.mxu0 0
      %2087 = vmatprep.subr.bf16.mxu0 0
      %2088 = vmatpush1.bf16.msra.mxu0 0
      %2089 = vmatprep.subr.bf16.mxu0 0
      %2090 = vmatpush1.bf16.msra.mxu0 0
      %2091 = vmatprep.subr.bf16.mxu0 0
      %2092 = vmatpush1.bf16.msra.mxu0 0
      %2093 = vmatprep.subr.bf16.mxu0 0
      %2094 = vmatpush1.bf16.msra.mxu0 0
      %2095 = vmatprep.subr.bf16.mxu0 0
      %2096 = vmatpush1.bf16.msra.mxu0 0
      %2097 = vmatprep.subr.bf16.mxu0 0
      %2098 = vmatpush1.bf16.msra.mxu0 0
      %2099 = vmatprep.subr.bf16.mxu0 0
      %2100 = vmatpush1.bf16.msra.mxu0 0
      %2101 = vmatprep.mubr.bf16.mxu0 0
      %2102 = vmatmul.mubr.bf16.gmra.mrb[0].mxu0 %v1956
      %v2103 = vpop.f32.mrb[0].mxu0
      %v2104 = vadd.f32 0.0, %v2103
      %v2105 = vpop.f32.mrb[0].mxu0
      %v2106 = vpop.f32.mrb[0].mxu0
      %v2107 = vadd.f32 0.0, %v2106
      %v2108 = vpop.f32.mrb[0].mxu0
      %2109 = vmatprep.mubr.bf16.mxu0 0
      %2110 = vmatmul.mubr.bf16.gmra.mrb[0].mxu0 %v1957
      %v2111 = vpop.f32.mrb[0].mxu0
      %v2112 = vadd.f32 0.0, %v2111
      %v2113 = vpop.f32.mrb[0].mxu0
      %v2114 = vpop.f32.mrb[0].mxu0
      %v2115 = vadd.f32 0.0, %v2114
      %v2116 = vpop.f32.mrb[0].mxu0
      %2117 = vmatprep.mubr.bf16.mxu0 0
      %2118 = vmatmul.mubr.bf16.gmra.mrb[0].mxu0 %v1958
      %v2119 = vpop.f32.mrb[0].mxu0
      %v2120 = vadd.f32 0.0, %v2119
      %v2121 = vpop.f32.mrb[0].mxu0
      %v2122 = vpop.f32.mrb[0].mxu0
      %v2123 = vadd.f32 0.0, %v2122
      %v2124 = vpop.f32.mrb[0].mxu0
      %2125 = vmatprep.mubr.bf16.mxu0 0
      %2126 = vmatmul.mubr.bf16.gmra.mrb[0].mxu0 %v1959
      %v2127 = vpop.f32.mrb[0].mxu0
      %v2128 = vadd.f32 0.0, %v2127
      %v2129 = vpop.f32.mrb[0].mxu0
      %v2130 = vpop.f32.mrb[0].mxu0
      %v2131 = vadd.f32 0.0, %v2130
      %v2132 = vpop.f32.mrb[0].mxu0
      %2133 = vmatprep.mubr.bf16.mxu0 0
      %2134 = vmatmul.mubr.bf16.gmra.mrb[0].mxu0 %v1960
      %v2135 = vpop.f32.mrb[0].mxu0
      %v2136 = vadd.f32 0.0, %v2135
      %v2137 = vpop.f32.mrb[0].mxu0
      %v2138 = vpop.f32.mrb[0].mxu0
      %v2139 = vadd.f32 0.0, %v2138
      %v2140 = vpop.f32.mrb[0].mxu0
      %2141 = vmatprep.mubr.bf16.mxu0 0
      %2142 = vmatmul.mubr.bf16.gmra.mrb[0].mxu0 %v1961
      %v2143 = vpop.f32.mrb[0].mxu0
      %v2144 = vadd.f32 0.0, %v2143
      %v2145 = vpop.f32.mrb[0].mxu0
      %v2146 = vpop.f32.mrb[0].mxu0
      %v2147 = vadd.f32 0.0, %v2146
      %v2148 = vpop.f32.mrb[0].mxu0
      %2149 = vmatprep.mubr.bf16.mxu0 0
      %2150 = vmatmul.mubr.bf16.gmra.mrb[0].mxu0 %v1962
      %v2151 = vpop.f32.mrb[0].mxu0
      %v2152 = vadd.f32 0.0, %v2151
      %v2153 = vpop.f32.mrb[0].mxu0
      %v2154 = vpop.f32.mrb[0].mxu0
      %v2155 = vadd.f32 0.0, %v2154
      %v2156 = vpop.f32.mrb[0].mxu0
      %2157 = vmatprep.mubr.bf16.mxu0 0
      %2158 = vmatmul.mubr.bf16.gmra.mrb[0].mxu0 %v1963
      %v2159 = vpop.f32.mrb[0].mxu0
      %v2160 = vadd.f32 0.0, %v2159
      %v2161 = vpop.f32.mrb[0].mxu0
      %v2162 = vpop.f32.mrb[0].mxu0
      %v2163 = vadd.f32 0.0, %v2162
      %v2164 = vpop.f32.mrb[0].mxu0
      %2165 = vmatprep.mubr.bf16.mxu0 0
      %2166 = vmatmul.mubr.bf16.gmra.mrb[0].mxu0 %v1964
      %v2167 = vpop.f32.mrb[0].mxu0
      %v2168 = vadd.f32 0.0, %v2167
      %v2169 = vpop.f32.mrb[0].mxu0
      %v2170 = vpop.f32.mrb[0].mxu0
      %v2171 = vadd.f32 0.0, %v2170
      %v2172 = vpop.f32.mrb[0].mxu0
      %2173 = vmatprep.mubr.bf16.mxu0 0
      %2174 = vmatmul.mubr.bf16.gmra.mrb[0].mxu0 %v1965
      %v2175 = vpop.f32.mrb[0].mxu0
      %v2176 = vadd.f32 0.0, %v2175
      %v2177 = vpop.f32.mrb[0].mxu0
      %v2178 = vpop.f32.mrb[0].mxu0
      %v2179 = vadd.f32 0.0, %v2178
      %v2180 = vpop.f32.mrb[0].mxu0
      %2181 = vmatprep.mubr.bf16.mxu0 0
      %2182 = vmatmul.mubr.bf16.gmra.mrb[0].mxu0 %v1966
      %v2183 = vpop.f32.mrb[0].mxu0
      %v2184 = vadd.f32 0.0, %v2183
      %v2185 = vpop.f32.mrb[0].mxu0
      %v2186 = vpop.f32.mrb[0].mxu0
      %v2187 = vadd.f32 0.0, %v2186
      %v2188 = vpop.f32.mrb[0].mxu0
      %2189 = vmatprep.mubr.bf16.mxu0 0
      %2190 = vmatmul.mubr.bf16.gmra.mrb[0].mxu0 %v1967
      %v2191 = vpop.f32.mrb[0].mxu0
      %v2192 = vadd.f32 0.0, %v2191
      %v2193 = vpop.f32.mrb[0].mxu0
      %v2194 = vpop.f32.mrb[0].mxu0
      %v2195 = vadd.f32 0.0, %v2194
      %v2196 = vpop.f32.mrb[0].mxu0
      %2197 = vmatprep.mubr.bf16.mxu0 0
      %2198 = vmatmul.mubr.bf16.gmra.mrb[0].mxu0 %v1968
      %v2199 = vpop.f32.mrb[0].mxu0
      %v2200 = vadd.f32 0.0, %v2199
      %v2201 = vpop.f32.mrb[0].mxu0
      %v2202 = vpop.f32.mrb[0].mxu0
      %v2203 = vadd.f32 0.0, %v2202
      %v2204 = vpop.f32.mrb[0].mxu0
      %2205 = vmatprep.mubr.bf16.mxu0 0
      %2206 = vmatmul.mubr.bf16.gmra.mrb[0].mxu0 %v1969
      %v2207 = vpop.f32.mrb[0].mxu0
      %v2208 = vadd.f32 0.0, %v2207
      %v2209 = vpop.f32.mrb[0].mxu0
      %v2210 = vpop.f32.mrb[0].mxu0
      %v2211 = vadd.f32 0.0, %v2210
      %v2212 = vpop.f32.mrb[0].mxu0
      %2213 = vmatprep.mubr.bf16.mxu0 0
      %2214 = vmatmul.mubr.bf16.gmra.mrb[0].mxu0 %v1970
      %v2215 = vpop.f32.mrb[0].mxu0
      %v2216 = vadd.f32 0.0, %v2215
      %v2217 = vpop.f32.mrb[0].mxu0
      %v2218 = vpop.f32.mrb[0].mxu0
      %v2219 = vadd.f32 0.0, %v2218
      %v2220 = vpop.f32.mrb[0].mxu0
      %2221 = vmatprep.mubr.bf16.mxu0 0
      %2222 = vmatmul.mubr.bf16.gmra.mrb[0].mxu0 %v1971
      %v2223 = vpop.f32.mrb[0].mxu0
      %v2224 = vadd.f32 0.0, %v2223
      %v2225 = vpop.f32.mrb[0].mxu0
      %v2226 = vpop.f32.mrb[0].mxu0
      %v2227 = vadd.f32 0.0, %v2226
      %v2228 = vpop.f32.mrb[0].mxu0
      %2229 = vdwg.mxu0
      %v2230 = vadd.f32 %v1972, %v2104
      %v2231 = vadd.f32 %v1973, %v2107
      %v2232 = vadd.f32 %v1974, %v2112
      %v2233 = vadd.f32 %v1975, %v2115
      %v2234 = vadd.f32 %v1976, %v2120
      %v2235 = vadd.f32 %v1977, %v2123
      %v2236 = vadd.f32 %v1978, %v2128
      %v2237 = vadd.f32 %v1979, %v2131
      %v2238 = vadd.f32 %v1980, %v2136
      %v2239 = vadd.f32 %v1981, %v2139
      %v2240 = vadd.f32 %v1982, %v2144
      %v2241 = vadd.f32 %v1983, %v2147
      %v2242 = vadd.f32 %v1984, %v2152
      %v2243 = vadd.f32 %v1985, %v2155
      %v2244 = vadd.f32 %v1986, %v2160
      %v2245 = vadd.f32 %v1987, %v2163
      %v2246 = vadd.f32 %v1988, %v2168
      %v2247 = vadd.f32 %v1989, %v2171
      %v2248 = vadd.f32 %v1990, %v2176
      %v2249 = vadd.f32 %v1991, %v2179
      %v2250 = vadd.f32 %v1992, %v2184
      %v2251 = vadd.f32 %v1993, %v2187
      %v2252 = vadd.f32 %v1994, %v2192
      %v2253 = vadd.f32 %v1995, %v2195
      %v2254 = vadd.f32 %v1996, %v2200
      %v2255 = vadd.f32 %v1997, %v2203
      %v2256 = vadd.f32 %v1998, %v2208
      %v2257 = vadd.f32 %v1999, %v2211
      %v2258 = vadd.f32 %v2000, %v2216
      %v2259 = vadd.f32 %v2001, %v2219
      %v2260 = vadd.f32 %v2002, %v2224
      %v2261 = vadd.f32 %v2003, %v2227
      %2262 = vst [vmem:[#allocation3] sm:$0xff] %v2230
      %2263 = vst [vmem:[#allocation3 + $0x8] sm:$0xff] %v2231
      %2264 = vst [vmem:[#allocation3 + $0x10] sm:$0xff] %v2232
      %2265 = vst [vmem:[#allocation3 + $0x18] sm:$0xff] %v2233
      %2266 = vst [vmem:[#allocation3 + $0x20] sm:$0xff] %v2234
      %2267 = vst [vmem:[#allocation3 + $0x28] sm:$0xff] %v2235
      %2268 = vst [vmem:[#allocation3 + $0x30] sm:$0xff] %v2236
      %2269 = vst [vmem:[#allocation3 + $0x38] sm:$0xff] %v2237
      %2270 = vst [vmem:[#allocation3 + $0x40] sm:$0xff] %v2238
      %2271 = vst [vmem:[#allocation3 + $0x48] sm:$0xff] %v2239
      %2272 = vst [vmem:[#allocation3 + $0x50] sm:$0xff] %v2240
      %2273 = vst [vmem:[#allocation3 + $0x58] sm:$0xff] %v2241
      %2274 = vst [vmem:[#allocation3 + $0x60] sm:$0xff] %v2242
      %2275 = vst [vmem:[#allocation3 + $0x68] sm:$0xff] %v2243
      %2276 = vst [vmem:[#allocation3 + $0x70] sm:$0xff] %v2244
      %2277 = vst [vmem:[#allocation3 + $0x78] sm:$0xff] %v2245
      %2278 = vst [vmem:[#allocation3 + $0x80] sm:$0xff] %v2246
      %2279 = vst [vmem:[#allocation3 + $0x88] sm:$0xff] %v2247
      %2280 = vst [vmem:[#allocation3 + $0x90] sm:$0xff] %v2248
      %2281 = vst [vmem:[#allocation3 + $0x98] sm:$0xff] %v2249
      %2282 = vst [vmem:[#allocation3 + $0xa0] sm:$0xff] %v2250
      %2283 = vst [vmem:[#allocation3 + $0xa8] sm:$0xff] %v2251
      %2284 = vst [vmem:[#allocation3 + $0xb0] sm:$0xff] %v2252
      %2285 = vst [vmem:[#allocation3 + $0xb8] sm:$0xff] %v2253
      %2286 = vst [vmem:[#allocation3 + $0xc0] sm:$0xff] %v2254
      %2287 = vst [vmem:[#allocation3 + $0xc8] sm:$0xff] %v2255
      %2288 = vst [vmem:[#allocation3 + $0xd0] sm:$0xff] %v2256
      %2289 = vst [vmem:[#allocation3 + $0xd8] sm:$0xff] %v2257
      %2290 = vst [vmem:[#allocation3 + $0xe0] sm:$0xff] %v2258
      %2291 = vst [vmem:[#allocation3 + $0xe8] sm:$0xff] %v2259
      %2292 = vst [vmem:[#allocation3 + $0xf0] sm:$0xff] %v2260
      %2293 = vst [vmem:[#allocation3 + $0xf8] sm:$0xff] %v2261
      %v2294 = vld [vmem:[%s1553 + $0x2] sm:$0xff]
      %v2295 = vld [vmem:[%s1553 + $0xa] sm:$0xff]
      %v2296 = vld [vmem:[%s1553 + $0x1a] sm:$0xff]
      %v2297 = vld [vmem:[%s1553 + $0x22] sm:$0xff]
      %v2298 = vld [vmem:[%s1553 + $0x32] sm:$0xff]
      %v2299 = vld [vmem:[%s1553 + $0x3a] sm:$0xff]
      %v2300 = vld [vmem:[%s1553 + $0x4a] sm:$0xff]
      %v2301 = vld [vmem:[%s1553 + $0x52] sm:$0xff]
      %v2302 = vld [vmem:[%s1553 + $0x62] sm:$0xff]
      %v2303 = vld [vmem:[%s1553 + $0x6a] sm:$0xff]
      %v2304 = vld [vmem:[%s1553 + $0x7a] sm:$0xff]
      %v2305 = vld [vmem:[%s1553 + $0x82] sm:$0xff]
      %v2306 = vld [vmem:[%s1553 + $0x92] sm:$0xff]
      %v2307 = vld [vmem:[%s1553 + $0x9a] sm:$0xff]
      %v2308 = vld [vmem:[%s1553 + $0xaa] sm:$0xff]
      %v2309 = vld [vmem:[%s1553 + $0xb2] sm:$0xff]
      %v2310 = vld [vmem:[%s1553 + $0xc2] sm:$0xff]
      %v2311 = vld [vmem:[%s1553 + $0xca] sm:$0xff]
      %v2312 = vld [vmem:[%s1553 + $0xda] sm:$0xff]
      %v2313 = vld [vmem:[%s1553 + $0xe2] sm:$0xff]
      %v2314 = vld [vmem:[%s1553 + $0xf2] sm:$0xff]
      %v2315 = vld [vmem:[%s1553 + $0xfa] sm:$0xff]
      %v2316 = vld [vmem:[%s1553 + $0x10a] sm:$0xff]
      %v2317 = vld [vmem:[%s1553 + $0x112] sm:$0xff]
      %v2318 = vld [vmem:[%s1553 + $0x122] sm:$0xff]
      %v2319 = vld [vmem:[%s1553 + $0x12a] sm:$0xff]
      %v2320 = vld [vmem:[%s1553 + $0x13a] sm:$0xff]
      %v2321 = vld [vmem:[%s1553 + $0x142] sm:$0xff]
      %v2322 = vld [vmem:[%s1553 + $0x152] sm:$0xff]
      %v2323 = vld [vmem:[%s1553 + $0x15a] sm:$0xff]
      %v2324 = vld [vmem:[%s1553 + $0x16a] sm:$0xff]
      %v2325 = vld [vmem:[%s1553 + $0x172] sm:$0xff]
      %v2326 = vpack.c.bf16 %v2295, %v2294
      %v2327 = vpack.c.bf16 %v2297, %v2296
      %v2328 = vpack.c.bf16 %v2299, %v2298
      %v2329 = vpack.c.bf16 %v2301, %v2300
      %v2330 = vpack.c.bf16 %v2303, %v2302
      %v2331 = vpack.c.bf16 %v2305, %v2304
      %v2332 = vpack.c.bf16 %v2307, %v2306
      %v2333 = vpack.c.bf16 %v2309, %v2308
      %v2334 = vpack.c.bf16 %v2311, %v2310
      %v2335 = vpack.c.bf16 %v2313, %v2312
      %v2336 = vpack.c.bf16 %v2315, %v2314
      %v2337 = vpack.c.bf16 %v2317, %v2316
      %v2338 = vpack.c.bf16 %v2319, %v2318
      %v2339 = vpack.c.bf16 %v2321, %v2320
      %v2340 = vpack.c.bf16 %v2323, %v2322
      %v2341 = vpack.c.bf16 %v2325, %v2324
      %v2342 = vld [vmem:[#allocation3] sm:$0xff]
      %v2343 = vld [vmem:[#allocation3 + $0x8] sm:$0xff]
      %v2344 = vld [vmem:[#allocation3 + $0x10] sm:$0xff]
      %v2345 = vld [vmem:[#allocation3 + $0x18] sm:$0xff]
      %v2346 = vld [vmem:[#allocation3 + $0x20] sm:$0xff]
      %v2347 = vld [vmem:[#allocation3 + $0x28] sm:$0xff]
      %v2348 = vld [vmem:[#allocation3 + $0x30] sm:$0xff]
      %v2349 = vld [vmem:[#allocation3 + $0x38] sm:$0xff]
      %v2350 = vld [vmem:[#allocation3 + $0x40] sm:$0xff]
      %v2351 = vld [vmem:[#allocation3 + $0x48] sm:$0xff]
      %v2352 = vld [vmem:[#allocation3 + $0x50] sm:$0xff]
      %v2353 = vld [vmem:[#allocation3 + $0x58] sm:$0xff]
      %v2354 = vld [vmem:[#allocation3 + $0x60] sm:$0xff]
      %v2355 = vld [vmem:[#allocation3 + $0x68] sm:$0xff]
      %v2356 = vld [vmem:[#allocation3 + $0x70] sm:$0xff]
      %v2357 = vld [vmem:[#allocation3 + $0x78] sm:$0xff]
      %v2358 = vld [vmem:[#allocation3 + $0x80] sm:$0xff]
      %v2359 = vld [vmem:[#allocation3 + $0x88] sm:$0xff]
      %v2360 = vld [vmem:[#allocation3 + $0x90] sm:$0xff]
      %v2361 = vld [vmem:[#allocation3 + $0x98] sm:$0xff]
      %v2362 = vld [vmem:[#allocation3 + $0xa0] sm:$0xff]
      %v2363 = vld [vmem:[#allocation3 + $0xa8] sm:$0xff]
      %v2364 = vld [vmem:[#allocation3 + $0xb0] sm:$0xff]
      %v2365 = vld [vmem:[#allocation3 + $0xb8] sm:$0xff]
      %v2366 = vld [vmem:[#allocation3 + $0xc0] sm:$0xff]
      %v2367 = vld [vmem:[#allocation3 + $0xc8] sm:$0xff]
      %v2368 = vld [vmem:[#allocation3 + $0xd0] sm:$0xff]
      %v2369 = vld [vmem:[#allocation3 + $0xd8] sm:$0xff]
      %v2370 = vld [vmem:[#allocation3 + $0xe0] sm:$0xff]
      %v2371 = vld [vmem:[#allocation3 + $0xe8] sm:$0xff]
      %v2372 = vld [vmem:[#allocation3 + $0xf0] sm:$0xff]
      %v2373 = vld [vmem:[#allocation3 + $0xf8] sm:$0xff]
      %s2374 = scalar_lea.vmem %s1, 320
      %v2375 = vld [vmem:[%s2374] sm:$0xf]
      %v2376 = vld [vmem:[%s2374 + $0x4] sm:$0xf]
      %v2377 = vld [vmem:[%s2374 + $0x8] sm:$0xf]
      %v2378 = vld [vmem:[%s2374 + $0xc] sm:$0xf]
      %v2379 = vld [vmem:[%s2374 + $0x10] sm:$0xf]
      %v2380 = vld [vmem:[%s2374 + $0x14] sm:$0xf]
      %v2381 = vld [vmem:[%s2374 + $0x18] sm:$0xf]
      %v2382 = vld [vmem:[%s2374 + $0x1c] sm:$0xf]
      %v2383 = vld [vmem:[%s2374 + $0x20] sm:$0xf]
      %v2384 = vld [vmem:[%s2374 + $0x24] sm:$0xf]
      %v2385 = vld [vmem:[%s2374 + $0x28] sm:$0xf]
      %v2386 = vld [vmem:[%s2374 + $0x2c] sm:$0xf]
      %v2387 = vld [vmem:[%s2374 + $0x30] sm:$0xf]
      %v2388 = vld [vmem:[%s2374 + $0x34] sm:$0xf]
      %v2389 = vld [vmem:[%s2374 + $0x38] sm:$0xf]
      %v2390 = vld [vmem:[%s2374 + $0x3c] sm:$0xf]
      %v2407 = vunpack.c.l.b16 %v2375
      %v2408 = vunpack.c.l.b16 %v2376
      %v2409 = vunpack.c.l.b16 %v2377
      %v2410 = vunpack.c.l.b16 %v2378
      %v2411 = vunpack.c.l.b16 %v2379
      %v2412 = vunpack.c.l.b16 %v2380
      %v2413 = vunpack.c.l.b16 %v2381
      %v2414 = vunpack.c.l.b16 %v2382
      %v2415 = vunpack.c.l.b16 %v2383
      %v2416 = vunpack.c.l.b16 %v2384
      %v2417 = vunpack.c.l.b16 %v2385
      %v2418 = vunpack.c.l.b16 %v2386
      %v2419 = vunpack.c.l.b16 %v2387
      %v2420 = vunpack.c.l.b16 %v2388
      %v2421 = vunpack.c.l.b16 %v2389
      %v2422 = vunpack.c.l.b16 %v2390
      %v2423 = vpack.c.b16 %v2408, %v2407
      %v2424 = vpack.c.b16 %v2410, %v2409
      %v2425 = vpack.c.b16 %v2412, %v2411
      %v2426 = vpack.c.b16 %v2414, %v2413
      %v2427 = vpack.c.b16 %v2416, %v2415
      %v2428 = vpack.c.b16 %v2418, %v2417
      %v2429 = vpack.c.b16 %v2420, %v2419
      %v2430 = vpack.c.b16 %v2422, %v2421
      %2439 = vmatprep.subr.bf16.mxu0 0
      %2440 = vmatpush1.bf16.msra.mxu0 %v2423
      %2441 = vmatprep.subr.bf16.mxu0 0
      %2442 = vmatpush1.bf16.msra.mxu0 %v2424
      %2443 = vmatprep.subr.bf16.mxu0 0
      %2444 = vmatpush1.bf16.msra.mxu0 %v2425
      %2445 = vmatprep.subr.bf16.mxu0 0
      %2446 = vmatpush1.bf16.msra.mxu0 %v2426
      %2447 = vmatprep.subr.bf16.mxu0 0
      %2448 = vmatpush1.bf16.msra.mxu0 %v2427
      %2449 = vmatprep.subr.bf16.mxu0 0
      %2450 = vmatpush1.bf16.msra.mxu0 %v2428
      %2451 = vmatprep.subr.bf16.mxu0 0
      %2452 = vmatpush1.bf16.msra.mxu0 %v2429
      %2453 = vmatprep.subr.bf16.mxu0 0
      %2454 = vmatpush1.bf16.msra.mxu0 %v2430
      %2455 = vmatprep.subr.bf16.mxu0 0
      %2456 = vmatpush1.bf16.msra.mxu0 0
      %2457 = vmatprep.subr.bf16.mxu0 0
      %2458 = vmatpush1.bf16.msra.mxu0 0
      %2459 = vmatprep.subr.bf16.mxu0 0
      %2460 = vmatpush1.bf16.msra.mxu0 0
      %2461 = vmatprep.subr.bf16.mxu0 0
      %2462 = vmatpush1.bf16.msra.mxu0 0
      %2463 = vmatprep.subr.bf16.mxu0 0
      %2464 = vmatpush1.bf16.msra.mxu0 0
      %2465 = vmatprep.subr.bf16.mxu0 0
      %2466 = vmatpush1.bf16.msra.mxu0 0
      %2467 = vmatprep.subr.bf16.mxu0 0
      %2468 = vmatpush1.bf16.msra.mxu0 0
      %2469 = vmatprep.subr.bf16.mxu0 0
      %2470 = vmatpush1.bf16.msra.mxu0 0
      %2471 = vmatprep.mubr.bf16.mxu0 0
      %2472 = vmatmul.mubr.bf16.gmra.mrb[0].mxu0 %v2326
      %v2473 = vpop.f32.mrb[0].mxu0
      %v2474 = vadd.f32 0.0, %v2473
      %v2475 = vpop.f32.mrb[0].mxu0
      %v2476 = vpop.f32.mrb[0].mxu0
      %v2477 = vadd.f32 0.0, %v2476
      %v2478 = vpop.f32.mrb[0].mxu0
      %2479 = vmatprep.mubr.bf16.mxu0 0
      %2480 = vmatmul.mubr.bf16.gmra.mrb[0].mxu0 %v2327
      %v2481 = vpop.f32.mrb[0].mxu0
      %v2482 = vadd.f32 0.0, %v2481
      %v2483 = vpop.f32.mrb[0].mxu0
      %v2484 = vpop.f32.mrb[0].mxu0
      %v2485 = vadd.f32 0.0, %v2484
      %v2486 = vpop.f32.mrb[0].mxu0
      %2487 = vmatprep.mubr.bf16.mxu0 0
      %2488 = vmatmul.mubr.bf16.gmra.mrb[0].mxu0 %v2328
      %v2489 = vpop.f32.mrb[0].mxu0
      %v2490 = vadd.f32 0.0, %v2489
      %v2491 = vpop.f32.mrb[0].mxu0
      %v2492 = vpop.f32.mrb[0].mxu0
      %v2493 = vadd.f32 0.0, %v2492
      %v2494 = vpop.f32.mrb[0].mxu0
      %2495 = vmatprep.mubr.bf16.mxu0 0
      %2496 = vmatmul.mubr.bf16.gmra.mrb[0].mxu0 %v2329
      %v2497 = vpop.f32.mrb[0].mxu0
      %v2498 = vadd.f32 0.0, %v2497
      %v2499 = vpop.f32.mrb[0].mxu0
      %v2500 = vpop.f32.mrb[0].mxu0
      %v2501 = vadd.f32 0.0, %v2500
      %v2502 = vpop.f32.mrb[0].mxu0
      %2503 = vmatprep.mubr.bf16.mxu0 0
      %2504 = vmatmul.mubr.bf16.gmra.mrb[0].mxu0 %v2330
      %v2505 = vpop.f32.mrb[0].mxu0
      %v2506 = vadd.f32 0.0, %v2505
      %v2507 = vpop.f32.mrb[0].mxu0
      %v2508 = vpop.f32.mrb[0].mxu0
      %v2509 = vadd.f32 0.0, %v2508
      %v2510 = vpop.f32.mrb[0].mxu0
      %2511 = vmatprep.mubr.bf16.mxu0 0
      %2512 = vmatmul.mubr.bf16.gmra.mrb[0].mxu0 %v2331
      %v2513 = vpop.f32.mrb[0].mxu0
      %v2514 = vadd.f32 0.0, %v2513
      %v2515 = vpop.f32.mrb[0].mxu0
      %v2516 = vpop.f32.mrb[0].mxu0
      %v2517 = vadd.f32 0.0, %v2516
      %v2518 = vpop.f32.mrb[0].mxu0
      %2519 = vmatprep.mubr.bf16.mxu0 0
      %2520 = vmatmul.mubr.bf16.gmra.mrb[0].mxu0 %v2332
      %v2521 = vpop.f32.mrb[0].mxu0
      %v2522 = vadd.f32 0.0, %v2521
      %v2523 = vpop.f32.mrb[0].mxu0
      %v2524 = vpop.f32.mrb[0].mxu0
      %v2525 = vadd.f32 0.0, %v2524
      %v2526 = vpop.f32.mrb[0].mxu0
      %2527 = vmatprep.mubr.bf16.mxu0 0
      %2528 = vmatmul.mubr.bf16.gmra.mrb[0].mxu0 %v2333
      %v2529 = vpop.f32.mrb[0].mxu0
      %v2530 = vadd.f32 0.0, %v2529
      %v2531 = vpop.f32.mrb[0].mxu0
      %v2532 = vpop.f32.mrb[0].mxu0
      %v2533 = vadd.f32 0.0, %v2532
      %v2534 = vpop.f32.mrb[0].mxu0
      %2535 = vmatprep.mubr.bf16.mxu0 0
      %2536 = vmatmul.mubr.bf16.gmra.mrb[0].mxu0 %v2334
      %v2537 = vpop.f32.mrb[0].mxu0
      %v2538 = vadd.f32 0.0, %v2537
      %v2539 = vpop.f32.mrb[0].mxu0
      %v2540 = vpop.f32.mrb[0].mxu0
      %v2541 = vadd.f32 0.0, %v2540
      %v2542 = vpop.f32.mrb[0].mxu0
      %2543 = vmatprep.mubr.bf16.mxu0 0
      %2544 = vmatmul.mubr.bf16.gmra.mrb[0].mxu0 %v2335
      %v2545 = vpop.f32.mrb[0].mxu0
      %v2546 = vadd.f32 0.0, %v2545
      %v2547 = vpop.f32.mrb[0].mxu0
      %v2548 = vpop.f32.mrb[0].mxu0
      %v2549 = vadd.f32 0.0, %v2548
      %v2550 = vpop.f32.mrb[0].mxu0
      %2551 = vmatprep.mubr.bf16.mxu0 0
      %2552 = vmatmul.mubr.bf16.gmra.mrb[0].mxu0 %v2336
      %v2553 = vpop.f32.mrb[0].mxu0
      %v2554 = vadd.f32 0.0, %v2553
      %v2555 = vpop.f32.mrb[0].mxu0
      %v2556 = vpop.f32.mrb[0].mxu0
      %v2557 = vadd.f32 0.0, %v2556
      %v2558 = vpop.f32.mrb[0].mxu0
      %2559 = vmatprep.mubr.bf16.mxu0 0
      %2560 = vmatmul.mubr.bf16.gmra.mrb[0].mxu0 %v2337
      %v2561 = vpop.f32.mrb[0].mxu0
      %v2562 = vadd.f32 0.0, %v2561
      %v2563 = vpop.f32.mrb[0].mxu0
      %v2564 = vpop.f32.mrb[0].mxu0
      %v2565 = vadd.f32 0.0, %v2564
      %v2566 = vpop.f32.mrb[0].mxu0
      %2567 = vmatprep.mubr.bf16.mxu0 0
      %2568 = vmatmul.mubr.bf16.gmra.mrb[0].mxu0 %v2338
      %v2569 = vpop.f32.mrb[0].mxu0
      %v2570 = vadd.f32 0.0, %v2569
      %v2571 = vpop.f32.mrb[0].mxu0
      %v2572 = vpop.f32.mrb[0].mxu0
      %v2573 = vadd.f32 0.0, %v2572
      %v2574 = vpop.f32.mrb[0].mxu0
      %2575 = vmatprep.mubr.bf16.mxu0 0
      %2576 = vmatmul.mubr.bf16.gmra.mrb[0].mxu0 %v2339
      %v2577 = vpop.f32.mrb[0].mxu0
      %v2578 = vadd.f32 0.0, %v2577
      %v2579 = vpop.f32.mrb[0].mxu0
      %v2580 = vpop.f32.mrb[0].mxu0
      %v2581 = vadd.f32 0.0, %v2580
      %v2582 = vpop.f32.mrb[0].mxu0
      %2583 = vmatprep.mubr.bf16.mxu0 0
      %2584 = vmatmul.mubr.bf16.gmra.mrb[0].mxu0 %v2340
      %v2585 = vpop.f32.mrb[0].mxu0
      %v2586 = vadd.f32 0.0, %v2585
      %v2587 = vpop.f32.mrb[0].mxu0
      %v2588 = vpop.f32.mrb[0].mxu0
      %v2589 = vadd.f32 0.0, %v2588
      %v2590 = vpop.f32.mrb[0].mxu0
      %2591 = vmatprep.mubr.bf16.mxu0 0
      %2592 = vmatmul.mubr.bf16.gmra.mrb[0].mxu0 %v2341
      %v2593 = vpop.f32.mrb[0].mxu0
      %v2594 = vadd.f32 0.0, %v2593
      %v2595 = vpop.f32.mrb[0].mxu0
      %v2596 = vpop.f32.mrb[0].mxu0
      %v2597 = vadd.f32 0.0, %v2596
      %v2598 = vpop.f32.mrb[0].mxu0
      %2599 = vdwg.mxu0
      %v2600 = vadd.f32 %v2342, %v2474
      %v2601 = vadd.f32 %v2343, %v2477
      %v2602 = vadd.f32 %v2344, %v2482
      %v2603 = vadd.f32 %v2345, %v2485
      %v2604 = vadd.f32 %v2346, %v2490
      %v2605 = vadd.f32 %v2347, %v2493
      %v2606 = vadd.f32 %v2348, %v2498
      %v2607 = vadd.f32 %v2349, %v2501
      %v2608 = vadd.f32 %v2350, %v2506
      %v2609 = vadd.f32 %v2351, %v2509
      %v2610 = vadd.f32 %v2352, %v2514
      %v2611 = vadd.f32 %v2353, %v2517
      %v2612 = vadd.f32 %v2354, %v2522
      %v2613 = vadd.f32 %v2355, %v2525
      %v2614 = vadd.f32 %v2356, %v2530
      %v2615 = vadd.f32 %v2357, %v2533
      %v2616 = vadd.f32 %v2358, %v2538
      %v2617 = vadd.f32 %v2359, %v2541
      %v2618 = vadd.f32 %v2360, %v2546
      %v2619 = vadd.f32 %v2361, %v2549
      %v2620 = vadd.f32 %v2362, %v2554
      %v2621 = vadd.f32 %v2363, %v2557
      %v2622 = vadd.f32 %v2364, %v2562
      %v2623 = vadd.f32 %v2365, %v2565
      %v2624 = vadd.f32 %v2366, %v2570
      %v2625 = vadd.f32 %v2367, %v2573
      %v2626 = vadd.f32 %v2368, %v2578
      %v2627 = vadd.f32 %v2369, %v2581
      %v2628 = vadd.f32 %v2370, %v2586
      %v2629 = vadd.f32 %v2371, %v2589
      %v2630 = vadd.f32 %v2372, %v2594
      %v2631 = vadd.f32 %v2373, %v2597
      %2632 = vst [vmem:[#allocation3] sm:$0xff] %v2600
      %2633 = vst [vmem:[#allocation3 + $0x8] sm:$0xff] %v2601
      %2634 = vst [vmem:[#allocation3 + $0x10] sm:$0xff] %v2602
      %2635 = vst [vmem:[#allocation3 + $0x18] sm:$0xff] %v2603
      %2636 = vst [vmem:[#allocation3 + $0x20] sm:$0xff] %v2604
      %2637 = vst [vmem:[#allocation3 + $0x28] sm:$0xff] %v2605
      %2638 = vst [vmem:[#allocation3 + $0x30] sm:$0xff] %v2606
      %2639 = vst [vmem:[#allocation3 + $0x38] sm:$0xff] %v2607
      %2640 = vst [vmem:[#allocation3 + $0x40] sm:$0xff] %v2608
      %2641 = vst [vmem:[#allocation3 + $0x48] sm:$0xff] %v2609
      %2642 = vst [vmem:[#allocation3 + $0x50] sm:$0xff] %v2610
      %2643 = vst [vmem:[#allocation3 + $0x58] sm:$0xff] %v2611
      %2644 = vst [vmem:[#allocation3 + $0x60] sm:$0xff] %v2612
      %2645 = vst [vmem:[#allocation3 + $0x68] sm:$0xff] %v2613
      %2646 = vst [vmem:[#allocation3 + $0x70] sm:$0xff] %v2614
      %2647 = vst [vmem:[#allocation3 + $0x78] sm:$0xff] %v2615
      %2648 = vst [vmem:[#allocation3 + $0x80] sm:$0xff] %v2616
      %2649 = vst [vmem:[#allocation3 + $0x88] sm:$0xff] %v2617
      %2650 = vst [vmem:[#allocation3 + $0x90] sm:$0xff] %v2618
      %2651 = vst [vmem:[#allocation3 + $0x98] sm:$0xff] %v2619
      %2652 = vst [vmem:[#allocation3 + $0xa0] sm:$0xff] %v2620
      %2653 = vst [vmem:[#allocation3 + $0xa8] sm:$0xff] %v2621
      %2654 = vst [vmem:[#allocation3 + $0xb0] sm:$0xff] %v2622
      %2655 = vst [vmem:[#allocation3 + $0xb8] sm:$0xff] %v2623
      %2656 = vst [vmem:[#allocation3 + $0xc0] sm:$0xff] %v2624
      %2657 = vst [vmem:[#allocation3 + $0xc8] sm:$0xff] %v2625
      %2658 = vst [vmem:[#allocation3 + $0xd0] sm:$0xff] %v2626
      %2659 = vst [vmem:[#allocation3 + $0xd8] sm:$0xff] %v2627
      %2660 = vst [vmem:[#allocation3 + $0xe0] sm:$0xff] %v2628
      %2661 = vst [vmem:[#allocation3 + $0xe8] sm:$0xff] %v2629
      %2662 = vst [vmem:[#allocation3 + $0xf0] sm:$0xff] %v2630
      %2663 = vst [vmem:[#allocation3 + $0xf8] sm:$0xff] %v2631
      %s2664 = scalar_lea.vmem [#allocation2], 48
      %v2665 = vld [vmem:[%s2664] sm:$0xff]
      %v2666 = vld [vmem:[%s2664 + $0x8] sm:$0xff]
      %v2667 = vld [vmem:[%s2664 + $0x18] sm:$0xff]
      %v2668 = vld [vmem:[%s2664 + $0x20] sm:$0xff]
      %v2669 = vld [vmem:[%s2664 + $0x30] sm:$0xff]
      %v2670 = vld [vmem:[%s2664 + $0x38] sm:$0xff]
      %v2671 = vld [vmem:[%s2664 + $0x48] sm:$0xff]
      %v2672 = vld [vmem:[%s2664 + $0x50] sm:$0xff]
      %v2673 = vld [vmem:[%s2664 + $0x60] sm:$0xff]
      %v2674 = vld [vmem:[%s2664 + $0x68] sm:$0xff]
      %v2675 = vld [vmem:[%s2664 + $0x78] sm:$0xff]
      %v2676 = vld [vmem:[%s2664 + $0x80] sm:$0xff]
      %v2677 = vld [vmem:[%s2664 + $0x90] sm:$0xff]
      %v2678 = vld [vmem:[%s2664 + $0x98] sm:$0xff]
      %v2679 = vld [vmem:[%s2664 + $0xa8] sm:$0xff]
      %v2680 = vld [vmem:[%s2664 + $0xb0] sm:$0xff]
      %v2681 = vld [vmem:[%s2664 + $0xc0] sm:$0xff]
      %v2682 = vld [vmem:[%s2664 + $0xc8] sm:$0xff]
      %v2683 = vld [vmem:[%s2664 + $0xd8] sm:$0xff]
      %v2684 = vld [vmem:[%s2664 + $0xe0] sm:$0xff]
      %v2685 = vld [vmem:[%s2664 + $0xf0] sm:$0xff]
      %v2686 = vld [vmem:[%s2664 + $0xf8] sm:$0xff]
      %v2687 = vld [vmem:[%s2664 + $0x108] sm:$0xff]
      %v2688 = vld [vmem:[%s2664 + $0x110] sm:$0xff]
      %v2689 = vld [vmem:[%s2664 + $0x120] sm:$0xff]
      %v2690 = vld [vmem:[%s2664 + $0x128] sm:$0xff]
      %v2691 = vld [vmem:[%s2664 + $0x138] sm:$0xff]
      %v2692 = vld [vmem:[%s2664 + $0x140] sm:$0xff]
      %v2693 = vld [vmem:[%s2664 + $0x150] sm:$0xff]
      %v2694 = vld [vmem:[%s2664 + $0x158] sm:$0xff]
      %v2695 = vld [vmem:[%s2664 + $0x168] sm:$0xff]
      %v2696 = vld [vmem:[%s2664 + $0x170] sm:$0xff]
      %v2697 = vpack.c.bf16 %v2666, %v2665
      %v2698 = vpack.c.bf16 %v2668, %v2667
      %v2699 = vpack.c.bf16 %v2670, %v2669
      %v2700 = vpack.c.bf16 %v2672, %v2671
      %v2701 = vpack.c.bf16 %v2674, %v2673
      %v2702 = vpack.c.bf16 %v2676, %v2675
      %v2703 = vpack.c.bf16 %v2678, %v2677
      %v2704 = vpack.c.bf16 %v2680, %v2679
      %v2705 = vpack.c.bf16 %v2682, %v2681
      %v2706 = vpack.c.bf16 %v2684, %v2683
      %v2707 = vpack.c.bf16 %v2686, %v2685
      %v2708 = vpack.c.bf16 %v2688, %v2687
      %v2709 = vpack.c.bf16 %v2690, %v2689
      %v2710 = vpack.c.bf16 %v2692, %v2691
      %v2711 = vpack.c.bf16 %v2694, %v2693
      %v2712 = vpack.c.bf16 %v2696, %v2695
      %v2713 = vld [vmem:[#allocation3] sm:$0xff]
      %v2714 = vld [vmem:[#allocation3 + $0x8] sm:$0xff]
      %v2715 = vld [vmem:[#allocation3 + $0x10] sm:$0xff]
      %v2716 = vld [vmem:[#allocation3 + $0x18] sm:$0xff]
      %v2717 = vld [vmem:[#allocation3 + $0x20] sm:$0xff]
      %v2718 = vld [vmem:[#allocation3 + $0x28] sm:$0xff]
      %v2719 = vld [vmem:[#allocation3 + $0x30] sm:$0xff]
      %v2720 = vld [vmem:[#allocation3 + $0x38] sm:$0xff]
      %v2721 = vld [vmem:[#allocation3 + $0x40] sm:$0xff]
      %v2722 = vld [vmem:[#allocation3 + $0x48] sm:$0xff]
      %v2723 = vld [vmem:[#allocation3 + $0x50] sm:$0xff]
      %v2724 = vld [vmem:[#allocation3 + $0x58] sm:$0xff]
      %v2725 = vld [vmem:[#allocation3 + $0x60] sm:$0xff]
      %v2726 = vld [vmem:[#allocation3 + $0x68] sm:$0xff]
      %v2727 = vld [vmem:[#allocation3 + $0x70] sm:$0xff]
      %v2728 = vld [vmem:[#allocation3 + $0x78] sm:$0xff]
      %v2729 = vld [vmem:[#allocation3 + $0x80] sm:$0xff]
      %v2730 = vld [vmem:[#allocation3 + $0x88] sm:$0xff]
      %v2731 = vld [vmem:[#allocation3 + $0x90] sm:$0xff]
      %v2732 = vld [vmem:[#allocation3 + $0x98] sm:$0xff]
      %v2733 = vld [vmem:[#allocation3 + $0xa0] sm:$0xff]
      %v2734 = vld [vmem:[#allocation3 + $0xa8] sm:$0xff]
      %v2735 = vld [vmem:[#allocation3 + $0xb0] sm:$0xff]
      %v2736 = vld [vmem:[#allocation3 + $0xb8] sm:$0xff]
      %v2737 = vld [vmem:[#allocation3 + $0xc0] sm:$0xff]
      %v2738 = vld [vmem:[#allocation3 + $0xc8] sm:$0xff]
      %v2739 = vld [vmem:[#allocation3 + $0xd0] sm:$0xff]
      %v2740 = vld [vmem:[#allocation3 + $0xd8] sm:$0xff]
      %v2741 = vld [vmem:[#allocation3 + $0xe0] sm:$0xff]
      %v2742 = vld [vmem:[#allocation3 + $0xe8] sm:$0xff]
      %v2743 = vld [vmem:[#allocation3 + $0xf0] sm:$0xff]
      %v2744 = vld [vmem:[#allocation3 + $0xf8] sm:$0xff]
      %s2745 = scalar_lea.vmem %s1, 384
      %v2746 = vld [vmem:[%s2745] sm:$0xf]
      %v2747 = vld [vmem:[%s2745 + $0x4] sm:$0xf]
      %v2748 = vld [vmem:[%s2745 + $0x8] sm:$0xf]
      %v2749 = vld [vmem:[%s2745 + $0xc] sm:$0xf]
      %v2750 = vld [vmem:[%s2745 + $0x10] sm:$0xf]
      %v2751 = vld [vmem:[%s2745 + $0x14] sm:$0xf]
      %v2752 = vld [vmem:[%s2745 + $0x18] sm:$0xf]
      %v2753 = vld [vmem:[%s2745 + $0x1c] sm:$0xf]
      %v2754 = vld [vmem:[%s2745 + $0x20] sm:$0xf]
      %v2755 = vld [vmem:[%s2745 + $0x24] sm:$0xf]
      %v2756 = vld [vmem:[%s2745 + $0x28] sm:$0xf]
      %v2757 = vld [vmem:[%s2745 + $0x2c] sm:$0xf]
      %v2758 = vld [vmem:[%s2745 + $0x30] sm:$0xf]
      %v2759 = vld [vmem:[%s2745 + $0x34] sm:$0xf]
      %v2760 = vld [vmem:[%s2745 + $0x38] sm:$0xf]
      %v2761 = vld [vmem:[%s2745 + $0x3c] sm:$0xf]
      %v2778 = vunpack.c.l.b16 %v2746
      %v2779 = vunpack.c.l.b16 %v2747
      %v2780 = vunpack.c.l.b16 %v2748
      %v2781 = vunpack.c.l.b16 %v2749
      %v2782 = vunpack.c.l.b16 %v2750
      %v2783 = vunpack.c.l.b16 %v2751
      %v2784 = vunpack.c.l.b16 %v2752
      %v2785 = vunpack.c.l.b16 %v2753
      %v2786 = vunpack.c.l.b16 %v2754
      %v2787 = vunpack.c.l.b16 %v2755
      %v2788 = vunpack.c.l.b16 %v2756
      %v2789 = vunpack.c.l.b16 %v2757
      %v2790 = vunpack.c.l.b16 %v2758
      %v2791 = vunpack.c.l.b16 %v2759
      %v2792 = vunpack.c.l.b16 %v2760
      %v2793 = vunpack.c.l.b16 %v2761
      %v2794 = vpack.c.b16 %v2779, %v2778
      %v2795 = vpack.c.b16 %v2781, %v2780
      %v2796 = vpack.c.b16 %v2783, %v2782
      %v2797 = vpack.c.b16 %v2785, %v2784
      %v2798 = vpack.c.b16 %v2787, %v2786
      %v2799 = vpack.c.b16 %v2789, %v2788
      %v2800 = vpack.c.b16 %v2791, %v2790
      %v2801 = vpack.c.b16 %v2793, %v2792
      %2810 = vmatprep.subr.bf16.mxu0 0
      %2811 = vmatpush1.bf16.msra.mxu0 %v2794
      %2812 = vmatprep.subr.bf16.mxu0 0
      %2813 = vmatpush1.bf16.msra.mxu0 %v2795
      %2814 = vmatprep.subr.bf16.mxu0 0
      %2815 = vmatpush1.bf16.msra.mxu0 %v2796
      %2816 = vmatprep.subr.bf16.mxu0 0
      %2817 = vmatpush1.bf16.msra.mxu0 %v2797
      %2818 = vmatprep.subr.bf16.mxu0 0
      %2819 = vmatpush1.bf16.msra.mxu0 %v2798
      %2820 = vmatprep.subr.bf16.mxu0 0
      %2821 = vmatpush1.bf16.msra.mxu0 %v2799
      %2822 = vmatprep.subr.bf16.mxu0 0
      %2823 = vmatpush1.bf16.msra.mxu0 %v2800
      %2824 = vmatprep.subr.bf16.mxu0 0
      %2825 = vmatpush1.bf16.msra.mxu0 %v2801
      %2826 = vmatprep.subr.bf16.mxu0 0
      %2827 = vmatpush1.bf16.msra.mxu0 0
      %2828 = vmatprep.subr.bf16.mxu0 0
      %2829 = vmatpush1.bf16.msra.mxu0 0
      %2830 = vmatprep.subr.bf16.mxu0 0
      %2831 = vmatpush1.bf16.msra.mxu0 0
      %2832 = vmatprep.subr.bf16.mxu0 0
      %2833 = vmatpush1.bf16.msra.mxu0 0
      %2834 = vmatprep.subr.bf16.mxu0 0
      %2835 = vmatpush1.bf16.msra.mxu0 0
      %2836 = vmatprep.subr.bf16.mxu0 0
      %2837 = vmatpush1.bf16.msra.mxu0 0
      %2838 = vmatprep.subr.bf16.mxu0 0
      %2839 = vmatpush1.bf16.msra.mxu0 0
      %2840 = vmatprep.subr.bf16.mxu0 0
      %2841 = vmatpush1.bf16.msra.mxu0 0
      %2842 = vmatprep.mubr.bf16.mxu0 0
      %2843 = vmatmul.mubr.bf16.gmra.mrb[0].mxu0 %v2697
      %v2844 = vpop.f32.mrb[0].mxu0
      %v2845 = vadd.f32 0.0, %v2844
      %v2846 = vpop.f32.mrb[0].mxu0
      %v2847 = vpop.f32.mrb[0].mxu0
      %v2848 = vadd.f32 0.0, %v2847
      %v2849 = vpop.f32.mrb[0].mxu0
      %2850 = vmatprep.mubr.bf16.mxu0 0
      %2851 = vmatmul.mubr.bf16.gmra.mrb[0].mxu0 %v2698
      %v2852 = vpop.f32.mrb[0].mxu0
      %v2853 = vadd.f32 0.0, %v2852
      %v2854 = vpop.f32.mrb[0].mxu0
      %v2855 = vpop.f32.mrb[0].mxu0
      %v2856 = vadd.f32 0.0, %v2855
      %v2857 = vpop.f32.mrb[0].mxu0
      %2858 = vmatprep.mubr.bf16.mxu0 0
      %2859 = vmatmul.mubr.bf16.gmra.mrb[0].mxu0 %v2699
      %v2860 = vpop.f32.mrb[0].mxu0
      %v2861 = vadd.f32 0.0, %v2860
      %v2862 = vpop.f32.mrb[0].mxu0
      %v2863 = vpop.f32.mrb[0].mxu0
      %v2864 = vadd.f32 0.0, %v2863
      %v2865 = vpop.f32.mrb[0].mxu0
      %2866 = vmatprep.mubr.bf16.mxu0 0
      %2867 = vmatmul.mubr.bf16.gmra.mrb[0].mxu0 %v2700
      %v2868 = vpop.f32.mrb[0].mxu0
      %v2869 = vadd.f32 0.0, %v2868
      %v2870 = vpop.f32.mrb[0].mxu0
      %v2871 = vpop.f32.mrb[0].mxu0
      %v2872 = vadd.f32 0.0, %v2871
      %v2873 = vpop.f32.mrb[0].mxu0
      %2874 = vmatprep.mubr.bf16.mxu0 0
      %2875 = vmatmul.mubr.bf16.gmra.mrb[0].mxu0 %v2701
      %v2876 = vpop.f32.mrb[0].mxu0
      %v2877 = vadd.f32 0.0, %v2876
      %v2878 = vpop.f32.mrb[0].mxu0
      %v2879 = vpop.f32.mrb[0].mxu0
      %v2880 = vadd.f32 0.0, %v2879
      %v2881 = vpop.f32.mrb[0].mxu0
      %2882 = vmatprep.mubr.bf16.mxu0 0
      %2883 = vmatmul.mubr.bf16.gmra.mrb[0].mxu0 %v2702
      %v2884 = vpop.f32.mrb[0].mxu0
      %v2885 = vadd.f32 0.0, %v2884
      %v2886 = vpop.f32.mrb[0].mxu0
      %v2887 = vpop.f32.mrb[0].mxu0
      %v2888 = vadd.f32 0.0, %v2887
      %v2889 = vpop.f32.mrb[0].mxu0
      %2890 = vmatprep.mubr.bf16.mxu0 0
      %2891 = vmatmul.mubr.bf16.gmra.mrb[0].mxu0 %v2703
      %v2892 = vpop.f32.mrb[0].mxu0
      %v2893 = vadd.f32 0.0, %v2892
      %v2894 = vpop.f32.mrb[0].mxu0
      %v2895 = vpop.f32.mrb[0].mxu0
      %v2896 = vadd.f32 0.0, %v2895
      %v2897 = vpop.f32.mrb[0].mxu0
      %2898 = vmatprep.mubr.bf16.mxu0 0
      %2899 = vmatmul.mubr.bf16.gmra.mrb[0].mxu0 %v2704
      %v2900 = vpop.f32.mrb[0].mxu0
      %v2901 = vadd.f32 0.0, %v2900
      %v2902 = vpop.f32.mrb[0].mxu0
      %v2903 = vpop.f32.mrb[0].mxu0
      %v2904 = vadd.f32 0.0, %v2903
      %v2905 = vpop.f32.mrb[0].mxu0
      %2906 = vmatprep.mubr.bf16.mxu0 0
      %2907 = vmatmul.mubr.bf16.gmra.mrb[0].mxu0 %v2705
      %v2908 = vpop.f32.mrb[0].mxu0
      %v2909 = vadd.f32 0.0, %v2908
      %v2910 = vpop.f32.mrb[0].mxu0
      %v2911 = vpop.f32.mrb[0].mxu0
      %v2912 = vadd.f32 0.0, %v2911
      %v2913 = vpop.f32.mrb[0].mxu0
      %2914 = vmatprep.mubr.bf16.mxu0 0
      %2915 = vmatmul.mubr.bf16.gmra.mrb[0].mxu0 %v2706
      %v2916 = vpop.f32.mrb[0].mxu0
      %v2917 = vadd.f32 0.0, %v2916
      %v2918 = vpop.f32.mrb[0].mxu0
      %v2919 = vpop.f32.mrb[0].mxu0
      %v2920 = vadd.f32 0.0, %v2919
      %v2921 = vpop.f32.mrb[0].mxu0
      %2922 = vmatprep.mubr.bf16.mxu0 0
      %2923 = vmatmul.mubr.bf16.gmra.mrb[0].mxu0 %v2707
      %v2924 = vpop.f32.mrb[0].mxu0
      %v2925 = vadd.f32 0.0, %v2924
      %v2926 = vpop.f32.mrb[0].mxu0
      %v2927 = vpop.f32.mrb[0].mxu0
      %v2928 = vadd.f32 0.0, %v2927
      %v2929 = vpop.f32.mrb[0].mxu0
      %2930 = vmatprep.mubr.bf16.mxu0 0
      %2931 = vmatmul.mubr.bf16.gmra.mrb[0].mxu0 %v2708
      %v2932 = vpop.f32.mrb[0].mxu0
      %v2933 = vadd.f32 0.0, %v2932
      %v2934 = vpop.f32.mrb[0].mxu0
      %v2935 = vpop.f32.mrb[0].mxu0
      %v2936 = vadd.f32 0.0, %v2935
      %v2937 = vpop.f32.mrb[0].mxu0
      %2938 = vmatprep.mubr.bf16.mxu0 0
      %2939 = vmatmul.mubr.bf16.gmra.mrb[0].mxu0 %v2709
      %v2940 = vpop.f32.mrb[0].mxu0
      %v2941 = vadd.f32 0.0, %v2940
      %v2942 = vpop.f32.mrb[0].mxu0
      %v2943 = vpop.f32.mrb[0].mxu0
      %v2944 = vadd.f32 0.0, %v2943
      %v2945 = vpop.f32.mrb[0].mxu0
      %2946 = vmatprep.mubr.bf16.mxu0 0
      %2947 = vmatmul.mubr.bf16.gmra.mrb[0].mxu0 %v2710
      %v2948 = vpop.f32.mrb[0].mxu0
      %v2949 = vadd.f32 0.0, %v2948
      %v2950 = vpop.f32.mrb[0].mxu0
      %v2951 = vpop.f32.mrb[0].mxu0
      %v2952 = vadd.f32 0.0, %v2951
      %v2953 = vpop.f32.mrb[0].mxu0
      %2954 = vmatprep.mubr.bf16.mxu0 0
      %2955 = vmatmul.mubr.bf16.gmra.mrb[0].mxu0 %v2711
      %v2956 = vpop.f32.mrb[0].mxu0
      %v2957 = vadd.f32 0.0, %v2956
      %v2958 = vpop.f32.mrb[0].mxu0
      %v2959 = vpop.f32.mrb[0].mxu0
      %v2960 = vadd.f32 0.0, %v2959
      %v2961 = vpop.f32.mrb[0].mxu0
      %2962 = vmatprep.mubr.bf16.mxu0 0
      %2963 = vmatmul.mubr.bf16.gmra.mrb[0].mxu0 %v2712
      %v2964 = vpop.f32.mrb[0].mxu0
      %v2965 = vadd.f32 0.0, %v2964
      %v2966 = vpop.f32.mrb[0].mxu0
      %v2967 = vpop.f32.mrb[0].mxu0
      %v2968 = vadd.f32 0.0, %v2967
      %v2969 = vpop.f32.mrb[0].mxu0
      %2970 = vdwg.mxu0
      %v2971 = vadd.f32 %v2713, %v2845
      %v2972 = vadd.f32 %v2714, %v2848
      %v2973 = vadd.f32 %v2715, %v2853
      %v2974 = vadd.f32 %v2716, %v2856
      %v2975 = vadd.f32 %v2717, %v2861
      %v2976 = vadd.f32 %v2718, %v2864
      %v2977 = vadd.f32 %v2719, %v2869
      %v2978 = vadd.f32 %v2720, %v2872
      %v2979 = vadd.f32 %v2721, %v2877
      %v2980 = vadd.f32 %v2722, %v2880
      %v2981 = vadd.f32 %v2723, %v2885
      %v2982 = vadd.f32 %v2724, %v2888
      %v2983 = vadd.f32 %v2725, %v2893
      %v2984 = vadd.f32 %v2726, %v2896
      %v2985 = vadd.f32 %v2727, %v2901
      %v2986 = vadd.f32 %v2728, %v2904
      %v2987 = vadd.f32 %v2729, %v2909
      %v2988 = vadd.f32 %v2730, %v2912
      %v2989 = vadd.f32 %v2731, %v2917
      %v2990 = vadd.f32 %v2732, %v2920
      %v2991 = vadd.f32 %v2733, %v2925
      %v2992 = vadd.f32 %v2734, %v2928
      %v2993 = vadd.f32 %v2735, %v2933
      %v2994 = vadd.f32 %v2736, %v2936
      %v2995 = vadd.f32 %v2737, %v2941
      %v2996 = vadd.f32 %v2738, %v2944
      %v2997 = vadd.f32 %v2739, %v2949
      %v2998 = vadd.f32 %v2740, %v2952
      %v2999 = vadd.f32 %v2741, %v2957
      %v3000 = vadd.f32 %v2742, %v2960
      %v3001 = vadd.f32 %v2743, %v2965
      %v3002 = vadd.f32 %v2744, %v2968
      %3003 = vst [vmem:[#allocation3] sm:$0xff] %v2971
      %3004 = vst [vmem:[#allocation3 + $0x8] sm:$0xff] %v2972
      %3005 = vst [vmem:[#allocation3 + $0x10] sm:$0xff] %v2973
      %3006 = vst [vmem:[#allocation3 + $0x18] sm:$0xff] %v2974
      %3007 = vst [vmem:[#allocation3 + $0x20] sm:$0xff] %v2975
      %3008 = vst [vmem:[#allocation3 + $0x28] sm:$0xff] %v2976
      %3009 = vst [vmem:[#allocation3 + $0x30] sm:$0xff] %v2977
      %3010 = vst [vmem:[#allocation3 + $0x38] sm:$0xff] %v2978
      %3011 = vst [vmem:[#allocation3 + $0x40] sm:$0xff] %v2979
      %3012 = vst [vmem:[#allocation3 + $0x48] sm:$0xff] %v2980
      %3013 = vst [vmem:[#allocation3 + $0x50] sm:$0xff] %v2981
      %3014 = vst [vmem:[#allocation3 + $0x58] sm:$0xff] %v2982
      %3015 = vst [vmem:[#allocation3 + $0x60] sm:$0xff] %v2983
      %3016 = vst [vmem:[#allocation3 + $0x68] sm:$0xff] %v2984
      %3017 = vst [vmem:[#allocation3 + $0x70] sm:$0xff] %v2985
      %3018 = vst [vmem:[#allocation3 + $0x78] sm:$0xff] %v2986
      %3019 = vst [vmem:[#allocation3 + $0x80] sm:$0xff] %v2987
      %3020 = vst [vmem:[#allocation3 + $0x88] sm:$0xff] %v2988
      %3021 = vst [vmem:[#allocation3 + $0x90] sm:$0xff] %v2989
      %3022 = vst [vmem:[#allocation3 + $0x98] sm:$0xff] %v2990
      %3023 = vst [vmem:[#allocation3 + $0xa0] sm:$0xff] %v2991
      %3024 = vst [vmem:[#allocation3 + $0xa8] sm:$0xff] %v2992
      %3025 = vst [vmem:[#allocation3 + $0xb0] sm:$0xff] %v2993
      %3026 = vst [vmem:[#allocation3 + $0xb8] sm:$0xff] %v2994
      %3027 = vst [vmem:[#allocation3 + $0xc0] sm:$0xff] %v2995
      %3028 = vst [vmem:[#allocation3 + $0xc8] sm:$0xff] %v2996
      %3029 = vst [vmem:[#allocation3 + $0xd0] sm:$0xff] %v2997
      %3030 = vst [vmem:[#allocation3 + $0xd8] sm:$0xff] %v2998
      %3031 = vst [vmem:[#allocation3 + $0xe0] sm:$0xff] %v2999
      %3032 = vst [vmem:[#allocation3 + $0xe8] sm:$0xff] %v3000
      %3033 = vst [vmem:[#allocation3 + $0xf0] sm:$0xff] %v3001
      %3034 = vst [vmem:[#allocation3 + $0xf8] sm:$0xff] %v3002
      %v3035 = vld [vmem:[%s2664 + $0x1] sm:$0xff]
      %v3036 = vld [vmem:[%s2664 + $0x9] sm:$0xff]
      %v3037 = vld [vmem:[%s2664 + $0x19] sm:$0xff]
      %v3038 = vld [vmem:[%s2664 + $0x21] sm:$0xff]
      %v3039 = vld [vmem:[%s2664 + $0x31] sm:$0xff]
      %v3040 = vld [vmem:[%s2664 + $0x39] sm:$0xff]
      %v3041 = vld [vmem:[%s2664 + $0x49] sm:$0xff]
      %v3042 = vld [vmem:[%s2664 + $0x51] sm:$0xff]
      %v3043 = vld [vmem:[%s2664 + $0x61] sm:$0xff]
      %v3044 = vld [vmem:[%s2664 + $0x69] sm:$0xff]
      %v3045 = vld [vmem:[%s2664 + $0x79] sm:$0xff]
      %v3046 = vld [vmem:[%s2664 + $0x81] sm:$0xff]
      %v3047 = vld [vmem:[%s2664 + $0x91] sm:$0xff]
      %v3048 = vld [vmem:[%s2664 + $0x99] sm:$0xff]
      %v3049 = vld [vmem:[%s2664 + $0xa9] sm:$0xff]
      %v3050 = vld [vmem:[%s2664 + $0xb1] sm:$0xff]
      %v3051 = vld [vmem:[%s2664 + $0xc1] sm:$0xff]
      %v3052 = vld [vmem:[%s2664 + $0xc9] sm:$0xff]
      %v3053 = vld [vmem:[%s2664 + $0xd9] sm:$0xff]
      %v3054 = vld [vmem:[%s2664 + $0xe1] sm:$0xff]
      %v3055 = vld [vmem:[%s2664 + $0xf1] sm:$0xff]
      %v3056 = vld [vmem:[%s2664 + $0xf9] sm:$0xff]
      %v3057 = vld [vmem:[%s2664 + $0x109] sm:$0xff]
      %v3058 = vld [vmem:[%s2664 + $0x111] sm:$0xff]
      %v3059 = vld [vmem:[%s2664 + $0x121] sm:$0xff]
      %v3060 = vld [vmem:[%s2664 + $0x129] sm:$0xff]
      %v3061 = vld [vmem:[%s2664 + $0x139] sm:$0xff]
      %v3062 = vld [vmem:[%s2664 + $0x141] sm:$0xff]
      %v3063 = vld [vmem:[%s2664 + $0x151] sm:$0xff]
      %v3064 = vld [vmem:[%s2664 + $0x159] sm:$0xff]
      %v3065 = vld [vmem:[%s2664 + $0x169] sm:$0xff]
      %v3066 = vld [vmem:[%s2664 + $0x171] sm:$0xff]
      %v3067 = vpack.c.bf16 %v3036, %v3035
      %v3068 = vpack.c.bf16 %v3038, %v3037
      %v3069 = vpack.c.bf16 %v3040, %v3039
      %v3070 = vpack.c.bf16 %v3042, %v3041
      %v3071 = vpack.c.bf16 %v3044, %v3043
      %v3072 = vpack.c.bf16 %v3046, %v3045
      %v3073 = vpack.c.bf16 %v3048, %v3047
      %v3074 = vpack.c.bf16 %v3050, %v3049
      %v3075 = vpack.c.bf16 %v3052, %v3051
      %v3076 = vpack.c.bf16 %v3054, %v3053
      %v3077 = vpack.c.bf16 %v3056, %v3055
      %v3078 = vpack.c.bf16 %v3058, %v3057
      %v3079 = vpack.c.bf16 %v3060, %v3059
      %v3080 = vpack.c.bf16 %v3062, %v3061
      %v3081 = vpack.c.bf16 %v3064, %v3063
      %v3082 = vpack.c.bf16 %v3066, %v3065
      %v3083 = vld [vmem:[#allocation3] sm:$0xff]
      %v3084 = vld [vmem:[#allocation3 + $0x8] sm:$0xff]
      %v3085 = vld [vmem:[#allocation3 + $0x10] sm:$0xff]
      %v3086 = vld [vmem:[#allocation3 + $0x18] sm:$0xff]
      %v3087 = vld [vmem:[#allocation3 + $0x20] sm:$0xff]
      %v3088 = vld [vmem:[#allocation3 + $0x28] sm:$0xff]
      %v3089 = vld [vmem:[#allocation3 + $0x30] sm:$0xff]
      %v3090 = vld [vmem:[#allocation3 + $0x38] sm:$0xff]
      %v3091 = vld [vmem:[#allocation3 + $0x40] sm:$0xff]
      %v3092 = vld [vmem:[#allocation3 + $0x48] sm:$0xff]
      %v3093 = vld [vmem:[#allocation3 + $0x50] sm:$0xff]
      %v3094 = vld [vmem:[#allocation3 + $0x58] sm:$0xff]
      %v3095 = vld [vmem:[#allocation3 + $0x60] sm:$0xff]
      %v3096 = vld [vmem:[#allocation3 + $0x68] sm:$0xff]
      %v3097 = vld [vmem:[#allocation3 + $0x70] sm:$0xff]
      %v3098 = vld [vmem:[#allocation3 + $0x78] sm:$0xff]
      %v3099 = vld [vmem:[#allocation3 + $0x80] sm:$0xff]
      %v3100 = vld [vmem:[#allocation3 + $0x88] sm:$0xff]
      %v3101 = vld [vmem:[#allocation3 + $0x90] sm:$0xff]
      %v3102 = vld [vmem:[#allocation3 + $0x98] sm:$0xff]
      %v3103 = vld [vmem:[#allocation3 + $0xa0] sm:$0xff]
      %v3104 = vld [vmem:[#allocation3 + $0xa8] sm:$0xff]
      %v3105 = vld [vmem:[#allocation3 + $0xb0] sm:$0xff]
      %v3106 = vld [vmem:[#allocation3 + $0xb8] sm:$0xff]
      %v3107 = vld [vmem:[#allocation3 + $0xc0] sm:$0xff]
      %v3108 = vld [vmem:[#allocation3 + $0xc8] sm:$0xff]
      %v3109 = vld [vmem:[#allocation3 + $0xd0] sm:$0xff]
      %v3110 = vld [vmem:[#allocation3 + $0xd8] sm:$0xff]
      %v3111 = vld [vmem:[#allocation3 + $0xe0] sm:$0xff]
      %v3112 = vld [vmem:[#allocation3 + $0xe8] sm:$0xff]
      %v3113 = vld [vmem:[#allocation3 + $0xf0] sm:$0xff]
      %v3114 = vld [vmem:[#allocation3 + $0xf8] sm:$0xff]
      %s3115 = scalar_lea.vmem %s1, 448
      %v3116 = vld [vmem:[%s3115] sm:$0xf]
      %v3117 = vld [vmem:[%s3115 + $0x4] sm:$0xf]
      %v3118 = vld [vmem:[%s3115 + $0x8] sm:$0xf]
      %v3119 = vld [vmem:[%s3115 + $0xc] sm:$0xf]
      %v3120 = vld [vmem:[%s3115 + $0x10] sm:$0xf]
      %v3121 = vld [vmem:[%s3115 + $0x14] sm:$0xf]
      %v3122 = vld [vmem:[%s3115 + $0x18] sm:$0xf]
      %v3123 = vld [vmem:[%s3115 + $0x1c] sm:$0xf]
      %v3124 = vld [vmem:[%s3115 + $0x20] sm:$0xf]
      %v3125 = vld [vmem:[%s3115 + $0x24] sm:$0xf]
      %v3126 = vld [vmem:[%s3115 + $0x28] sm:$0xf]
      %v3127 = vld [vmem:[%s3115 + $0x2c] sm:$0xf]
      %v3128 = vld [vmem:[%s3115 + $0x30] sm:$0xf]
      %v3129 = vld [vmem:[%s3115 + $0x34] sm:$0xf]
      %v3130 = vld [vmem:[%s3115 + $0x38] sm:$0xf]
      %v3131 = vld [vmem:[%s3115 + $0x3c] sm:$0xf]
      %v3148 = vunpack.c.l.b16 %v3116
      %v3149 = vunpack.c.l.b16 %v3117
      %v3150 = vunpack.c.l.b16 %v3118
      %v3151 = vunpack.c.l.b16 %v3119
      %v3152 = vunpack.c.l.b16 %v3120
      %v3153 = vunpack.c.l.b16 %v3121
      %v3154 = vunpack.c.l.b16 %v3122
      %v3155 = vunpack.c.l.b16 %v3123
      %v3156 = vunpack.c.l.b16 %v3124
      %v3157 = vunpack.c.l.b16 %v3125
      %v3158 = vunpack.c.l.b16 %v3126
      %v3159 = vunpack.c.l.b16 %v3127
      %v3160 = vunpack.c.l.b16 %v3128
      %v3161 = vunpack.c.l.b16 %v3129
      %v3162 = vunpack.c.l.b16 %v3130
      %v3163 = vunpack.c.l.b16 %v3131
      %v3164 = vpack.c.b16 %v3149, %v3148
      %v3165 = vpack.c.b16 %v3151, %v3150
      %v3166 = vpack.c.b16 %v3153, %v3152
      %v3167 = vpack.c.b16 %v3155, %v3154
      %v3168 = vpack.c.b16 %v3157, %v3156
      %v3169 = vpack.c.b16 %v3159, %v3158
      %v3170 = vpack.c.b16 %v3161, %v3160
      %v3171 = vpack.c.b16 %v3163, %v3162
      %3180 = vmatprep.subr.bf16.mxu0 0
      %3181 = vmatpush1.bf16.msra.mxu0 %v3164
      %3182 = vmatprep.subr.bf16.mxu0 0
      %3183 = vmatpush1.bf16.msra.mxu0 %v3165
      %3184 = vmatprep.subr.bf16.mxu0 0
      %3185 = vmatpush1.bf16.msra.mxu0 %v3166
      %3186 = vmatprep.subr.bf16.mxu0 0
      %3187 = vmatpush1.bf16.msra.mxu0 %v3167
      %3188 = vmatprep.subr.bf16.mxu0 0
      %3189 = vmatpush1.bf16.msra.mxu0 %v3168
      %3190 = vmatprep.subr.bf16.mxu0 0
      %3191 = vmatpush1.bf16.msra.mxu0 %v3169
      %3192 = vmatprep.subr.bf16.mxu0 0
      %3193 = vmatpush1.bf16.msra.mxu0 %v3170
      %3194 = vmatprep.subr.bf16.mxu0 0
      %3195 = vmatpush1.bf16.msra.mxu0 %v3171
      %3196 = vmatprep.subr.bf16.mxu0 0
      %3197 = vmatpush1.bf16.msra.mxu0 0
      %3198 = vmatprep.subr.bf16.mxu0 0
      %3199 = vmatpush1.bf16.msra.mxu0 0
      %3200 = vmatprep.subr.bf16.mxu0 0
      %3201 = vmatpush1.bf16.msra.mxu0 0
      %3202 = vmatprep.subr.bf16.mxu0 0
      %3203 = vmatpush1.bf16.msra.mxu0 0
      %3204 = vmatprep.subr.bf16.mxu0 0
      %3205 = vmatpush1.bf16.msra.mxu0 0
      %3206 = vmatprep.subr.bf16.mxu0 0
      %3207 = vmatpush1.bf16.msra.mxu0 0
      %3208 = vmatprep.subr.bf16.mxu0 0
      %3209 = vmatpush1.bf16.msra.mxu0 0
      %3210 = vmatprep.subr.bf16.mxu0 0
      %3211 = vmatpush1.bf16.msra.mxu0 0
      %3212 = vmatprep.mubr.bf16.mxu0 0
      %3213 = vmatmul.mubr.bf16.gmra.mrb[0].mxu0 %v3067
      %v3214 = vpop.f32.mrb[0].mxu0
      %v3215 = vadd.f32 0.0, %v3214
      %v3216 = vpop.f32.mrb[0].mxu0
      %v3217 = vpop.f32.mrb[0].mxu0
      %v3218 = vadd.f32 0.0, %v3217
      %v3219 = vpop.f32.mrb[0].mxu0
      %3220 = vmatprep.mubr.bf16.mxu0 0
      %3221 = vmatmul.mubr.bf16.gmra.mrb[0].mxu0 %v3068
      %v3222 = vpop.f32.mrb[0].mxu0
      %v3223 = vadd.f32 0.0, %v3222
      %v3224 = vpop.f32.mrb[0].mxu0
      %v3225 = vpop.f32.mrb[0].mxu0
      %v3226 = vadd.f32 0.0, %v3225
      %v3227 = vpop.f32.mrb[0].mxu0
      %3228 = vmatprep.mubr.bf16.mxu0 0
      %3229 = vmatmul.mubr.bf16.gmra.mrb[0].mxu0 %v3069
      %v3230 = vpop.f32.mrb[0].mxu0
      %v3231 = vadd.f32 0.0, %v3230
      %v3232 = vpop.f32.mrb[0].mxu0
      %v3233 = vpop.f32.mrb[0].mxu0
      %v3234 = vadd.f32 0.0, %v3233
      %v3235 = vpop.f32.mrb[0].mxu0
      %3236 = vmatprep.mubr.bf16.mxu0 0
      %3237 = vmatmul.mubr.bf16.gmra.mrb[0].mxu0 %v3070
      %v3238 = vpop.f32.mrb[0].mxu0
      %v3239 = vadd.f32 0.0, %v3238
      %v3240 = vpop.f32.mrb[0].mxu0
      %v3241 = vpop.f32.mrb[0].mxu0
      %v3242 = vadd.f32 0.0, %v3241
      %v3243 = vpop.f32.mrb[0].mxu0
      %3244 = vmatprep.mubr.bf16.mxu0 0
      %3245 = vmatmul.mubr.bf16.gmra.mrb[0].mxu0 %v3071
      %v3246 = vpop.f32.mrb[0].mxu0
      %v3247 = vadd.f32 0.0, %v3246
      %v3248 = vpop.f32.mrb[0].mxu0
      %v3249 = vpop.f32.mrb[0].mxu0
      %v3250 = vadd.f32 0.0, %v3249
      %v3251 = vpop.f32.mrb[0].mxu0
      %3252 = vmatprep.mubr.bf16.mxu0 0
      %3253 = vmatmul.mubr.bf16.gmra.mrb[0].mxu0 %v3072
      %v3254 = vpop.f32.mrb[0].mxu0
      %v3255 = vadd.f32 0.0, %v3254
      %v3256 = vpop.f32.mrb[0].mxu0
      %v3257 = vpop.f32.mrb[0].mxu0
      %v3258 = vadd.f32 0.0, %v3257
      %v3259 = vpop.f32.mrb[0].mxu0
      %3260 = vmatprep.mubr.bf16.mxu0 0
      %3261 = vmatmul.mubr.bf16.gmra.mrb[0].mxu0 %v3073
      %v3262 = vpop.f32.mrb[0].mxu0
      %v3263 = vadd.f32 0.0, %v3262
      %v3264 = vpop.f32.mrb[0].mxu0
      %v3265 = vpop.f32.mrb[0].mxu0
      %v3266 = vadd.f32 0.0, %v3265
      %v3267 = vpop.f32.mrb[0].mxu0
      %3268 = vmatprep.mubr.bf16.mxu0 0
      %3269 = vmatmul.mubr.bf16.gmra.mrb[0].mxu0 %v3074
      %v3270 = vpop.f32.mrb[0].mxu0
      %v3271 = vadd.f32 0.0, %v3270
      %v3272 = vpop.f32.mrb[0].mxu0
      %v3273 = vpop.f32.mrb[0].mxu0
      %v3274 = vadd.f32 0.0, %v3273
      %v3275 = vpop.f32.mrb[0].mxu0
      %3276 = vmatprep.mubr.bf16.mxu0 0
      %3277 = vmatmul.mubr.bf16.gmra.mrb[0].mxu0 %v3075
      %v3278 = vpop.f32.mrb[0].mxu0
      %v3279 = vadd.f32 0.0, %v3278
      %v3280 = vpop.f32.mrb[0].mxu0
      %v3281 = vpop.f32.mrb[0].mxu0
      %v3282 = vadd.f32 0.0, %v3281
      %v3283 = vpop.f32.mrb[0].mxu0
      %3284 = vmatprep.mubr.bf16.mxu0 0
      %3285 = vmatmul.mubr.bf16.gmra.mrb[0].mxu0 %v3076
      %v3286 = vpop.f32.mrb[0].mxu0
      %v3287 = vadd.f32 0.0, %v3286
      %v3288 = vpop.f32.mrb[0].mxu0
      %v3289 = vpop.f32.mrb[0].mxu0
      %v3290 = vadd.f32 0.0, %v3289
      %v3291 = vpop.f32.mrb[0].mxu0
      %3292 = vmatprep.mubr.bf16.mxu0 0
      %3293 = vmatmul.mubr.bf16.gmra.mrb[0].mxu0 %v3077
      %v3294 = vpop.f32.mrb[0].mxu0
      %v3295 = vadd.f32 0.0, %v3294
      %v3296 = vpop.f32.mrb[0].mxu0
      %v3297 = vpop.f32.mrb[0].mxu0
      %v3298 = vadd.f32 0.0, %v3297
      %v3299 = vpop.f32.mrb[0].mxu0
      %3300 = vmatprep.mubr.bf16.mxu0 0
      %3301 = vmatmul.mubr.bf16.gmra.mrb[0].mxu0 %v3078
      %v3302 = vpop.f32.mrb[0].mxu0
      %v3303 = vadd.f32 0.0, %v3302
      %v3304 = vpop.f32.mrb[0].mxu0
      %v3305 = vpop.f32.mrb[0].mxu0
      %v3306 = vadd.f32 0.0, %v3305
      %v3307 = vpop.f32.mrb[0].mxu0
      %3308 = vmatprep.mubr.bf16.mxu0 0
      %3309 = vmatmul.mubr.bf16.gmra.mrb[0].mxu0 %v3079
      %v3310 = vpop.f32.mrb[0].mxu0
      %v3311 = vadd.f32 0.0, %v3310
      %v3312 = vpop.f32.mrb[0].mxu0
      %v3313 = vpop.f32.mrb[0].mxu0
      %v3314 = vadd.f32 0.0, %v3313
      %v3315 = vpop.f32.mrb[0].mxu0
      %3316 = vmatprep.mubr.bf16.mxu0 0
      %3317 = vmatmul.mubr.bf16.gmra.mrb[0].mxu0 %v3080
      %v3318 = vpop.f32.mrb[0].mxu0
      %v3319 = vadd.f32 0.0, %v3318
      %v3320 = vpop.f32.mrb[0].mxu0
      %v3321 = vpop.f32.mrb[0].mxu0
      %v3322 = vadd.f32 0.0, %v3321
      %v3323 = vpop.f32.mrb[0].mxu0
      %3324 = vmatprep.mubr.bf16.mxu0 0
      %3325 = vmatmul.mubr.bf16.gmra.mrb[0].mxu0 %v3081
      %v3326 = vpop.f32.mrb[0].mxu0
      %v3327 = vadd.f32 0.0, %v3326
      %v3328 = vpop.f32.mrb[0].mxu0
      %v3329 = vpop.f32.mrb[0].mxu0
      %v3330 = vadd.f32 0.0, %v3329
      %v3331 = vpop.f32.mrb[0].mxu0
      %3332 = vmatprep.mubr.bf16.mxu0 0
      %3333 = vmatmul.mubr.bf16.gmra.mrb[0].mxu0 %v3082
      %v3334 = vpop.f32.mrb[0].mxu0
      %v3335 = vadd.f32 0.0, %v3334
      %v3336 = vpop.f32.mrb[0].mxu0
      %v3337 = vpop.f32.mrb[0].mxu0
      %v3338 = vadd.f32 0.0, %v3337
      %v3339 = vpop.f32.mrb[0].mxu0
      %3340 = vdwg.mxu0
      %v3341 = vadd.f32 %v3083, %v3215
      %v3342 = vadd.f32 %v3084, %v3218
      %v3343 = vadd.f32 %v3085, %v3223
      %v3344 = vadd.f32 %v3086, %v3226
      %v3345 = vadd.f32 %v3087, %v3231
      %v3346 = vadd.f32 %v3088, %v3234
      %v3347 = vadd.f32 %v3089, %v3239
      %v3348 = vadd.f32 %v3090, %v3242
      %v3349 = vadd.f32 %v3091, %v3247
      %v3350 = vadd.f32 %v3092, %v3250
      %v3351 = vadd.f32 %v3093, %v3255
      %v3352 = vadd.f32 %v3094, %v3258
      %v3353 = vadd.f32 %v3095, %v3263
      %v3354 = vadd.f32 %v3096, %v3266
      %v3355 = vadd.f32 %v3097, %v3271
      %v3356 = vadd.f32 %v3098, %v3274
      %v3357 = vadd.f32 %v3099, %v3279
      %v3358 = vadd.f32 %v3100, %v3282
      %v3359 = vadd.f32 %v3101, %v3287
      %v3360 = vadd.f32 %v3102, %v3290
      %v3361 = vadd.f32 %v3103, %v3295
      %v3362 = vadd.f32 %v3104, %v3298
      %v3363 = vadd.f32 %v3105, %v3303
      %v3364 = vadd.f32 %v3106, %v3306
      %v3365 = vadd.f32 %v3107, %v3311
      %v3366 = vadd.f32 %v3108, %v3314
      %v3367 = vadd.f32 %v3109, %v3319
      %v3368 = vadd.f32 %v3110, %v3322
      %v3369 = vadd.f32 %v3111, %v3327
      %v3370 = vadd.f32 %v3112, %v3330
      %v3371 = vadd.f32 %v3113, %v3335
      %v3372 = vadd.f32 %v3114, %v3338
      %3373 = vst [vmem:[#allocation3] sm:$0xff] %v3341
      %3374 = vst [vmem:[#allocation3 + $0x8] sm:$0xff] %v3342
      %3375 = vst [vmem:[#allocation3 + $0x10] sm:$0xff] %v3343
      %3376 = vst [vmem:[#allocation3 + $0x18] sm:$0xff] %v3344
      %3377 = vst [vmem:[#allocation3 + $0x20] sm:$0xff] %v3345
      %3378 = vst [vmem:[#allocation3 + $0x28] sm:$0xff] %v3346
      %3379 = vst [vmem:[#allocation3 + $0x30] sm:$0xff] %v3347
      %3380 = vst [vmem:[#allocation3 + $0x38] sm:$0xff] %v3348
      %3381 = vst [vmem:[#allocation3 + $0x40] sm:$0xff] %v3349
      %3382 = vst [vmem:[#allocation3 + $0x48] sm:$0xff] %v3350
      %3383 = vst [vmem:[#allocation3 + $0x50] sm:$0xff] %v3351
      %3384 = vst [vmem:[#allocation3 + $0x58] sm:$0xff] %v3352
      %3385 = vst [vmem:[#allocation3 + $0x60] sm:$0xff] %v3353
      %3386 = vst [vmem:[#allocation3 + $0x68] sm:$0xff] %v3354
      %3387 = vst [vmem:[#allocation3 + $0x70] sm:$0xff] %v3355
      %3388 = vst [vmem:[#allocation3 + $0x78] sm:$0xff] %v3356
      %3389 = vst [vmem:[#allocation3 + $0x80] sm:$0xff] %v3357
      %3390 = vst [vmem:[#allocation3 + $0x88] sm:$0xff] %v3358
      %3391 = vst [vmem:[#allocation3 + $0x90] sm:$0xff] %v3359
      %3392 = vst [vmem:[#allocation3 + $0x98] sm:$0xff] %v3360
      %3393 = vst [vmem:[#allocation3 + $0xa0] sm:$0xff] %v3361
      %3394 = vst [vmem:[#allocation3 + $0xa8] sm:$0xff] %v3362
      %3395 = vst [vmem:[#allocation3 + $0xb0] sm:$0xff] %v3363
      %3396 = vst [vmem:[#allocation3 + $0xb8] sm:$0xff] %v3364
      %3397 = vst [vmem:[#allocation3 + $0xc0] sm:$0xff] %v3365
      %3398 = vst [vmem:[#allocation3 + $0xc8] sm:$0xff] %v3366
      %3399 = vst [vmem:[#allocation3 + $0xd0] sm:$0xff] %v3367
      %3400 = vst [vmem:[#allocation3 + $0xd8] sm:$0xff] %v3368
      %3401 = vst [vmem:[#allocation3 + $0xe0] sm:$0xff] %v3369
      %3402 = vst [vmem:[#allocation3 + $0xe8] sm:$0xff] %v3370
      %3403 = vst [vmem:[#allocation3 + $0xf0] sm:$0xff] %v3371
      %3404 = vst [vmem:[#allocation3 + $0xf8] sm:$0xff] %v3372
      %v3405 = vld [vmem:[%s2664 + $0x2] sm:$0xff]
      %v3406 = vld [vmem:[%s2664 + $0xa] sm:$0xff]
      %v3407 = vld [vmem:[%s2664 + $0x1a] sm:$0xff]
      %v3408 = vld [vmem:[%s2664 + $0x22] sm:$0xff]
      %v3409 = vld [vmem:[%s2664 + $0x32] sm:$0xff]
      %v3410 = vld [vmem:[%s2664 + $0x3a] sm:$0xff]
      %v3411 = vld [vmem:[%s2664 + $0x4a] sm:$0xff]
      %v3412 = vld [vmem:[%s2664 + $0x52] sm:$0xff]
      %v3413 = vld [vmem:[%s2664 + $0x62] sm:$0xff]
      %v3414 = vld [vmem:[%s2664 + $0x6a] sm:$0xff]
      %v3415 = vld [vmem:[%s2664 + $0x7a] sm:$0xff]
      %v3416 = vld [vmem:[%s2664 + $0x82] sm:$0xff]
      %v3417 = vld [vmem:[%s2664 + $0x92] sm:$0xff]
      %v3418 = vld [vmem:[%s2664 + $0x9a] sm:$0xff]
      %v3419 = vld [vmem:[%s2664 + $0xaa] sm:$0xff]
      %v3420 = vld [vmem:[%s2664 + $0xb2] sm:$0xff]
      %v3421 = vld [vmem:[%s2664 + $0xc2] sm:$0xff]
      %v3422 = vld [vmem:[%s2664 + $0xca] sm:$0xff]
      %v3423 = vld [vmem:[%s2664 + $0xda] sm:$0xff]
      %v3424 = vld [vmem:[%s2664 + $0xe2] sm:$0xff]
      %v3425 = vld [vmem:[%s2664 + $0xf2] sm:$0xff]
      %v3426 = vld [vmem:[%s2664 + $0xfa] sm:$0xff]
      %v3427 = vld [vmem:[%s2664 + $0x10a] sm:$0xff]
      %v3428 = vld [vmem:[%s2664 + $0x112] sm:$0xff]
      %v3429 = vld [vmem:[%s2664 + $0x122] sm:$0xff]
      %v3430 = vld [vmem:[%s2664 + $0x12a] sm:$0xff]
      %v3431 = vld [vmem:[%s2664 + $0x13a] sm:$0xff]
      %v3432 = vld [vmem:[%s2664 + $0x142] sm:$0xff]
      %v3433 = vld [vmem:[%s2664 + $0x152] sm:$0xff]
      %v3434 = vld [vmem:[%s2664 + $0x15a] sm:$0xff]
      %v3435 = vld [vmem:[%s2664 + $0x16a] sm:$0xff]
      %v3436 = vld [vmem:[%s2664 + $0x172] sm:$0xff]
      %v3437 = vpack.c.bf16 %v3406, %v3405
      %v3438 = vpack.c.bf16 %v3408, %v3407
      %v3439 = vpack.c.bf16 %v3410, %v3409
      %v3440 = vpack.c.bf16 %v3412, %v3411
      %v3441 = vpack.c.bf16 %v3414, %v3413
      %v3442 = vpack.c.bf16 %v3416, %v3415
      %v3443 = vpack.c.bf16 %v3418, %v3417
      %v3444 = vpack.c.bf16 %v3420, %v3419
      %v3445 = vpack.c.bf16 %v3422, %v3421
      %v3446 = vpack.c.bf16 %v3424, %v3423
      %v3447 = vpack.c.bf16 %v3426, %v3425
      %v3448 = vpack.c.bf16 %v3428, %v3427
      %v3449 = vpack.c.bf16 %v3430, %v3429
      %v3450 = vpack.c.bf16 %v3432, %v3431
      %v3451 = vpack.c.bf16 %v3434, %v3433
      %v3452 = vpack.c.bf16 %v3436, %v3435
      %v3453 = vld [vmem:[#allocation3] sm:$0xff]
      %v3454 = vld [vmem:[#allocation3 + $0x8] sm:$0xff]
      %v3455 = vld [vmem:[#allocation3 + $0x10] sm:$0xff]
      %v3456 = vld [vmem:[#allocation3 + $0x18] sm:$0xff]
      %v3457 = vld [vmem:[#allocation3 + $0x20] sm:$0xff]
      %v3458 = vld [vmem:[#allocation3 + $0x28] sm:$0xff]
      %v3459 = vld [vmem:[#allocation3 + $0x30] sm:$0xff]
      %v3460 = vld [vmem:[#allocation3 + $0x38] sm:$0xff]
      %v3461 = vld [vmem:[#allocation3 + $0x40] sm:$0xff]
      %v3462 = vld [vmem:[#allocation3 + $0x48] sm:$0xff]
      %v3463 = vld [vmem:[#allocation3 + $0x50] sm:$0xff]
      %v3464 = vld [vmem:[#allocation3 + $0x58] sm:$0xff]
      %v3465 = vld [vmem:[#allocation3 + $0x60] sm:$0xff]
      %v3466 = vld [vmem:[#allocation3 + $0x68] sm:$0xff]
      %v3467 = vld [vmem:[#allocation3 + $0x70] sm:$0xff]
      %v3468 = vld [vmem:[#allocation3 + $0x78] sm:$0xff]
      %v3469 = vld [vmem:[#allocation3 + $0x80] sm:$0xff]
      %v3470 = vld [vmem:[#allocation3 + $0x88] sm:$0xff]
      %v3471 = vld [vmem:[#allocation3 + $0x90] sm:$0xff]
      %v3472 = vld [vmem:[#allocation3 + $0x98] sm:$0xff]
      %v3473 = vld [vmem:[#allocation3 + $0xa0] sm:$0xff]
      %v3474 = vld [vmem:[#allocation3 + $0xa8] sm:$0xff]
      %v3475 = vld [vmem:[#allocation3 + $0xb0] sm:$0xff]
      %v3476 = vld [vmem:[#allocation3 + $0xb8] sm:$0xff]
      %v3477 = vld [vmem:[#allocation3 + $0xc0] sm:$0xff]
      %v3478 = vld [vmem:[#allocation3 + $0xc8] sm:$0xff]
      %v3479 = vld [vmem:[#allocation3 + $0xd0] sm:$0xff]
      %v3480 = vld [vmem:[#allocation3 + $0xd8] sm:$0xff]
      %v3481 = vld [vmem:[#allocation3 + $0xe0] sm:$0xff]
      %v3482 = vld [vmem:[#allocation3 + $0xe8] sm:$0xff]
      %v3483 = vld [vmem:[#allocation3 + $0xf0] sm:$0xff]
      %v3484 = vld [vmem:[#allocation3 + $0xf8] sm:$0xff]
      %s3485 = scalar_lea.vmem %s1, 512
      %v3486 = vld [vmem:[%s3485] sm:$0xf]
      %v3487 = vld [vmem:[%s3485 + $0x4] sm:$0xf]
      %v3488 = vld [vmem:[%s3485 + $0x8] sm:$0xf]
      %v3489 = vld [vmem:[%s3485 + $0xc] sm:$0xf]
      %v3490 = vld [vmem:[%s3485 + $0x10] sm:$0xf]
      %v3491 = vld [vmem:[%s3485 + $0x14] sm:$0xf]
      %v3492 = vld [vmem:[%s3485 + $0x18] sm:$0xf]
      %v3493 = vld [vmem:[%s3485 + $0x1c] sm:$0xf]
      %v3494 = vld [vmem:[%s3485 + $0x20] sm:$0xf]
      %v3495 = vld [vmem:[%s3485 + $0x24] sm:$0xf]
      %v3496 = vld [vmem:[%s3485 + $0x28] sm:$0xf]
      %v3497 = vld [vmem:[%s3485 + $0x2c] sm:$0xf]
      %v3498 = vld [vmem:[%s3485 + $0x30] sm:$0xf]
      %v3499 = vld [vmem:[%s3485 + $0x34] sm:$0xf]
      %v3500 = vld [vmem:[%s3485 + $0x38] sm:$0xf]
      %v3501 = vld [vmem:[%s3485 + $0x3c] sm:$0xf]
      %v3518 = vunpack.c.l.b16 %v3486
      %v3519 = vunpack.c.l.b16 %v3487
      %v3520 = vunpack.c.l.b16 %v3488
      %v3521 = vunpack.c.l.b16 %v3489
      %v3522 = vunpack.c.l.b16 %v3490
      %v3523 = vunpack.c.l.b16 %v3491
      %v3524 = vunpack.c.l.b16 %v3492
      %v3525 = vunpack.c.l.b16 %v3493
      %v3526 = vunpack.c.l.b16 %v3494
      %v3527 = vunpack.c.l.b16 %v3495
      %v3528 = vunpack.c.l.b16 %v3496
      %v3529 = vunpack.c.l.b16 %v3497
      %v3530 = vunpack.c.l.b16 %v3498
      %v3531 = vunpack.c.l.b16 %v3499
      %v3532 = vunpack.c.l.b16 %v3500
      %v3533 = vunpack.c.l.b16 %v3501
      %v3534 = vpack.c.b16 %v3519, %v3518
      %v3535 = vpack.c.b16 %v3521, %v3520
      %v3536 = vpack.c.b16 %v3523, %v3522
      %v3537 = vpack.c.b16 %v3525, %v3524
      %v3538 = vpack.c.b16 %v3527, %v3526
      %v3539 = vpack.c.b16 %v3529, %v3528
      %v3540 = vpack.c.b16 %v3531, %v3530
      %v3541 = vpack.c.b16 %v3533, %v3532
      %3550 = vmatprep.subr.bf16.mxu0 0
      %3551 = vmatpush1.bf16.msra.mxu0 %v3534
      %3552 = vmatprep.subr.bf16.mxu0 0
      %3553 = vmatpush1.bf16.msra.mxu0 %v3535
      %3554 = vmatprep.subr.bf16.mxu0 0
      %3555 = vmatpush1.bf16.msra.mxu0 %v3536
      %3556 = vmatprep.subr.bf16.mxu0 0
      %3557 = vmatpush1.bf16.msra.mxu0 %v3537
      %3558 = vmatprep.subr.bf16.mxu0 0
      %3559 = vmatpush1.bf16.msra.mxu0 %v3538
      %3560 = vmatprep.subr.bf16.mxu0 0
      %3561 = vmatpush1.bf16.msra.mxu0 %v3539
      %3562 = vmatprep.subr.bf16.mxu0 0
      %3563 = vmatpush1.bf16.msra.mxu0 %v3540
      %3564 = vmatprep.subr.bf16.mxu0 0
      %3565 = vmatpush1.bf16.msra.mxu0 %v3541
      %3566 = vmatprep.subr.bf16.mxu0 0
      %3567 = vmatpush1.bf16.msra.mxu0 0
      %3568 = vmatprep.subr.bf16.mxu0 0
      %3569 = vmatpush1.bf16.msra.mxu0 0
      %3570 = vmatprep.subr.bf16.mxu0 0
      %3571 = vmatpush1.bf16.msra.mxu0 0
      %3572 = vmatprep.subr.bf16.mxu0 0
      %3573 = vmatpush1.bf16.msra.mxu0 0
      %3574 = vmatprep.subr.bf16.mxu0 0
      %3575 = vmatpush1.bf16.msra.mxu0 0
      %3576 = vmatprep.subr.bf16.mxu0 0
      %3577 = vmatpush1.bf16.msra.mxu0 0
      %3578 = vmatprep.subr.bf16.mxu0 0
      %3579 = vmatpush1.bf16.msra.mxu0 0
      %3580 = vmatprep.subr.bf16.mxu0 0
      %3581 = vmatpush1.bf16.msra.mxu0 0
      %3582 = vmatprep.mubr.bf16.mxu0 0
      %3583 = vmatmul.mubr.bf16.gmra.mrb[0].mxu0 %v3437
      %v3584 = vpop.f32.mrb[0].mxu0
      %v3585 = vadd.f32 0.0, %v3584
      %v3586 = vpop.f32.mrb[0].mxu0
      %v3587 = vpop.f32.mrb[0].mxu0
      %v3588 = vadd.f32 0.0, %v3587
      %v3589 = vpop.f32.mrb[0].mxu0
      %3590 = vmatprep.mubr.bf16.mxu0 0
      %3591 = vmatmul.mubr.bf16.gmra.mrb[0].mxu0 %v3438
      %v3592 = vpop.f32.mrb[0].mxu0
      %v3593 = vadd.f32 0.0, %v3592
      %v3594 = vpop.f32.mrb[0].mxu0
      %v3595 = vpop.f32.mrb[0].mxu0
      %v3596 = vadd.f32 0.0, %v3595
      %v3597 = vpop.f32.mrb[0].mxu0
      %3598 = vmatprep.mubr.bf16.mxu0 0
      %3599 = vmatmul.mubr.bf16.gmra.mrb[0].mxu0 %v3439
      %v3600 = vpop.f32.mrb[0].mxu0
      %v3601 = vadd.f32 0.0, %v3600
      %v3602 = vpop.f32.mrb[0].mxu0
      %v3603 = vpop.f32.mrb[0].mxu0
      %v3604 = vadd.f32 0.0, %v3603
      %v3605 = vpop.f32.mrb[0].mxu0
      %3606 = vmatprep.mubr.bf16.mxu0 0
      %3607 = vmatmul.mubr.bf16.gmra.mrb[0].mxu0 %v3440
      %v3608 = vpop.f32.mrb[0].mxu0
      %v3609 = vadd.f32 0.0, %v3608
      %v3610 = vpop.f32.mrb[0].mxu0
      %v3611 = vpop.f32.mrb[0].mxu0
      %v3612 = vadd.f32 0.0, %v3611
      %v3613 = vpop.f32.mrb[0].mxu0
      %3614 = vmatprep.mubr.bf16.mxu0 0
      %3615 = vmatmul.mubr.bf16.gmra.mrb[0].mxu0 %v3441
      %v3616 = vpop.f32.mrb[0].mxu0
      %v3617 = vadd.f32 0.0, %v3616
      %v3618 = vpop.f32.mrb[0].mxu0
      %v3619 = vpop.f32.mrb[0].mxu0
      %v3620 = vadd.f32 0.0, %v3619
      %v3621 = vpop.f32.mrb[0].mxu0
      %3622 = vmatprep.mubr.bf16.mxu0 0
      %3623 = vmatmul.mubr.bf16.gmra.mrb[0].mxu0 %v3442
      %v3624 = vpop.f32.mrb[0].mxu0
      %v3625 = vadd.f32 0.0, %v3624
      %v3626 = vpop.f32.mrb[0].mxu0
      %v3627 = vpop.f32.mrb[0].mxu0
      %v3628 = vadd.f32 0.0, %v3627
      %v3629 = vpop.f32.mrb[0].mxu0
      %3630 = vmatprep.mubr.bf16.mxu0 0
      %3631 = vmatmul.mubr.bf16.gmra.mrb[0].mxu0 %v3443
      %v3632 = vpop.f32.mrb[0].mxu0
      %v3633 = vadd.f32 0.0, %v3632
      %v3634 = vpop.f32.mrb[0].mxu0
      %v3635 = vpop.f32.mrb[0].mxu0
      %v3636 = vadd.f32 0.0, %v3635
      %v3637 = vpop.f32.mrb[0].mxu0
      %3638 = vmatprep.mubr.bf16.mxu0 0
      %3639 = vmatmul.mubr.bf16.gmra.mrb[0].mxu0 %v3444
      %v3640 = vpop.f32.mrb[0].mxu0
      %v3641 = vadd.f32 0.0, %v3640
      %v3642 = vpop.f32.mrb[0].mxu0
      %v3643 = vpop.f32.mrb[0].mxu0
      %v3644 = vadd.f32 0.0, %v3643
      %v3645 = vpop.f32.mrb[0].mxu0
      %3646 = vmatprep.mubr.bf16.mxu0 0
      %3647 = vmatmul.mubr.bf16.gmra.mrb[0].mxu0 %v3445
      %v3648 = vpop.f32.mrb[0].mxu0
      %v3649 = vadd.f32 0.0, %v3648
      %v3650 = vpop.f32.mrb[0].mxu0
      %v3651 = vpop.f32.mrb[0].mxu0
      %v3652 = vadd.f32 0.0, %v3651
      %v3653 = vpop.f32.mrb[0].mxu0
      %3654 = vmatprep.mubr.bf16.mxu0 0
      %3655 = vmatmul.mubr.bf16.gmra.mrb[0].mxu0 %v3446
      %v3656 = vpop.f32.mrb[0].mxu0
      %v3657 = vadd.f32 0.0, %v3656
      %v3658 = vpop.f32.mrb[0].mxu0
      %v3659 = vpop.f32.mrb[0].mxu0
      %v3660 = vadd.f32 0.0, %v3659
      %v3661 = vpop.f32.mrb[0].mxu0
      %3662 = vmatprep.mubr.bf16.mxu0 0
      %3663 = vmatmul.mubr.bf16.gmra.mrb[0].mxu0 %v3447
      %v3664 = vpop.f32.mrb[0].mxu0
      %v3665 = vadd.f32 0.0, %v3664
      %v3666 = vpop.f32.mrb[0].mxu0
      %v3667 = vpop.f32.mrb[0].mxu0
      %v3668 = vadd.f32 0.0, %v3667
      %v3669 = vpop.f32.mrb[0].mxu0
      %3670 = vmatprep.mubr.bf16.mxu0 0
      %3671 = vmatmul.mubr.bf16.gmra.mrb[0].mxu0 %v3448
      %v3672 = vpop.f32.mrb[0].mxu0
      %v3673 = vadd.f32 0.0, %v3672
      %v3674 = vpop.f32.mrb[0].mxu0
      %v3675 = vpop.f32.mrb[0].mxu0
      %v3676 = vadd.f32 0.0, %v3675
      %v3677 = vpop.f32.mrb[0].mxu0
      %3678 = vmatprep.mubr.bf16.mxu0 0
      %3679 = vmatmul.mubr.bf16.gmra.mrb[0].mxu0 %v3449
      %v3680 = vpop.f32.mrb[0].mxu0
      %v3681 = vadd.f32 0.0, %v3680
      %v3682 = vpop.f32.mrb[0].mxu0
      %v3683 = vpop.f32.mrb[0].mxu0
      %v3684 = vadd.f32 0.0, %v3683
      %v3685 = vpop.f32.mrb[0].mxu0
      %3686 = vmatprep.mubr.bf16.mxu0 0
      %3687 = vmatmul.mubr.bf16.gmra.mrb[0].mxu0 %v3450
      %v3688 = vpop.f32.mrb[0].mxu0
      %v3689 = vadd.f32 0.0, %v3688
      %v3690 = vpop.f32.mrb[0].mxu0
      %v3691 = vpop.f32.mrb[0].mxu0
      %v3692 = vadd.f32 0.0, %v3691
      %v3693 = vpop.f32.mrb[0].mxu0
      %3694 = vmatprep.mubr.bf16.mxu0 0
      %3695 = vmatmul.mubr.bf16.gmra.mrb[0].mxu0 %v3451
      %v3696 = vpop.f32.mrb[0].mxu0
      %v3697 = vadd.f32 0.0, %v3696
      %v3698 = vpop.f32.mrb[0].mxu0
      %v3699 = vpop.f32.mrb[0].mxu0
      %v3700 = vadd.f32 0.0, %v3699
      %v3701 = vpop.f32.mrb[0].mxu0
      %3702 = vmatprep.mubr.bf16.mxu0 0
      %3703 = vmatmul.mubr.bf16.gmra.mrb[0].mxu0 %v3452
      %v3704 = vpop.f32.mrb[0].mxu0
      %v3705 = vadd.f32 0.0, %v3704
      %v3706 = vpop.f32.mrb[0].mxu0
      %v3707 = vpop.f32.mrb[0].mxu0
      %v3708 = vadd.f32 0.0, %v3707
      %v3709 = vpop.f32.mrb[0].mxu0
      %3710 = vdwg.mxu0
      %v3711 = vadd.f32 %v3453, %v3585
      %v3712 = vadd.f32 %v3454, %v3588
      %v3713 = vadd.f32 %v3455, %v3593
      %v3714 = vadd.f32 %v3456, %v3596
      %v3715 = vadd.f32 %v3457, %v3601
      %v3716 = vadd.f32 %v3458, %v3604
      %v3717 = vadd.f32 %v3459, %v3609
      %v3718 = vadd.f32 %v3460, %v3612
      %v3719 = vadd.f32 %v3461, %v3617
      %v3720 = vadd.f32 %v3462, %v3620
      %v3721 = vadd.f32 %v3463, %v3625
      %v3722 = vadd.f32 %v3464, %v3628
      %v3723 = vadd.f32 %v3465, %v3633
      %v3724 = vadd.f32 %v3466, %v3636
      %v3725 = vadd.f32 %v3467, %v3641
      %v3726 = vadd.f32 %v3468, %v3644
      %v3727 = vadd.f32 %v3469, %v3649
      %v3728 = vadd.f32 %v3470, %v3652
      %v3729 = vadd.f32 %v3471, %v3657
      %v3730 = vadd.f32 %v3472, %v3660
      %v3731 = vadd.f32 %v3473, %v3665
      %v3732 = vadd.f32 %v3474, %v3668
      %v3733 = vadd.f32 %v3475, %v3673
      %v3734 = vadd.f32 %v3476, %v3676
      %v3735 = vadd.f32 %v3477, %v3681
      %v3736 = vadd.f32 %v3478, %v3684
      %v3737 = vadd.f32 %v3479, %v3689
      %v3738 = vadd.f32 %v3480, %v3692
      %v3739 = vadd.f32 %v3481, %v3697
      %v3740 = vadd.f32 %v3482, %v3700
      %v3741 = vadd.f32 %v3483, %v3705
      %v3742 = vadd.f32 %v3484, %v3708
      %3743 = vst [vmem:[#allocation3] sm:$0xff] %v3711
      %3744 = vst [vmem:[#allocation3 + $0x8] sm:$0xff] %v3712
      %3745 = vst [vmem:[#allocation3 + $0x10] sm:$0xff] %v3713
      %3746 = vst [vmem:[#allocation3 + $0x18] sm:$0xff] %v3714
      %3747 = vst [vmem:[#allocation3 + $0x20] sm:$0xff] %v3715
      %3748 = vst [vmem:[#allocation3 + $0x28] sm:$0xff] %v3716
      %3749 = vst [vmem:[#allocation3 + $0x30] sm:$0xff] %v3717
      %3750 = vst [vmem:[#allocation3 + $0x38] sm:$0xff] %v3718
      %3751 = vst [vmem:[#allocation3 + $0x40] sm:$0xff] %v3719
      %3752 = vst [vmem:[#allocation3 + $0x48] sm:$0xff] %v3720
      %3753 = vst [vmem:[#allocation3 + $0x50] sm:$0xff] %v3721
      %3754 = vst [vmem:[#allocation3 + $0x58] sm:$0xff] %v3722
      %3755 = vst [vmem:[#allocation3 + $0x60] sm:$0xff] %v3723
      %3756 = vst [vmem:[#allocation3 + $0x68] sm:$0xff] %v3724
      %3757 = vst [vmem:[#allocation3 + $0x70] sm:$0xff] %v3725
      %3758 = vst [vmem:[#allocation3 + $0x78] sm:$0xff] %v3726
      %3759 = vst [vmem:[#allocation3 + $0x80] sm:$0xff] %v3727
      %3760 = vst [vmem:[#allocation3 + $0x88] sm:$0xff] %v3728
      %3761 = vst [vmem:[#allocation3 + $0x90] sm:$0xff] %v3729
      %3762 = vst [vmem:[#allocation3 + $0x98] sm:$0xff] %v3730
      %3763 = vst [vmem:[#allocation3 + $0xa0] sm:$0xff] %v3731
      %3764 = vst [vmem:[#allocation3 + $0xa8] sm:$0xff] %v3732
      %3765 = vst [vmem:[#allocation3 + $0xb0] sm:$0xff] %v3733
      %3766 = vst [vmem:[#allocation3 + $0xb8] sm:$0xff] %v3734
      %3767 = vst [vmem:[#allocation3 + $0xc0] sm:$0xff] %v3735
      %3768 = vst [vmem:[#allocation3 + $0xc8] sm:$0xff] %v3736
      %3769 = vst [vmem:[#allocation3 + $0xd0] sm:$0xff] %v3737
      %3770 = vst [vmem:[#allocation3 + $0xd8] sm:$0xff] %v3738
      %3771 = vst [vmem:[#allocation3 + $0xe0] sm:$0xff] %v3739
      %3772 = vst [vmem:[#allocation3 + $0xe8] sm:$0xff] %v3740
      %3773 = vst [vmem:[#allocation3 + $0xf0] sm:$0xff] %v3741
      %3774 = vst [vmem:[#allocation3 + $0xf8] sm:$0xff] %v3742
      %v3775 = vld [vmem:[#allocation3] sm:$0xff]
      %v3776 = vld [vmem:[#allocation3 + $0x8] sm:$0xff]
      %v3777 = vld [vmem:[#allocation3 + $0x10] sm:$0xff]
      %v3778 = vld [vmem:[#allocation3 + $0x18] sm:$0xff]
      %v3779 = vld [vmem:[#allocation3 + $0x20] sm:$0xff]
      %v3780 = vld [vmem:[#allocation3 + $0x28] sm:$0xff]
      %v3781 = vld [vmem:[#allocation3 + $0x30] sm:$0xff]
      %v3782 = vld [vmem:[#allocation3 + $0x38] sm:$0xff]
      %v3783 = vld [vmem:[#allocation3 + $0x40] sm:$0xff]
      %v3784 = vld [vmem:[#allocation3 + $0x48] sm:$0xff]
      %v3785 = vld [vmem:[#allocation3 + $0x50] sm:$0xff]
      %v3786 = vld [vmem:[#allocation3 + $0x58] sm:$0xff]
      %v3787 = vld [vmem:[#allocation3 + $0x60] sm:$0xff]
      %v3788 = vld [vmem:[#allocation3 + $0x68] sm:$0xff]
      %v3789 = vld [vmem:[#allocation3 + $0x70] sm:$0xff]
      %v3790 = vld [vmem:[#allocation3 + $0x78] sm:$0xff]
      %v3791 = vld [vmem:[#allocation3 + $0x80] sm:$0xff]
      %v3792 = vld [vmem:[#allocation3 + $0x88] sm:$0xff]
      %v3793 = vld [vmem:[#allocation3 + $0x90] sm:$0xff]
      %v3794 = vld [vmem:[#allocation3 + $0x98] sm:$0xff]
      %v3795 = vld [vmem:[#allocation3 + $0xa0] sm:$0xff]
      %v3796 = vld [vmem:[#allocation3 + $0xa8] sm:$0xff]
      %v3797 = vld [vmem:[#allocation3 + $0xb0] sm:$0xff]
      %v3798 = vld [vmem:[#allocation3 + $0xb8] sm:$0xff]
      %v3799 = vld [vmem:[#allocation3 + $0xc0] sm:$0xff]
      %v3800 = vld [vmem:[#allocation3 + $0xc8] sm:$0xff]
      %v3801 = vld [vmem:[#allocation3 + $0xd0] sm:$0xff]
      %v3802 = vld [vmem:[#allocation3 + $0xd8] sm:$0xff]
      %v3803 = vld [vmem:[#allocation3 + $0xe0] sm:$0xff]
      %v3804 = vld [vmem:[#allocation3 + $0xe8] sm:$0xff]
      %v3805 = vld [vmem:[#allocation3 + $0xf0] sm:$0xff]
      %v3806 = vld [vmem:[#allocation3 + $0xf8] sm:$0xff]
      %3807 = vst [vmem:[%s196] sm:$0xff] %v3775
      %3808 = vst [vmem:[%s196 + $0x8] sm:$0xff] %v3776
      %3809 = vst [vmem:[%s196 + $0x10] sm:$0xff] %v3777
      %3810 = vst [vmem:[%s196 + $0x18] sm:$0xff] %v3778
      %3811 = vst [vmem:[%s196 + $0x20] sm:$0xff] %v3779
      %3812 = vst [vmem:[%s196 + $0x28] sm:$0xff] %v3780
      %3813 = vst [vmem:[%s196 + $0x30] sm:$0xff] %v3781
      %3814 = vst [vmem:[%s196 + $0x38] sm:$0xff] %v3782
      %3815 = vst [vmem:[%s196 + $0x40] sm:$0xff] %v3783
      %3816 = vst [vmem:[%s196 + $0x48] sm:$0xff] %v3784
      %3817 = vst [vmem:[%s196 + $0x50] sm:$0xff] %v3785
      %3818 = vst [vmem:[%s196 + $0x58] sm:$0xff] %v3786
      %3819 = vst [vmem:[%s196 + $0x60] sm:$0xff] %v3787
      %3820 = vst [vmem:[%s196 + $0x68] sm:$0xff] %v3788
      %3821 = vst [vmem:[%s196 + $0x70] sm:$0xff] %v3789
      %3822 = vst [vmem:[%s196 + $0x78] sm:$0xff] %v3790
      %3823 = vst [vmem:[%s196 + $0x80] sm:$0xff] %v3791
      %3824 = vst [vmem:[%s196 + $0x88] sm:$0xff] %v3792
      %3825 = vst [vmem:[%s196 + $0x90] sm:$0xff] %v3793
      %3826 = vst [vmem:[%s196 + $0x98] sm:$0xff] %v3794
      %3827 = vst [vmem:[%s196 + $0xa0] sm:$0xff] %v3795
      %3828 = vst [vmem:[%s196 + $0xa8] sm:$0xff] %v3796
      %3829 = vst [vmem:[%s196 + $0xb0] sm:$0xff] %v3797
      %3830 = vst [vmem:[%s196 + $0xb8] sm:$0xff] %v3798
      %3831 = vst [vmem:[%s196 + $0xc0] sm:$0xff] %v3799
      %3832 = vst [vmem:[%s196 + $0xc8] sm:$0xff] %v3800
      %3833 = vst [vmem:[%s196 + $0xd0] sm:$0xff] %v3801
      %3834 = vst [vmem:[%s196 + $0xd8] sm:$0xff] %v3802
      %3835 = vst [vmem:[%s196 + $0xe0] sm:$0xff] %v3803
      %3836 = vst [vmem:[%s196 + $0xe8] sm:$0xff] %v3804
      %3837 = vst [vmem:[%s196 + $0xf0] sm:$0xff] %v3805
      %3838 = vst [vmem:[%s196 + $0xf8] sm:$0xff] %v3806
      %v3839 = vadd.f32 %v3775, %v3776
      %v3840 = vadd.f32 %v3839, %v3777
      %v3841 = vadd.f32 %v3840, %v3778
      %v3842 = vadd.f32 %v3841, %v3779
      %v3843 = vadd.f32 %v3842, %v3780
      %v3844 = vadd.f32 %v3843, %v3781
      %v3845 = vadd.f32 %v3844, %v3782
      %v3846 = vadd.f32 %v3845, %v3783
      %v3847 = vadd.f32 %v3846, %v3784
      %v3848 = vadd.f32 %v3847, %v3785
      %v3849 = vadd.f32 %v3848, %v3786
      %v3850 = vadd.f32 %v3849, %v3787
      %v3851 = vadd.f32 %v3850, %v3788
      %v3852 = vadd.f32 %v3851, %v3789
      %v3853 = vadd.f32 %v3852, %v3790
      %v3854 = vadd.f32 %v3853, %v3791
      %v3855 = vadd.f32 %v3854, %v3792
      %v3856 = vadd.f32 %v3855, %v3793
      %v3857 = vadd.f32 %v3856, %v3794
      %v3858 = vadd.f32 %v3857, %v3795
      %v3859 = vadd.f32 %v3858, %v3796
      %v3860 = vadd.f32 %v3859, %v3797
      %v3861 = vadd.f32 %v3860, %v3798
      %v3862 = vadd.f32 %v3861, %v3799
      %v3863 = vadd.f32 %v3862, %v3800
      %v3864 = vadd.f32 %v3863, %v3801
      %v3865 = vadd.f32 %v3864, %v3802
      %v3866 = vadd.f32 %v3865, %v3803
      %v3867 = vadd.f32 %v3866, %v3804
      %v3868 = vadd.f32 %v3867, %v3805
      %v3869 = vadd.f32 %v3868, %v3806
      %v3870 = vrot.slane %v3869, 4
      %v3871 = vadd.f32 %v3869, %v3870
      %v3872 = vrot.slane %v3871, 2
      %v3873 = vadd.f32 %v3871, %v3872
      %v3874 = vrot.slane %v3873, 1
      %v3875 = vadd.f32 %v3873, %v3874
      %3876 = vst [vmem:[%s203] sm:$0x1] %v3875
      %v3877 = vmul.f32 %v3775, %v3775
      %v3878 = vmul.f32 %v3776, %v3776
      %v3879 = vmul.f32 %v3777, %v3777
      %v3880 = vmul.f32 %v3778, %v3778
      %v3881 = vmul.f32 %v3779, %v3779
      %v3882 = vmul.f32 %v3780, %v3780
      %v3883 = vmul.f32 %v3781, %v3781
      %v3884 = vmul.f32 %v3782, %v3782
      %v3885 = vmul.f32 %v3783, %v3783
      %v3886 = vmul.f32 %v3784, %v3784
      %v3887 = vmul.f32 %v3785, %v3785
      %v3888 = vmul.f32 %v3786, %v3786
      %v3889 = vmul.f32 %v3787, %v3787
      %v3890 = vmul.f32 %v3788, %v3788
      %v3891 = vmul.f32 %v3789, %v3789
      %v3892 = vmul.f32 %v3790, %v3790
      %v3893 = vmul.f32 %v3791, %v3791
      %v3894 = vmul.f32 %v3792, %v3792
      %v3895 = vmul.f32 %v3793, %v3793
      %v3896 = vmul.f32 %v3794, %v3794
      %v3897 = vmul.f32 %v3795, %v3795
      %v3898 = vmul.f32 %v3796, %v3796
      %v3899 = vmul.f32 %v3797, %v3797
      %v3900 = vmul.f32 %v3798, %v3798
      %v3901 = vmul.f32 %v3799, %v3799
      %v3902 = vmul.f32 %v3800, %v3800
      %v3903 = vmul.f32 %v3801, %v3801
      %v3904 = vmul.f32 %v3802, %v3802
      %v3905 = vmul.f32 %v3803, %v3803
      %v3906 = vmul.f32 %v3804, %v3804
      %v3907 = vmul.f32 %v3805, %v3805
      %v3908 = vmul.f32 %v3806, %v3806
      %v3909 = vadd.f32 %v3877, %v3878
      %v3910 = vadd.f32 %v3909, %v3879
      %v3911 = vadd.f32 %v3910, %v3880
      %v3912 = vadd.f32 %v3911, %v3881
      %v3913 = vadd.f32 %v3912, %v3882
      %v3914 = vadd.f32 %v3913, %v3883
      %v3915 = vadd.f32 %v3914, %v3884
      %v3916 = vadd.f32 %v3915, %v3885
      %v3917 = vadd.f32 %v3916, %v3886
      %v3918 = vadd.f32 %v3917, %v3887
      %v3919 = vadd.f32 %v3918, %v3888
      %v3920 = vadd.f32 %v3919, %v3889
      %v3921 = vadd.f32 %v3920, %v3890
      %v3922 = vadd.f32 %v3921, %v3891
      %v3923 = vadd.f32 %v3922, %v3892
      %v3924 = vadd.f32 %v3923, %v3893
      %v3925 = vadd.f32 %v3924, %v3894
      %v3926 = vadd.f32 %v3925, %v3895
      %v3927 = vadd.f32 %v3926, %v3896
      %v3928 = vadd.f32 %v3927, %v3897
      %v3929 = vadd.f32 %v3928, %v3898
      %v3930 = vadd.f32 %v3929, %v3899
      %v3931 = vadd.f32 %v3930, %v3900
      %v3932 = vadd.f32 %v3931, %v3901
      %v3933 = vadd.f32 %v3932, %v3902
      %v3934 = vadd.f32 %v3933, %v3903
      %v3935 = vadd.f32 %v3934, %v3904
      %v3936 = vadd.f32 %v3935, %v3905
      %v3937 = vadd.f32 %v3936, %v3906
      %v3938 = vadd.f32 %v3937, %v3907
      %v3939 = vadd.f32 %v3938, %v3908
      %v3940 = vrot.slane %v3939, 4
      %v3941 = vadd.f32 %v3939, %v3940
      %v3942 = vrot.slane %v3941, 2
      %v3943 = vadd.f32 %v3941, %v3942
      %v3944 = vrot.slane %v3943, 1
      %v3945 = vadd.f32 %v3943, %v3944
      %3946 = vst [vmem:[%s209] sm:$0x1] %v3945
      %s3947 = smul.u32 16, %s21
      %p3948 = scmp.lt.s32.totalorder %s20, 1
      %s3949 = scalar_select %p3948, %s20, 1
      %p3950 = scmp.lt.s32.totalorder %s3947, 15
      %s3951 = scalar_select %p3950, %s3947, 15
      %s3952 = smul.addr %s3951, 2
      %s3953 = smul.addr %s3949, 32
      %s3954 = sadd.s32 %s3952, %s3953
      %s3955 = smul.addr %s3954, 8
      %s3956 = scalar_lea.vmem %s2, %s3955
      %p3957 = scmp.lt.s32.totalorder %s20, 1
      %s3958 = scalar_select %p3957, %s20, 1
      %p3959 = scmp.lt.s32.totalorder %s21, 0
      %s3960 = scalar_select %p3959, %s21, 0
      %s3961 = sadd.s32 %s3960, %s3958
      %s3962 = scalar_lea.vmem %s3, %s3961
      %p3963 = scmp.lt.s32.totalorder %s20, 1
      %s3964 = scalar_select %p3963, %s20, 1
      %p3965 = scmp.lt.s32.totalorder %s21, 0
      %s3966 = scalar_select %p3965, %s21, 0
      %s3967 = sadd.s32 %s3966, %s3964
      %s3968 = scalar_lea.vmem %s4, %s3967
      // Predicated region
      $region62: #{conv_block_forward.4} parent=23 // pred_check
        %p3969 = pneg %p69
      $region63: #{conv_block_forward.4} parent=23 // pred_check_branch
        %3971 = sbr.rel (%p3969) target = $region65
      $region64: #{conv_block_forward.4} parent=23 // pred_region
        %s3972 = smul.u32 16, %s21
      $region65: #{conv_block_forward.4} parent=23 // pred_fallthru
        _
      // Predicated region
      $region66: #{conv_block_forward.4} parent=23 // pred_check
        %p3973 = pneg %p97
      $region67: #{conv_block_forward.4} parent=23 // pred_check_branch
        %3975 = sbr.rel (%p3973) target = $region69
      $region68: #{conv_block_forward.4} parent=23 // pred_region
        _
      $region69: #{conv_block_forward.4} parent=23 // pred_fallthru
        _
      // Predicated region
      $region70: #{conv_block_forward.4} parent=23 // pred_check
        %p3976 = pneg %p125
      $region71: #{conv_block_forward.4} parent=23 // pred_check_branch
        %3978 = sbr.rel (%p3976) target = $region73
      $region72: #{conv_block_forward.4} parent=23 // pred_region
        _
      $region73: #{conv_block_forward.4} parent=23 // pred_fallthru
        _
    $region24: #{conv_block_forward.4} parent=5 // pred_fallthru
      _
    %p3979 = scmp.le.s32.totalorder 2, %s11
    // Predicated region
    $region74: #{conv_block_forward.4} parent=5 // pred_check
      %p3980 = pneg %p3979
    $region75: #{conv_block_forward.4} parent=5 // pred_check_branch
      %3982 = sbr.rel (%p3980) target = $region77
    $region76: #{conv_block_forward.4} parent=5 // pred_region
      %s3983 = ssub.s32 %s11, 2
      // Predicated region
      $region78: #{conv_block_forward.4} parent=76 // pred_check
        %p3984 = pneg %p75
      $region79: #{conv_block_forward.4} parent=76 // pred_check_branch
        %3986 = sbr.rel (%p3984) target = $region81
      $region80: #{conv_block_forward.4} parent=76 // pred_region
        %s3987 = smul.u32 16, %s23
        %p3988 = scmp.lt.s32.totalorder %s22, 1
        %s3989 = scalar_select %p3988, %s22, 1
        %p3990 = scmp.lt.s32.totalorder %s3987, 15
        %s3991 = scalar_select %p3990, %s3987, 15
        %s3992 = smul.addr %s3991, 2
        %s3993 = smul.addr %s3989, 32
        %s3994 = sadd.s32 %s3992, %s3993
        %s3995 = smul.addr %s3994, 8
        %s3996 = scalar_lea.vmem %s2, %s3995
      $region81: #{conv_block_forward.4} parent=76 // pred_fallthru
        _
      // Predicated region
      $region82: #{conv_block_forward.4} parent=76 // pred_check
        %p3997 = pneg %p103
      $region83: #{conv_block_forward.4} parent=76 // pred_check_branch
        %3999 = sbr.rel (%p3997) target = $region85
      $region84: #{conv_block_forward.4} parent=76 // pred_region
        %p4000 = scmp.lt.s32.totalorder %s22, 1
        %s4001 = scalar_select %p4000, %s22, 1
        %p4002 = scmp.lt.s32.totalorder %s23, 0
        %s4003 = scalar_select %p4002, %s23, 0
        %s4004 = sadd.s32 %s4003, %s4001
        %s4005 = scalar_lea.vmem %s3, %s4004
      $region85: #{conv_block_forward.4} parent=76 // pred_fallthru
        _
      // Predicated region
      $region86: #{conv_block_forward.4} parent=76 // pred_check
        %p4006 = pneg %p131
      $region87: #{conv_block_forward.4} parent=76 // pred_check_branch
        %4008 = sbr.rel (%p4006) target = $region89
      $region88: #{conv_block_forward.4} parent=76 // pred_region
        %p4009 = scmp.lt.s32.totalorder %s22, 1
        %s4010 = scalar_select %p4009, %s22, 1
        %p4011 = scmp.lt.s32.totalorder %s23, 0
        %s4012 = scalar_select %p4011, %s23, 0
        %s4013 = sadd.s32 %s4012, %s4010
        %s4014 = scalar_lea.vmem %s4, %s4013
      $region89: #{conv_block_forward.4} parent=76 // pred_fallthru
        _
    $region77: #{conv_block_forward.4} parent=5 // pred_fallthru
      _
  $region6: #{conv_block_forward.4} parent=0 // loop_footer
    %s15 = sadd.s32 1, %s11
  $region7: #{conv_block_forward.4} parent=0 // loop_footer_branch
    %10 = sbr.rel target = $region3
  $region8: #{conv_block_forward.4} parent=0 // loop_exit
    _
  %4015 = vsyncmov [#allocation4]
  %s4016 = vpop.sfrf %4015
  %p4017 = scmp.eq.s32.totalorder %s4016, 0
  %p4018 = pneg %p4017
  %4020 = shalt.err (%p4018)

</llo_original>
